<compile_context>
chip_gen: v6e
topology: v6e:2x2x1
jax: 0.10.0
libtpu: 0.0.40
codegen_flags: <defaults>
</compile_context>

<pallas_src>
import functools

import jax
import jax.numpy as jnp
from jax.experimental import pallas as pl
from jax.experimental.pallas import tpu as pltpu


# --------------------------- small helpers ----------------------------------

def _round_up(x, m):
    return ((x + m - 1) // m) * m


def _cdiv(a, b):
    return -(-a // b)


def _vmem_capacity_bytes():
    # Per-TensorCore physical VMEM: 128 MiB on v5e/v6e, 64 MiB on v7x.
    try:
        return int(pltpu.get_tpu_info().vmem_capacity_bytes)
    except Exception:
        return 64 * 1024 * 1024  # conservative default (v7x per-TC budget)


def _pad2d(a, row_pad, col_pad):
    # jnp.pad materializes a full HBM copy -> skip it entirely when possible.
    if row_pad == 0 and col_pad == 0:
        return a
    return jnp.pad(a, ((0, row_pad), (0, col_pad)))


def _largest_divisor_tile(extent, candidates=(512, 384, 256, 128)):
    # `extent` is always a multiple of 128, so 128 always divides.
    for c in candidates:
        if extent % c == 0:
            return c
    return extent


# ------------------------------ kernels --------------------------------------

def _linear_resident_kernel(x_ref, w_ref, b_ref, o_ref):
    # Whole (K_pad, N_pad) weight and (1, N_pad) bias are VMEM-resident: their
    # block index is constant along the single M grid axis, so Pallas does not
    # re-issue their DMAs after the first grid step.  One MXU dot per M tile,
    # f32 accumulation, bias add + downcast fused into the store.
    acc = jnp.dot(x_ref[...], w_ref[...], preferred_element_type=jnp.float32)
    o_ref[...] = (acc + b_ref[...].astype(jnp.float32)).astype(o_ref.dtype)


def _linear_tiled_kernel(x_ref, w_ref, b_ref, o_ref, acc_ref):
    # Fallback for weights too large to keep resident.  grid = (M, N, K) with
    # the K reduction last.  Note: the weight tile IS re-streamed once per
    # M tile (its block index changes whenever i advances) -- which is exactly
    # why the resident path above is preferred whenever the weight fits.
    k = pl.program_id(2)

    @pl.when(k == 0)
    def _():
        # Initialize the accumulator with the (broadcast) bias instead of
        # zeros + epilogue add: one fewer VPU pass over the output tile.
        acc_ref[...] = jnp.broadcast_to(
            b_ref[...].astype(jnp.float32), acc_ref.shape)

    acc_ref[...] += jnp.dot(
        x_ref[...], w_ref[...], preferred_element_type=jnp.float32)

    @pl.when(k == pl.num_programs(2) - 1)
    def _():
        o_ref[...] = acc_ref[...].astype(o_ref.dtype)


# ------------------------------ wrapper ---------------------------------------

def _apply_linear_pallas(x2d, weight, bias, *, stream_dtype=None,
                         force_tiled=False):
    """x2d: (M, H_in); weight: (H_in, H_out) (PyTorch weight.T); bias: (H_out,)."""
    M, H_in = x2d.shape
    H_out = weight.shape[1]
    out_dtype = x2d.dtype

    # Optional bf16 streaming of the two big operands (halves HBM traffic and
    # hits the MXU's native bf16 path).  Accumulation stays f32 and the output
    # dtype is unchanged.  Default (None) keeps exact f32 module semantics.
    if stream_dtype is not None:
        x2d = x2d.astype(stream_dtype)
        weight = weight.astype(stream_dtype)

    # Tiny problems: pallas_call fixed overhead + 128-lane padding dominate;
    # XLA's fused matmul is strictly faster there.
    if (not force_tiled) and (M * H_in * H_out) < (1 << 22):
        y = jnp.dot(x2d, weight, preferred_element_type=jnp.float32)
        return (y + bias.astype(jnp.float32)).astype(out_dtype)

    x_item = jnp.dtype(x2d.dtype).itemsize
    w_item = jnp.dtype(weight.dtype).itemsize
    out_item = jnp.dtype(out_dtype).itemsize
    sublane = 16 if x_item == 2 else 8

    # Pad only to hardware granularity (128 lanes / sublane rows) -- never up
    # to tile multiples.  K/N tiles below are exact divisors of the padded
    # extents; only the non-reduction M axis may end in a partial tile.
    K_pad = _round_up(H_in, 128)
    N_pad = _round_up(H_out, 128)
    M_pad = _round_up(M, sublane)

    # VMEM budget (conservative: Pallas double-buffers every BlockSpec even
    # when its block index never changes).  Stays inside v7x's 64 MiB/TC.
    vmem_cap = _vmem_capacity_bytes()
    vmem_limit = min((vmem_cap * 3) // 4, 96 * 1024 * 1024)
    budget = vmem_limit - 8 * 1024 * 1024

    # ---- M tile: keep >= 2 tiles when possible so both v7x TCs get work.
    if 2 * sublane <= M_pad <= 512:
        tm = _round_up(_cdiv(M_pad, 2), sublane)
    else:
        tm = min(512, M_pad)

    def _resident_vmem(tm_):
        return 2 * (tm_ * K_pad * x_item        # x tile (double-buffered)
                    + K_pad * N_pad * w_item    # resident weight
                    + N_pad * w_item            # resident bias row
                    + tm_ * N_pad * out_item)   # out tile

    use_resident = not force_tiled
    if use_resident:
        # Shrink the M tile before giving up on the resident-weight path.
        while _resident_vmem(tm) > budget and tm > sublane:
            tm = max(sublane, _round_up(tm // 2, sublane))
        use_resident = _resident_vmem(tm) <= budget

    x_p = _pad2d(x2d, M_pad - M, K_pad - H_in)
    w_p = _pad2d(weight, K_pad - H_in, N_pad - H_out)
    b_p = (jnp.pad(bias, (0, N_pad - H_out)) if N_pad != H_out else bias)
    b_p = b_p.reshape(1, N_pad)

    grid_m = _cdiv(M_pad, tm)

    cost = pl.CostEstimate(
        flops=2 * M_pad * K_pad * N_pad,
        transcendentals=0,
        bytes_accessed=(M_pad * K_pad * x_item + K_pad * N_pad * w_item
                        + N_pad * w_item + M_pad * N_pad * out_item),
    )

    if use_resident:
        grid_spec = pltpu.PrefetchScalarGridSpec(
            num_scalar_prefetch=0,
            grid=(grid_m,),
            in_specs=[
                # x tile: varies with i -> streamed once.
                pl.BlockSpec((tm, K_pad), lambda i: (i, 0)),
                # weight / bias: constant block index -> fetched once, resident.
                pl.BlockSpec((K_pad, N_pad), lambda i: (0, 0)),
                pl.BlockSpec((1, N_pad), lambda i: (0, 0)),
            ],
            out_specs=pl.BlockSpec((tm, N_pad), lambda i: (i, 0)),
        )
        kernel = _linear_resident_kernel
        dim_sem = ("parallel",)
    else:
        tk = _largest_divisor_tile(K_pad)   # exact divisor -> exact reduction
        tn = _largest_divisor_tile(N_pad)
        grid_spec = pltpu.PrefetchScalarGridSpec(
            num_scalar_prefetch=0,
            grid=(grid_m, N_pad // tn, K_pad // tk),
            in_specs=[
                pl.BlockSpec((tm, tk), lambda i, j, k: (i, k)),
                pl.BlockSpec((tk, tn), lambda i, j, k: (k, j)),
                pl.BlockSpec((1, tn), lambda i, j, k: (0, j)),
            ],
            out_specs=pl.BlockSpec((tm, tn), lambda i, j, k: (i, j)),
            scratch_shapes=[pltpu.VMEM((tm, tn), jnp.float32)],
        )
        kernel = _linear_tiled_kernel
        dim_sem = ("parallel", "parallel", "arbitrary")

    out_p = pl.pallas_call(
        kernel,
        out_shape=jax.ShapeDtypeStruct((M_pad, N_pad), out_dtype),
        grid_spec=grid_spec,
        compiler_params=pltpu.CompilerParams(
            dimension_semantics=dim_sem,
            vmem_limit_bytes=vmem_limit,
        ),
        cost_estimate=cost,
    )(x_p, w_p, b_p)

    if M_pad == M and N_pad == H_out:
        return out_p
    return out_p[:M, :H_out]


def sequence_wise_forward(x, weight, bias, *, stream_dtype=None,
                          force_tiled=False):
    """Mirrors SequenceWise.forward with an inner nn.Linear module.

    x: (T, N, H_in) or (M, H_in)
    weight: (H_in, H_out)   (transpose of PyTorch nn.Linear.weight)
    bias:   (H_out,)
    """
    apply_fn = functools.partial(_apply_linear_pallas, weight=weight,
                                 bias=bias, stream_dtype=stream_dtype,
                                 force_tiled=force_tiled)
    if x.ndim > 2:
        t, n = x.shape[0], x.shape[1]
        y2d = apply_fn(x.reshape(t * n, -1))    # x.view(t*n, -1)
        return y2d.reshape(t, n, -1)            # x.view(t, n, -1)
    return apply_fn(x)


if __name__ == "__main__":
    # ---- small shapes consistent with the module: seq T=8, batch N=2, hidden=32.
    T, N, H_IN, H_OUT = 8, 2, 32, 32
    key = jax.random.PRNGKey(0)
    kx, kw, kb = jax.random.split(key, 3)

    x = jax.random.normal(kx, (T, N, H_IN), dtype=jnp.float32)
    bound = 1.0 / (H_IN ** 0.5)  # PyTorch-Linear-style init
    weight = jax.random.uniform(kw, (H_IN, H_OUT), jnp.float32, -bound, bound)
    bias = jax.random.uniform(kb, (H_OUT,), jnp.float32, -bound, bound)

    y = sequence_wise_forward(x, weight, bias)   # tiny -> XLA fallback path
    jax.block_until_ready(y)
    ref = (x.reshape(T * N, H_IN) @ weight + bias).reshape(T, N, H_OUT)
    assert y.shape == (T, N, H_OUT)
    assert jnp.allclose(y, ref, atol=1e-5, rtol=1e-5)

    # ---- larger shape that exercises the Pallas paths (M=1280, K=640, N=384).
    T2, N2, H2_IN, H2_OUT = 80, 16, 640, 384
    kx2, kw2, kb2 = jax.random.split(jax.random.PRNGKey(1), 3)
    x2 = jax.random.normal(kx2, (T2, N2, H2_IN), dtype=jnp.float32)
    w2 = jax.random.normal(kw2, (H2_IN, H2_OUT), dtype=jnp.float32) * 0.02
    b2 = jax.random.normal(kb2, (H2_OUT,), dtype=jnp.float32) * 0.02
    ref2 = (x2.reshape(T2 * N2, H2_IN) @ w2 + b2).reshape(T2, N2, H2_OUT)

    # Resident-weight path (default).
    y2 = sequence_wise_forward(x2, w2, b2)
    jax.block_until_ready(y2)
    assert y2.shape == (T2, N2, H2_OUT)
    assert jnp.allclose(y2, ref2, atol=2e-3, rtol=2e-3)

    # Tiled K/N fallback path (forced, to exercise the accumulator kernel).
    y2t = sequence_wise_forward(x2, w2, b2, force_tiled=True)
    jax.block_until_ready(y2t)
    assert jnp.allclose(y2t, ref2, atol=2e-3, rtol=2e-3)

    # bf16 operand streaming (f32 accumulation, f32 output).
    y2b = sequence_wise_forward(x2, w2, b2, stream_dtype=jnp.bfloat16)
    jax.block_until_ready(y2b)
    assert jnp.allclose(y2b, ref2, atol=5e-2, rtol=5e-2)

    print("KERNEL_OK")
</pallas_src>

<mosaic_0001>
module attributes {stable_mosaic.version = 11 : i64} {
  func.func @_linear_resident_kernel(%arg0: i32, %arg1: memref<512x640xf32, #tpu.memory_space<vmem>>, %arg2: memref<640x384xf32, #tpu.memory_space<vmem>>, %arg3: memref<1x384xf32, #tpu.memory_space<vmem>>, %arg4: memref<512x384xf32, #tpu.memory_space<vmem>>) attributes {dimension_semantics = [#tpu.dimension_semantics<parallel>], iteration_bounds = array<i64: 3>, scalar_prefetch = 0 : i64, scratch_operands = 0 : i64, tpu.core_type = #tpu.core_type<tc>, window_params = [{transform_indices = @transform_0, window_bounds = array<i64: 512, 640>}, {pipeline_mode = #tpu.pipeline_mode<synchronous>, transform_indices = @transform_1, window_bounds = array<i64: 640, 384>}, {pipeline_mode = #tpu.pipeline_mode<synchronous>, transform_indices = @transform_2, window_bounds = array<i64: 1, 384>}, {transform_indices = @transform_3, window_bounds = array<i64: 512, 384>}]} {
    %c0 = arith.constant 0 : index
    %c0_0 = arith.constant 0 : index
    %0 = vector.load %arg1[%c0, %c0_0] : memref<512x640xf32, #tpu.memory_space<vmem>>, vector<512x640xf32>
    %c0_1 = arith.constant 0 : index
    %c0_2 = arith.constant 0 : index
    %1 = vector.load %arg2[%c0_1, %c0_2] : memref<640x384xf32, #tpu.memory_space<vmem>>, vector<640x384xf32>
    %cst = arith.constant dense<0.000000e+00> : vector<512x384xf32>
    %2 = tpu.matmul %0, %1, %cst {dimension_numbers = #tpu.dot_dimension_numbers<[1], [0], [0], [1], [0, 0, 1, 1], [], []>} : vector<512x640xf32>, vector<640x384xf32>, vector<512x384xf32> -> vector<512x384xf32>
    %c0_3 = arith.constant 0 : index
    %c0_4 = arith.constant 0 : index
    %3 = vector.load %arg3[%c0_3, %c0_4] : memref<1x384xf32, #tpu.memory_space<vmem>>, vector<1x384xf32>
    %4 = vector.broadcast %3 : vector<1x384xf32> to vector<512x384xf32>
    %5 = arith.addf %2, %4 : vector<512x384xf32>
    %c0_5 = arith.constant 0 : index
    %c0_6 = arith.constant 0 : index
    %6 = vector.load %arg4[%c0_5, %c0_6] : memref<512x384xf32, #tpu.memory_space<vmem>>, vector<512x384xf32>
    tpu.vector_store %arg4[%c0_5, %c0_6], %5 {strides = array<i32>} : memref<512x384xf32, #tpu.memory_space<vmem>>, vector<512x384xf32>,
    return
  }
  func.func @transform_0(%arg0: i32) -> (i32, i32) {
    %c0_i32 = arith.constant 0 : i32
    %c0_i32_0 = arith.constant 0 : i32
    return %arg0, %c0_i32 : i32, i32
  }
  func.func @transform_1(%arg0: i32) -> (i32, i32) {
    %c0_i32 = arith.constant 0 : i32
    %c0_i32_0 = arith.constant 0 : i32
    %c0_i32_1 = arith.constant 0 : i32
    return %c0_i32, %c0_i32_0 : i32, i32
  }
  func.func @transform_2(%arg0: i32) -> (i32, i32) {
    %c0_i32 = arith.constant 0 : i32
    %c0_i32_0 = arith.constant 0 : i32
    %c0_i32_1 = arith.constant 0 : i32
    return %c0_i32, %c0_i32_0 : i32, i32
  }
  func.func @transform_3(%arg0: i32) -> (i32, i32) {
    %c0_i32 = arith.constant 0 : i32
    %c0_i32_0 = arith.constant 0 : i32
    return %arg0, %c0_i32 : i32, i32
  }
}

</mosaic_0001>

<llo_original>
// kernel: tpu_custom_call.1
$region0: #{tpu_custom_call.1}
  #allocation0 [shape = 'u32[]', space=smem, size = 0x4, offset = 0x4, fixed_abs, tag = 'smem constant byte address 0x4 - core index']
  #allocation1 [shape = 'u32[144,128]{1,0:T(1,128)}', space=vmem, size = 0x12000, scoped, tag = 'internal scratch']
  %s0 = inlined_call_operand.hbm [shape: f32[1280,640], index: 0, kind: input, shape index: {}]
  %s1 = inlined_call_operand.hbm [shape: f32[640,384], index: 1, kind: input, shape index: {}]
  %s2 = inlined_call_operand.hbm [shape: f32[1,384], index: 2, kind: input, shape index: {}]
  %s3 = inlined_call_operand.hbm [shape: f32[1280,384], index: 3, kind: output, shape index: {}]
  %s4 = sld [smem:[#allocation0]]
  $region57: #{tpu_custom_call.1} parent=0
    _
  %s6 = ssub.s32 1, %s4
  %s7 = scalar_select 0, %s6, %s4
  $region1: #{tpu_custom_call.1} parent=0
    #allocation2 [shape = 'u8[2621440]{0}', space=vmem, size = 0x280000, scoped, tag = 'input window, operand 0']
    #allocation3 [shape = 's32[2]{0}', space=sflag, size = 0x8, scoped, tag = 'scoped memory for tpu_custom_call.1']
    #allocation4 [shape = 's32[2]{0}', space=sflag, size = 0x8, scoped, tag = 'scoped memory for tpu_custom_call.1']
    #allocation5 [shape = 'u8[983040]{0}', space=vmem, size = 0xf0000, scoped, tag = 'input window, operand 1, single buffered']
    #allocation6 [shape = 's32[1]{0}', space=sflag, size = 0x4, scoped, tag = 'scoped memory for tpu_custom_call.1']
    #allocation7 [shape = 'u8[1536]{0}', space=vmem, size = 0x800, scoped, tag = 'input window, operand 2, single buffered']
    #allocation8 [shape = 'u8[1572864]{0}', space=vmem, size = 0x180000, scoped, tag = 'output window, operand 0']
    %8 = vsyncpa [#allocation3], 0
    %s9 = scalar_lea.sflag [#allocation3], 1
    %10 = vsyncpa %s9, 0
    %11 = vsyncpa [#allocation6], 0
    %12 = vsyncpa [#allocation4], 0
    %s13 = scalar_lea.sflag [#allocation4], 1
    %14 = vsyncpa %s13, 0
    loop: start=0, step=1, limit=5
    $region2: #{tpu_custom_call.1} parent=1 // loop_pre_header
      _
    $region3: #{tpu_custom_call.1} parent=1 // loop_header
      %s16 = sphi 0, %s20
      %p17 = scmp.ge.s32.totalorder %s16, 5
      %s26 = sphi 0, %s28
      %s29 = sphi 0, %s26
      %s30 = sphi 0, %s29
      %s46 = sphi 0, %s30
      %s50 = sphi 0, %s50
      %s52 = sphi 0, %s50
      %s53 = sphi 0, %s52
      %s67 = sphi 0, %s53
      %s71 = sphi 0, %s71
      %s73 = sphi 0, %s71
      %s74 = sphi 0, %s73
      %s88 = sphi 0, %s74
      %s94 = sphi 0, %s96
      %s97 = sphi 0, %s94
      %s98 = sphi 0, %s97
      %s114 = sphi 0, %s98
    $region4: #{tpu_custom_call.1} parent=1 // loop_header_branch
      %19 = sbr.rel (%p17) target = $region8
    $region5: #{tpu_custom_call.1} parent=1 // loop_body
      %s21 = ssub.s32 %s16, 1
      %s22 = ssub.s32 %s16, 2
      %s23 = sadd.s32 %s16, 1
      %s24 = ssub.s32 %s16, %s23
      %p25 = scmp.eq.s32.totalorder %s24, 0
      %s27 = sadd.s32 %s26, 1
      %s28 = scalar_select %p25, %s26, %s27
      %p31 = pneg %p25
      %p32 = scmp.eq.s32.totalorder %s16, 2
      %p33 = por %p31, %p32
      %p34 = scmp.ne.s32.totalorder %s26, %s29
      %p35 = scmp.eq.s32.totalorder %s16, 0
      %p36 = por %p34, %p35
      %p37 = scmp.ne.s32.totalorder %s26, %s29
      %p38 = scmp.eq.s32.totalorder %s21, 2
      %p39 = por %p37, %p38
      %p40 = scmp.ne.s32.totalorder %s29, %s30
      %p41 = scmp.eq.s32.totalorder %s21, 0
      %p42 = por %p40, %p41
      %p43 = scmp.ne.s32.totalorder %s29, %s30
      %p44 = scmp.eq.s32.totalorder %s22, 2
      %p45 = por %p43, %p44
      %p47 = scmp.ne.s32.totalorder %s30, %s46
      %p48 = scmp.eq.s32.totalorder %s22, 0
      %p49 = por %p47, %p48
      %s51 = sadd.s32 %s50, 1
      %p54 = scmp.eq.s32.totalorder %s16, 2
      %p55 = scmp.ne.s32.totalorder %s50, %s52
      %p56 = scmp.eq.s32.totalorder %s16, 0
      %p57 = por %p55, %p56
      %p58 = scmp.ne.s32.totalorder %s50, %s52
      %p59 = scmp.eq.s32.totalorder %s21, 2
      %p60 = por %p58, %p59
      %p61 = scmp.ne.s32.totalorder %s52, %s53
      %p62 = scmp.eq.s32.totalorder %s21, 0
      %p63 = por %p61, %p62
      %p64 = scmp.ne.s32.totalorder %s52, %s53
      %p65 = scmp.eq.s32.totalorder %s22, 2
      %p66 = por %p64, %p65
      %p68 = scmp.ne.s32.totalorder %s53, %s67
      %p69 = scmp.eq.s32.totalorder %s22, 0
      %p70 = por %p68, %p69
      %s72 = sadd.s32 %s71, 1
      %p75 = scmp.eq.s32.totalorder %s16, 2
      %p76 = scmp.ne.s32.totalorder %s71, %s73
      %p77 = scmp.eq.s32.totalorder %s16, 0
      %p78 = por %p76, %p77
      %p79 = scmp.ne.s32.totalorder %s71, %s73
      %p80 = scmp.eq.s32.totalorder %s21, 2
      %p81 = por %p79, %p80
      %p82 = scmp.ne.s32.totalorder %s73, %s74
      %p83 = scmp.eq.s32.totalorder %s21, 0
      %p84 = por %p82, %p83
      %p85 = scmp.ne.s32.totalorder %s73, %s74
      %p86 = scmp.eq.s32.totalorder %s22, 2
      %p87 = por %p85, %p86
      %p89 = scmp.ne.s32.totalorder %s74, %s88
      %p90 = scmp.eq.s32.totalorder %s22, 0
      %p91 = por %p89, %p90
      %s92 = ssub.s32 %s16, %s23
      %p93 = scmp.eq.s32.totalorder %s92, 0
      %s95 = sadd.s32 %s94, 1
      %s96 = scalar_select %p93, %s94, %s95
      %p99 = pneg %p93
      %p100 = scmp.eq.s32.totalorder %s16, 2
      %p101 = por %p99, %p100
      %p102 = scmp.ne.s32.totalorder %s94, %s97
      %p103 = scmp.eq.s32.totalorder %s16, 0
      %p104 = por %p102, %p103
      %p105 = scmp.ne.s32.totalorder %s94, %s97
      %p106 = scmp.eq.s32.totalorder %s21, 2
      %p107 = por %p105, %p106
      %p108 = scmp.ne.s32.totalorder %s97, %s98
      %p109 = scmp.eq.s32.totalorder %s21, 0
      %p110 = por %p108, %p109
      %p111 = scmp.ne.s32.totalorder %s97, %s98
      %p112 = scmp.eq.s32.totalorder %s22, 2
      %p113 = por %p111, %p112
      %p115 = scmp.ne.s32.totalorder %s98, %s114
      %p116 = scmp.eq.s32.totalorder %s22, 0
      %p117 = por %p115, %p116
      %p118 = scmp.le.s32.totalorder 1, %s16
      %p119 = scmp.lt.s32.totalorder %s16, 4
      %p120 = pnand %p118, %p119
      %p121 = pneg %p120
      // Predicated region
      $region9: #{tpu_custom_call.1} parent=5 // pred_check
        _
      $region10: #{tpu_custom_call.1} parent=5 // pred_check_branch
        %123 = sbr.rel (%p120) target = $region12
      $region11: #{tpu_custom_call.1} parent=5 // pred_region
        %s124 = ssub.s32 %s16, 1
        // Predicated region
        $region13: #{tpu_custom_call.1} parent=11 // pred_check
          %p125 = pneg %p63
        $region14: #{tpu_custom_call.1} parent=11 // pred_check_branch
          %127 = sbr.rel (%p125) target = $region16
        $region15: #{tpu_custom_call.1} parent=11 // pred_region
          %s129 = ssub.s32 30720, 30720
          %130 = vsyncadd [#allocation6], %s129
          %s131 = sshll.u32 [#allocation5], 4
          %s132 = int_to_ptr.vmem [resolvable:$true] %s131
          %137 = dma.hbm_to_vmem [thread:$0]  %s1, 30720, %s132, [#allocation6], 384, 384, 24
        $region16: #{tpu_custom_call.1} parent=11 // pred_fallthru
          _
        // Predicated region
        $region17: #{tpu_custom_call.1} parent=11 // pred_check
          %p138 = pneg %p84
        $region18: #{tpu_custom_call.1} parent=11 // pred_check_branch
          %140 = sbr.rel (%p138) target = $region20
        $region19: #{tpu_custom_call.1} parent=11 // pred_region
          %s142 = ssub.s32 48, 48
          %143 = vsyncadd [#allocation6], %s142
          %s145 = sshll.u32 [#allocation7], 4
          %s146 = int_to_ptr.vmem [resolvable:$true] %s145
          %148 = dma.hbm_to_vmem [thread:$0]  %s2, 48, %s146, [#allocation6]
        $region20: #{tpu_custom_call.1} parent=11 // pred_fallthru
          _
      $region12: #{tpu_custom_call.1} parent=5 // pred_fallthru
        _
      %p149 = scmp.lt.s32.totalorder %s16, 3
      // Predicated region
      $region21: #{tpu_custom_call.1} parent=5 // pred_check
        %p150 = pneg %p149
      $region22: #{tpu_custom_call.1} parent=5 // pred_check_branch
        %152 = sbr.rel (%p150) target = $region24
      $region23: #{tpu_custom_call.1} parent=5 // pred_region
        // Predicated region
        $region25: #{tpu_custom_call.1} parent=23 // pred_check
          %p153 = pneg %p36
        $region26: #{tpu_custom_call.1} parent=23 // pred_check_branch
          %155 = sbr.rel (%p153) target = $region28
        $region27: #{tpu_custom_call.1} parent=23 // pred_region
          %s156 = sand.u32 %s26, 1
          %s157 = scalar_lea.sflag [#allocation3], %s156
          %s158 = sand.u32 %s26, 1
          %s159 = smul.addr %s158, 2560
          %s160 = scalar_lea.vmem [#allocation2], %s159
          %s161 = smul.u32 64, %s16
          %s162 = ssub.s32 160, %s161
          %p163 = scmp.lt.s32.totalorder %s162, 64
          %s164 = scalar_select %p163, %s162, 64
          %s165 = smul.u32 128, %s164
          %s166 = smul.u32 %s165, 5
          %s168 = ssub.s32 40960, %s166
          %169 = vsyncadd %s157, %s168
          %p170 = scmp.ne.s32.totalorder 0, %s166
          %s171 = smul.addr %s161, 5
          %s172 = smul.addr %s171, 128
          %s173 = scalar_lea.hbm %s0, %s172
          %s174 = smul.u32 40, %s164
          %s175 = sshll.u32 %s160, 4
          %s176 = int_to_ptr.vmem [resolvable:$true] %s175
          %s177 = sshll.u32 %s174, 4
          %181 = dma.hbm_to_vmem [thread:$0]  (%p170), %s173, %s177, %s176, %s157, 640, 640, 40
        $region28: #{tpu_custom_call.1} parent=23 // pred_fallthru
          _
      $region24: #{tpu_custom_call.1} parent=5 // pred_fallthru
        _
      %p182 = scmp.le.s32.totalorder 1, %s16
      %p183 = scmp.lt.s32.totalorder %s16, 4
      %p184 = pnand %p182, %p183
      %p185 = pneg %p184
      // Predicated region
      $region29: #{tpu_custom_call.1} parent=5 // pred_check
        _
      $region30: #{tpu_custom_call.1} parent=5 // pred_check_branch
        %187 = sbr.rel (%p184) target = $region32
      $region31: #{tpu_custom_call.1} parent=5 // pred_region
        %s188 = ssub.s32 %s16, 1
        %s189 = sand.u32 %s29, 1
        %s190 = scalar_lea.sflag [#allocation3], %s189
        %s191 = sand.u32 %s29, 1
        %s192 = smul.addr %s191, 2560
        %s193 = scalar_lea.vmem [#allocation2], %s192
        // Predicated region
        $region33: #{tpu_custom_call.1} parent=31 // pred_check
          %p194 = pneg %p42
        $region34: #{tpu_custom_call.1} parent=31 // pred_check_branch
          %196 = sbr.rel (%p194) target = $region36
        $region35: #{tpu_custom_call.1} parent=31 // pred_region
          %197 = dma.done %s190, 40960
        $region36: #{tpu_custom_call.1} parent=31 // pred_fallthru
          _
        // Predicated region
        $region37: #{tpu_custom_call.1} parent=31 // pred_check
          %p198 = pneg %p63
        $region38: #{tpu_custom_call.1} parent=31 // pred_check_branch
          %200 = sbr.rel (%p198) target = $region40
        $region39: #{tpu_custom_call.1} parent=31 // pred_region
          %201 = dma.done [#allocation6], 30720
        $region40: #{tpu_custom_call.1} parent=31 // pred_fallthru
          _
        // Predicated region
        $region41: #{tpu_custom_call.1} parent=31 // pred_check
          %p202 = pneg %p84
        $region42: #{tpu_custom_call.1} parent=31 // pred_check_branch
          %204 = sbr.rel (%p202) target = $region44
        $region43: #{tpu_custom_call.1} parent=31 // pred_region
          %205 = dma.done [#allocation6], 48
        $region44: #{tpu_custom_call.1} parent=31 // pred_fallthru
          _
        %s206 = sand.u32 %s29, 1
        %s207 = scalar_lea.sflag [#allocation3], %s206
        %s208 = sand.u32 %s29, 1
        %s209 = smul.addr %s208, 2560
        %s210 = scalar_lea.vmem [#allocation2], %s209
        %p211 = pneg %p42
        %p212 = pneg %p39
        %p213 = pneg %p63
        %p214 = pneg %p60
        %p215 = pneg %p84
        %p216 = pneg %p81
        %p217 = pneg %p110
        %p218 = pneg %p107
        %s219 = sand.u32 %s97, 1
        %s220 = scalar_lea.sflag [#allocation4], %s219
        %s221 = sand.u32 %s97, 1
        %s222 = smul.addr %s221, 1536
        %s223 = scalar_lea.vmem [#allocation8], %s222
        %s224 = smul.u32 64, %s21
        %s225 = ssub.s32 160, %s224
        %p226 = scmp.lt.s32.totalorder %s225, 64
        %s227 = scalar_select %p226, %s225, 64
        %s228 = smul.u32 128, %s227
        %s229 = smul.u32 %s228, 5
        %s230 = smul.u32 64, %s21
        %s231 = ssub.s32 160, %s230
        %p232 = scmp.lt.s32.totalorder %s231, 64
        %s233 = scalar_select %p232, %s231, 64
        %s234 = smul.u32 128, %s233
        %s235 = smul.u32 %s234, 3
        %v236 = vld [vmem:[%s193] sm:$0xff]
        %v237 = vld [vmem:[%s193 + $0x8] sm:$0xff]
        %v238 = vld [vmem:[%s193 + $0x10] sm:$0xff]
        %v239 = vld [vmem:[%s193 + $0x18] sm:$0xff]
        %v240 = vld [vmem:[%s193 + $0x20] sm:$0xff]
        %v241 = vld [vmem:[%s193 + $0x28] sm:$0xff]
        %v242 = vld [vmem:[%s193 + $0x30] sm:$0xff]
        %v243 = vld [vmem:[%s193 + $0x38] sm:$0xff]
        %v244 = vld [vmem:[%s193 + $0x40] sm:$0xff]
        %v245 = vld [vmem:[%s193 + $0x48] sm:$0xff]
        %v246 = vld [vmem:[%s193 + $0x50] sm:$0xff]
        %v247 = vld [vmem:[%s193 + $0x58] sm:$0xff]
        %v248 = vld [vmem:[%s193 + $0x60] sm:$0xff]
        %v249 = vld [vmem:[%s193 + $0x68] sm:$0xff]
        %v250 = vld [vmem:[%s193 + $0x70] sm:$0xff]
        %v251 = vld [vmem:[%s193 + $0x78] sm:$0xff]
        %v252 = vld [vmem:[%s193 + $0x80] sm:$0xff]
        %v253 = vld [vmem:[%s193 + $0x88] sm:$0xff]
        %v254 = vld [vmem:[%s193 + $0x90] sm:$0xff]
        %v255 = vld [vmem:[%s193 + $0x98] sm:$0xff]
        %v256 = vld [vmem:[%s193 + $0xa0] sm:$0xff]
        %v257 = vld [vmem:[%s193 + $0xa8] sm:$0xff]
        %v258 = vld [vmem:[%s193 + $0xb0] sm:$0xff]
        %v259 = vld [vmem:[%s193 + $0xb8] sm:$0xff]
        %v260 = vld [vmem:[%s193 + $0xc0] sm:$0xff]
        %v261 = vld [vmem:[%s193 + $0xc8] sm:$0xff]
        %v262 = vld [vmem:[%s193 + $0xd0] sm:$0xff]
        %v263 = vld [vmem:[%s193 + $0xd8] sm:$0xff]
        %v264 = vld [vmem:[%s193 + $0xe0] sm:$0xff]
        %v265 = vld [vmem:[%s193 + $0xe8] sm:$0xff]
        %v266 = vld [vmem:[%s193 + $0xf0] sm:$0xff]
        %v267 = vld [vmem:[%s193 + $0xf8] sm:$0xff]
        %v268 = vld [vmem:[%s193 + $0x100] sm:$0xff]
        %v269 = vld [vmem:[%s193 + $0x108] sm:$0xff]
        %v270 = vld [vmem:[%s193 + $0x110] sm:$0xff]
        %v271 = vld [vmem:[%s193 + $0x118] sm:$0xff]
        %v272 = vld [vmem:[%s193 + $0x120] sm:$0xff]
        %v273 = vld [vmem:[%s193 + $0x128] sm:$0xff]
        %v274 = vld [vmem:[%s193 + $0x130] sm:$0xff]
        %v275 = vld [vmem:[%s193 + $0x138] sm:$0xff]
        %v276 = vld [vmem:[%s193 + $0x140] sm:$0xff]
        %v277 = vld [vmem:[%s193 + $0x148] sm:$0xff]
        %v278 = vld [vmem:[%s193 + $0x150] sm:$0xff]
        %v279 = vld [vmem:[%s193 + $0x158] sm:$0xff]
        %v280 = vld [vmem:[%s193 + $0x160] sm:$0xff]
        %v281 = vld [vmem:[%s193 + $0x168] sm:$0xff]
        %v282 = vld [vmem:[%s193 + $0x170] sm:$0xff]
        %v283 = vld [vmem:[%s193 + $0x178] sm:$0xff]
        %v284 = vld [vmem:[%s193 + $0x180] sm:$0xff]
        %v285 = vld [vmem:[%s193 + $0x188] sm:$0xff]
        %v286 = vld [vmem:[%s193 + $0x190] sm:$0xff]
        %v287 = vld [vmem:[%s193 + $0x198] sm:$0xff]
        %v288 = vld [vmem:[%s193 + $0x1a0] sm:$0xff]
        %v289 = vld [vmem:[%s193 + $0x1a8] sm:$0xff]
        %v290 = vld [vmem:[%s193 + $0x1b0] sm:$0xff]
        %v291 = vld [vmem:[%s193 + $0x1b8] sm:$0xff]
        %v292 = vld [vmem:[%s193 + $0x1c0] sm:$0xff]
        %v293 = vld [vmem:[%s193 + $0x1c8] sm:$0xff]
        %v294 = vld [vmem:[%s193 + $0x1d0] sm:$0xff]
        %v295 = vld [vmem:[%s193 + $0x1d8] sm:$0xff]
        %v296 = vld [vmem:[%s193 + $0x1e0] sm:$0xff]
        %v297 = vld [vmem:[%s193 + $0x1e8] sm:$0xff]
        %v298 = vld [vmem:[%s193 + $0x1f0] sm:$0xff]
        %v299 = vld [vmem:[%s193 + $0x1f8] sm:$0xff]
        %v300 = vld [vmem:[%s193 + $0x200] sm:$0xff]
        %v301 = vld [vmem:[%s193 + $0x208] sm:$0xff]
        %v302 = vld [vmem:[%s193 + $0x210] sm:$0xff]
        %v303 = vld [vmem:[%s193 + $0x218] sm:$0xff]
        %v304 = vld [vmem:[%s193 + $0x220] sm:$0xff]
        %v305 = vld [vmem:[%s193 + $0x228] sm:$0xff]
        %v306 = vld [vmem:[%s193 + $0x230] sm:$0xff]
        %v307 = vld [vmem:[%s193 + $0x238] sm:$0xff]
        %v308 = vld [vmem:[%s193 + $0x240] sm:$0xff]
        %v309 = vld [vmem:[%s193 + $0x248] sm:$0xff]
        %v310 = vld [vmem:[%s193 + $0x250] sm:$0xff]
        %v311 = vld [vmem:[%s193 + $0x258] sm:$0xff]
        %v312 = vld [vmem:[%s193 + $0x260] sm:$0xff]
        %v313 = vld [vmem:[%s193 + $0x268] sm:$0xff]
        %v314 = vld [vmem:[%s193 + $0x270] sm:$0xff]
        %v315 = vld [vmem:[%s193 + $0x278] sm:$0xff]
        %v316 = vld [vmem:[%s193 + $0x280] sm:$0xff]
        %v317 = vld [vmem:[%s193 + $0x288] sm:$0xff]
        %v318 = vld [vmem:[%s193 + $0x290] sm:$0xff]
        %v319 = vld [vmem:[%s193 + $0x298] sm:$0xff]
        %v320 = vld [vmem:[%s193 + $0x2a0] sm:$0xff]
        %v321 = vld [vmem:[%s193 + $0x2a8] sm:$0xff]
        %v322 = vld [vmem:[%s193 + $0x2b0] sm:$0xff]
        %v323 = vld [vmem:[%s193 + $0x2b8] sm:$0xff]
        %v324 = vld [vmem:[%s193 + $0x2c0] sm:$0xff]
        %v325 = vld [vmem:[%s193 + $0x2c8] sm:$0xff]
        %v326 = vld [vmem:[%s193 + $0x2d0] sm:$0xff]
        %v327 = vld [vmem:[%s193 + $0x2d8] sm:$0xff]
        %v328 = vld [vmem:[%s193 + $0x2e0] sm:$0xff]
        %v329 = vld [vmem:[%s193 + $0x2e8] sm:$0xff]
        %v330 = vld [vmem:[%s193 + $0x2f0] sm:$0xff]
        %v331 = vld [vmem:[%s193 + $0x2f8] sm:$0xff]
        %v332 = vld [vmem:[%s193 + $0x300] sm:$0xff]
        %v333 = vld [vmem:[%s193 + $0x308] sm:$0xff]
        %v334 = vld [vmem:[%s193 + $0x310] sm:$0xff]
        %v335 = vld [vmem:[%s193 + $0x318] sm:$0xff]
        %v336 = vld [vmem:[%s193 + $0x320] sm:$0xff]
        %v337 = vld [vmem:[%s193 + $0x328] sm:$0xff]
        %v338 = vld [vmem:[%s193 + $0x330] sm:$0xff]
        %v339 = vld [vmem:[%s193 + $0x338] sm:$0xff]
        %v340 = vld [vmem:[%s193 + $0x340] sm:$0xff]
        %v341 = vld [vmem:[%s193 + $0x348] sm:$0xff]
        %v342 = vld [vmem:[%s193 + $0x350] sm:$0xff]
        %v343 = vld [vmem:[%s193 + $0x358] sm:$0xff]
        %v344 = vld [vmem:[%s193 + $0x360] sm:$0xff]
        %v345 = vld [vmem:[%s193 + $0x368] sm:$0xff]
        %v346 = vld [vmem:[%s193 + $0x370] sm:$0xff]
        %v347 = vld [vmem:[%s193 + $0x378] sm:$0xff]
        %v348 = vld [vmem:[%s193 + $0x380] sm:$0xff]
        %v349 = vld [vmem:[%s193 + $0x388] sm:$0xff]
        %v350 = vld [vmem:[%s193 + $0x390] sm:$0xff]
        %v351 = vld [vmem:[%s193 + $0x398] sm:$0xff]
        %v352 = vld [vmem:[%s193 + $0x3a0] sm:$0xff]
        %v353 = vld [vmem:[%s193 + $0x3a8] sm:$0xff]
        %v354 = vld [vmem:[%s193 + $0x3b0] sm:$0xff]
        %v355 = vld [vmem:[%s193 + $0x3b8] sm:$0xff]
        %v356 = vld [vmem:[%s193 + $0x3c0] sm:$0xff]
        %v357 = vld [vmem:[%s193 + $0x3c8] sm:$0xff]
        %v358 = vld [vmem:[%s193 + $0x3d0] sm:$0xff]
        %v359 = vld [vmem:[%s193 + $0x3d8] sm:$0xff]
        %v360 = vld [vmem:[%s193 + $0x3e0] sm:$0xff]
        %v361 = vld [vmem:[%s193 + $0x3e8] sm:$0xff]
        %v362 = vld [vmem:[%s193 + $0x3f0] sm:$0xff]
        %v363 = vld [vmem:[%s193 + $0x3f8] sm:$0xff]
        %v364 = vld [vmem:[%s193 + $0x400] sm:$0xff]
        %v365 = vld [vmem:[%s193 + $0x408] sm:$0xff]
        %v366 = vld [vmem:[%s193 + $0x410] sm:$0xff]
        %v367 = vld [vmem:[%s193 + $0x418] sm:$0xff]
        %v368 = vld [vmem:[%s193 + $0x420] sm:$0xff]
        %v369 = vld [vmem:[%s193 + $0x428] sm:$0xff]
        %v370 = vld [vmem:[%s193 + $0x430] sm:$0xff]
        %v371 = vld [vmem:[%s193 + $0x438] sm:$0xff]
        %v372 = vld [vmem:[%s193 + $0x440] sm:$0xff]
        %v373 = vld [vmem:[%s193 + $0x448] sm:$0xff]
        %v374 = vld [vmem:[%s193 + $0x450] sm:$0xff]
        %v375 = vld [vmem:[%s193 + $0x458] sm:$0xff]
        %v376 = vld [vmem:[%s193 + $0x460] sm:$0xff]
        %v377 = vld [vmem:[%s193 + $0x468] sm:$0xff]
        %v378 = vld [vmem:[%s193 + $0x470] sm:$0xff]
        %v379 = vld [vmem:[%s193 + $0x478] sm:$0xff]
        %v380 = vld [vmem:[%s193 + $0x480] sm:$0xff]
        %v381 = vld [vmem:[%s193 + $0x488] sm:$0xff]
        %v382 = vld [vmem:[%s193 + $0x490] sm:$0xff]
        %v383 = vld [vmem:[%s193 + $0x498] sm:$0xff]
        %v384 = vld [vmem:[%s193 + $0x4a0] sm:$0xff]
        %v385 = vld [vmem:[%s193 + $0x4a8] sm:$0xff]
        %v386 = vld [vmem:[%s193 + $0x4b0] sm:$0xff]
        %v387 = vld [vmem:[%s193 + $0x4b8] sm:$0xff]
        %v388 = vld [vmem:[%s193 + $0x4c0] sm:$0xff]
        %v389 = vld [vmem:[%s193 + $0x4c8] sm:$0xff]
        %v390 = vld [vmem:[%s193 + $0x4d0] sm:$0xff]
        %v391 = vld [vmem:[%s193 + $0x4d8] sm:$0xff]
        %v392 = vld [vmem:[%s193 + $0x4e0] sm:$0xff]
        %v393 = vld [vmem:[%s193 + $0x4e8] sm:$0xff]
        %v394 = vld [vmem:[%s193 + $0x4f0] sm:$0xff]
        %v395 = vld [vmem:[%s193 + $0x4f8] sm:$0xff]
        %v396 = vld [vmem:[%s193 + $0x500] sm:$0xff]
        %v397 = vld [vmem:[%s193 + $0x508] sm:$0xff]
        %v398 = vld [vmem:[%s193 + $0x510] sm:$0xff]
        %v399 = vld [vmem:[%s193 + $0x518] sm:$0xff]
        %v400 = vld [vmem:[%s193 + $0x520] sm:$0xff]
        %v401 = vld [vmem:[%s193 + $0x528] sm:$0xff]
        %v402 = vld [vmem:[%s193 + $0x530] sm:$0xff]
        %v403 = vld [vmem:[%s193 + $0x538] sm:$0xff]
        %v404 = vld [vmem:[%s193 + $0x540] sm:$0xff]
        %v405 = vld [vmem:[%s193 + $0x548] sm:$0xff]
        %v406 = vld [vmem:[%s193 + $0x550] sm:$0xff]
        %v407 = vld [vmem:[%s193 + $0x558] sm:$0xff]
        %v408 = vld [vmem:[%s193 + $0x560] sm:$0xff]
        %v409 = vld [vmem:[%s193 + $0x568] sm:$0xff]
        %v410 = vld [vmem:[%s193 + $0x570] sm:$0xff]
        %v411 = vld [vmem:[%s193 + $0x578] sm:$0xff]
        %v412 = vld [vmem:[%s193 + $0x580] sm:$0xff]
        %v413 = vld [vmem:[%s193 + $0x588] sm:$0xff]
        %v414 = vld [vmem:[%s193 + $0x590] sm:$0xff]
        %v415 = vld [vmem:[%s193 + $0x598] sm:$0xff]
        %v416 = vld [vmem:[%s193 + $0x5a0] sm:$0xff]
        %v417 = vld [vmem:[%s193 + $0x5a8] sm:$0xff]
        %v418 = vld [vmem:[%s193 + $0x5b0] sm:$0xff]
        %v419 = vld [vmem:[%s193 + $0x5b8] sm:$0xff]
        %v420 = vld [vmem:[%s193 + $0x5c0] sm:$0xff]
        %v421 = vld [vmem:[%s193 + $0x5c8] sm:$0xff]
        %v422 = vld [vmem:[%s193 + $0x5d0] sm:$0xff]
        %v423 = vld [vmem:[%s193 + $0x5d8] sm:$0xff]
        %v424 = vld [vmem:[%s193 + $0x5e0] sm:$0xff]
        %v425 = vld [vmem:[%s193 + $0x5e8] sm:$0xff]
        %v426 = vld [vmem:[%s193 + $0x5f0] sm:$0xff]
        %v427 = vld [vmem:[%s193 + $0x5f8] sm:$0xff]
        %v428 = vld [vmem:[%s193 + $0x600] sm:$0xff]
        %v429 = vld [vmem:[%s193 + $0x608] sm:$0xff]
        %v430 = vld [vmem:[%s193 + $0x610] sm:$0xff]
        %v431 = vld [vmem:[%s193 + $0x618] sm:$0xff]
        %v432 = vld [vmem:[%s193 + $0x620] sm:$0xff]
        %v433 = vld [vmem:[%s193 + $0x628] sm:$0xff]
        %v434 = vld [vmem:[%s193 + $0x630] sm:$0xff]
        %v435 = vld [vmem:[%s193 + $0x638] sm:$0xff]
        %v436 = vld [vmem:[%s193 + $0x640] sm:$0xff]
        %v437 = vld [vmem:[%s193 + $0x648] sm:$0xff]
        %v438 = vld [vmem:[%s193 + $0x650] sm:$0xff]
        %v439 = vld [vmem:[%s193 + $0x658] sm:$0xff]
        %v440 = vld [vmem:[%s193 + $0x660] sm:$0xff]
        %v441 = vld [vmem:[%s193 + $0x668] sm:$0xff]
        %v442 = vld [vmem:[%s193 + $0x670] sm:$0xff]
        %v443 = vld [vmem:[%s193 + $0x678] sm:$0xff]
        %v444 = vld [vmem:[%s193 + $0x680] sm:$0xff]
        %v445 = vld [vmem:[%s193 + $0x688] sm:$0xff]
        %v446 = vld [vmem:[%s193 + $0x690] sm:$0xff]
        %v447 = vld [vmem:[%s193 + $0x698] sm:$0xff]
        %v448 = vld [vmem:[%s193 + $0x6a0] sm:$0xff]
        %v449 = vld [vmem:[%s193 + $0x6a8] sm:$0xff]
        %v450 = vld [vmem:[%s193 + $0x6b0] sm:$0xff]
        %v451 = vld [vmem:[%s193 + $0x6b8] sm:$0xff]
        %v452 = vld [vmem:[%s193 + $0x6c0] sm:$0xff]
        %v453 = vld [vmem:[%s193 + $0x6c8] sm:$0xff]
        %v454 = vld [vmem:[%s193 + $0x6d0] sm:$0xff]
        %v455 = vld [vmem:[%s193 + $0x6d8] sm:$0xff]
        %v456 = vld [vmem:[%s193 + $0x6e0] sm:$0xff]
        %v457 = vld [vmem:[%s193 + $0x6e8] sm:$0xff]
        %v458 = vld [vmem:[%s193 + $0x6f0] sm:$0xff]
        %v459 = vld [vmem:[%s193 + $0x6f8] sm:$0xff]
        %v460 = vld [vmem:[%s193 + $0x700] sm:$0xff]
        %v461 = vld [vmem:[%s193 + $0x708] sm:$0xff]
        %v462 = vld [vmem:[%s193 + $0x710] sm:$0xff]
        %v463 = vld [vmem:[%s193 + $0x718] sm:$0xff]
        %v464 = vld [vmem:[%s193 + $0x720] sm:$0xff]
        %v465 = vld [vmem:[%s193 + $0x728] sm:$0xff]
        %v466 = vld [vmem:[%s193 + $0x730] sm:$0xff]
        %v467 = vld [vmem:[%s193 + $0x738] sm:$0xff]
        %v468 = vld [vmem:[%s193 + $0x740] sm:$0xff]
        %v469 = vld [vmem:[%s193 + $0x748] sm:$0xff]
        %v470 = vld [vmem:[%s193 + $0x750] sm:$0xff]
        %v471 = vld [vmem:[%s193 + $0x758] sm:$0xff]
        %v472 = vld [vmem:[%s193 + $0x760] sm:$0xff]
        %v473 = vld [vmem:[%s193 + $0x768] sm:$0xff]
        %v474 = vld [vmem:[%s193 + $0x770] sm:$0xff]
        %v475 = vld [vmem:[%s193 + $0x778] sm:$0xff]
        %v476 = vld [vmem:[%s193 + $0x780] sm:$0xff]
        %v477 = vld [vmem:[%s193 + $0x788] sm:$0xff]
        %v478 = vld [vmem:[%s193 + $0x790] sm:$0xff]
        %v479 = vld [vmem:[%s193 + $0x798] sm:$0xff]
        %v480 = vld [vmem:[%s193 + $0x7a0] sm:$0xff]
        %v481 = vld [vmem:[%s193 + $0x7a8] sm:$0xff]
        %v482 = vld [vmem:[%s193 + $0x7b0] sm:$0xff]
        %v483 = vld [vmem:[%s193 + $0x7b8] sm:$0xff]
        %v484 = vld [vmem:[%s193 + $0x7c0] sm:$0xff]
        %v485 = vld [vmem:[%s193 + $0x7c8] sm:$0xff]
        %v486 = vld [vmem:[%s193 + $0x7d0] sm:$0xff]
        %v487 = vld [vmem:[%s193 + $0x7d8] sm:$0xff]
        %v488 = vld [vmem:[%s193 + $0x7e0] sm:$0xff]
        %v489 = vld [vmem:[%s193 + $0x7e8] sm:$0xff]
        %v490 = vld [vmem:[%s193 + $0x7f0] sm:$0xff]
        %v491 = vld [vmem:[%s193 + $0x7f8] sm:$0xff]
        %v492 = vld [vmem:[%s193 + $0x800] sm:$0xff]
        %v493 = vld [vmem:[%s193 + $0x808] sm:$0xff]
        %v494 = vld [vmem:[%s193 + $0x810] sm:$0xff]
        %v495 = vld [vmem:[%s193 + $0x818] sm:$0xff]
        %v496 = vld [vmem:[%s193 + $0x820] sm:$0xff]
        %v497 = vld [vmem:[%s193 + $0x828] sm:$0xff]
        %v498 = vld [vmem:[%s193 + $0x830] sm:$0xff]
        %v499 = vld [vmem:[%s193 + $0x838] sm:$0xff]
        %v500 = vld [vmem:[%s193 + $0x840] sm:$0xff]
        %v501 = vld [vmem:[%s193 + $0x848] sm:$0xff]
        %v502 = vld [vmem:[%s193 + $0x850] sm:$0xff]
        %v503 = vld [vmem:[%s193 + $0x858] sm:$0xff]
        %v504 = vld [vmem:[%s193 + $0x860] sm:$0xff]
        %v505 = vld [vmem:[%s193 + $0x868] sm:$0xff]
        %v506 = vld [vmem:[%s193 + $0x870] sm:$0xff]
        %v507 = vld [vmem:[%s193 + $0x878] sm:$0xff]
        %v508 = vld [vmem:[%s193 + $0x880] sm:$0xff]
        %v509 = vld [vmem:[%s193 + $0x888] sm:$0xff]
        %v510 = vld [vmem:[%s193 + $0x890] sm:$0xff]
        %v511 = vld [vmem:[%s193 + $0x898] sm:$0xff]
        %v512 = vld [vmem:[%s193 + $0x8a0] sm:$0xff]
        %v513 = vld [vmem:[%s193 + $0x8a8] sm:$0xff]
        %v514 = vld [vmem:[%s193 + $0x8b0] sm:$0xff]
        %v515 = vld [vmem:[%s193 + $0x8b8] sm:$0xff]
        %v516 = vld [vmem:[%s193 + $0x8c0] sm:$0xff]
        %v517 = vld [vmem:[%s193 + $0x8c8] sm:$0xff]
        %v518 = vld [vmem:[%s193 + $0x8d0] sm:$0xff]
        %v519 = vld [vmem:[%s193 + $0x8d8] sm:$0xff]
        %v520 = vld [vmem:[%s193 + $0x8e0] sm:$0xff]
        %v521 = vld [vmem:[%s193 + $0x8e8] sm:$0xff]
        %v522 = vld [vmem:[%s193 + $0x8f0] sm:$0xff]
        %v523 = vld [vmem:[%s193 + $0x8f8] sm:$0xff]
        %v524 = vld [vmem:[%s193 + $0x900] sm:$0xff]
        %v525 = vld [vmem:[%s193 + $0x908] sm:$0xff]
        %v526 = vld [vmem:[%s193 + $0x910] sm:$0xff]
        %v527 = vld [vmem:[%s193 + $0x918] sm:$0xff]
        %v528 = vld [vmem:[%s193 + $0x920] sm:$0xff]
        %v529 = vld [vmem:[%s193 + $0x928] sm:$0xff]
        %v530 = vld [vmem:[%s193 + $0x930] sm:$0xff]
        %v531 = vld [vmem:[%s193 + $0x938] sm:$0xff]
        %v532 = vld [vmem:[%s193 + $0x940] sm:$0xff]
        %v533 = vld [vmem:[%s193 + $0x948] sm:$0xff]
        %v534 = vld [vmem:[%s193 + $0x950] sm:$0xff]
        %v535 = vld [vmem:[%s193 + $0x958] sm:$0xff]
        %v536 = vld [vmem:[%s193 + $0x960] sm:$0xff]
        %v537 = vld [vmem:[%s193 + $0x968] sm:$0xff]
        %v538 = vld [vmem:[%s193 + $0x970] sm:$0xff]
        %v539 = vld [vmem:[%s193 + $0x978] sm:$0xff]
        %v540 = vld [vmem:[%s193 + $0x980] sm:$0xff]
        %v541 = vld [vmem:[%s193 + $0x988] sm:$0xff]
        %v542 = vld [vmem:[%s193 + $0x990] sm:$0xff]
        %v543 = vld [vmem:[%s193 + $0x998] sm:$0xff]
        %v544 = vld [vmem:[%s193 + $0x9a0] sm:$0xff]
        %v545 = vld [vmem:[%s193 + $0x9a8] sm:$0xff]
        %v546 = vld [vmem:[%s193 + $0x9b0] sm:$0xff]
        %v547 = vld [vmem:[%s193 + $0x9b8] sm:$0xff]
        %v548 = vld [vmem:[%s193 + $0x9c0] sm:$0xff]
        %v549 = vld [vmem:[%s193 + $0x9c8] sm:$0xff]
        %v550 = vld [vmem:[%s193 + $0x9d0] sm:$0xff]
        %v551 = vld [vmem:[%s193 + $0x9d8] sm:$0xff]
        %v552 = vld [vmem:[%s193 + $0x9e0] sm:$0xff]
        %v553 = vld [vmem:[%s193 + $0x9e8] sm:$0xff]
        %v554 = vld [vmem:[%s193 + $0x9f0] sm:$0xff]
        %v555 = vld [vmem:[%s193 + $0x9f8] sm:$0xff]
        %v556 = vld [vmem:[#allocation5] sm:$0xff]
        %v557 = vld [vmem:[#allocation5 + $0x8] sm:$0xff]
        %v558 = vld [vmem:[#allocation5 + $0x10] sm:$0xff]
        %v559 = vld [vmem:[#allocation5 + $0x18] sm:$0xff]
        %v560 = vld [vmem:[#allocation5 + $0x20] sm:$0xff]
        %v561 = vld [vmem:[#allocation5 + $0x28] sm:$0xff]
        %v562 = vld [vmem:[#allocation5 + $0x30] sm:$0xff]
        %v563 = vld [vmem:[#allocation5 + $0x38] sm:$0xff]
        %v564 = vld [vmem:[#allocation5 + $0x40] sm:$0xff]
        %v565 = vld [vmem:[#allocation5 + $0x48] sm:$0xff]
        %v566 = vld [vmem:[#allocation5 + $0x50] sm:$0xff]
        %v567 = vld [vmem:[#allocation5 + $0x58] sm:$0xff]
        %v568 = vld [vmem:[#allocation5 + $0x60] sm:$0xff]
        %v569 = vld [vmem:[#allocation5 + $0x68] sm:$0xff]
        %v570 = vld [vmem:[#allocation5 + $0x70] sm:$0xff]
        %v571 = vld [vmem:[#allocation5 + $0x78] sm:$0xff]
        %v572 = vld [vmem:[#allocation5 + $0x80] sm:$0xff]
        %v573 = vld [vmem:[#allocation5 + $0x88] sm:$0xff]
        %v574 = vld [vmem:[#allocation5 + $0x90] sm:$0xff]
        %v575 = vld [vmem:[#allocation5 + $0x98] sm:$0xff]
        %v576 = vld [vmem:[#allocation5 + $0xa0] sm:$0xff]
        %v577 = vld [vmem:[#allocation5 + $0xa8] sm:$0xff]
        %v578 = vld [vmem:[#allocation5 + $0xb0] sm:$0xff]
        %v579 = vld [vmem:[#allocation5 + $0xb8] sm:$0xff]
        %v580 = vld [vmem:[#allocation5 + $0xc0] sm:$0xff]
        %v581 = vld [vmem:[#allocation5 + $0xc8] sm:$0xff]
        %v582 = vld [vmem:[#allocation5 + $0xd0] sm:$0xff]
        %v583 = vld [vmem:[#allocation5 + $0xd8] sm:$0xff]
        %v584 = vld [vmem:[#allocation5 + $0xe0] sm:$0xff]
        %v585 = vld [vmem:[#allocation5 + $0xe8] sm:$0xff]
        %v586 = vld [vmem:[#allocation5 + $0xf0] sm:$0xff]
        %v587 = vld [vmem:[#allocation5 + $0xf8] sm:$0xff]
        %v588 = vld [vmem:[#allocation5 + $0x100] sm:$0xff]
        %v589 = vld [vmem:[#allocation5 + $0x108] sm:$0xff]
        %v590 = vld [vmem:[#allocation5 + $0x110] sm:$0xff]
        %v591 = vld [vmem:[#allocation5 + $0x118] sm:$0xff]
        %v592 = vld [vmem:[#allocation5 + $0x120] sm:$0xff]
        %v593 = vld [vmem:[#allocation5 + $0x128] sm:$0xff]
        %v594 = vld [vmem:[#allocation5 + $0x130] sm:$0xff]
        %v595 = vld [vmem:[#allocation5 + $0x138] sm:$0xff]
        %v596 = vld [vmem:[#allocation5 + $0x140] sm:$0xff]
        %v597 = vld [vmem:[#allocation5 + $0x148] sm:$0xff]
        %v598 = vld [vmem:[#allocation5 + $0x150] sm:$0xff]
        %v599 = vld [vmem:[#allocation5 + $0x158] sm:$0xff]
        %v600 = vld [vmem:[#allocation5 + $0x160] sm:$0xff]
        %v601 = vld [vmem:[#allocation5 + $0x168] sm:$0xff]
        %v602 = vld [vmem:[#allocation5 + $0x170] sm:$0xff]
        %v603 = vld [vmem:[#allocation5 + $0x178] sm:$0xff]
        %v604 = vld [vmem:[#allocation5 + $0x180] sm:$0xff]
        %v605 = vld [vmem:[#allocation5 + $0x188] sm:$0xff]
        %v606 = vld [vmem:[#allocation5 + $0x190] sm:$0xff]
        %v607 = vld [vmem:[#allocation5 + $0x198] sm:$0xff]
        %v608 = vld [vmem:[#allocation5 + $0x1a0] sm:$0xff]
        %v609 = vld [vmem:[#allocation5 + $0x1a8] sm:$0xff]
        %v610 = vld [vmem:[#allocation5 + $0x1b0] sm:$0xff]
        %v611 = vld [vmem:[#allocation5 + $0x1b8] sm:$0xff]
        %v612 = vld [vmem:[#allocation5 + $0x1c0] sm:$0xff]
        %v613 = vld [vmem:[#allocation5 + $0x1c8] sm:$0xff]
        %v614 = vld [vmem:[#allocation5 + $0x1d0] sm:$0xff]
        %v615 = vld [vmem:[#allocation5 + $0x1d8] sm:$0xff]
        %v616 = vld [vmem:[#allocation5 + $0x1e0] sm:$0xff]
        %v617 = vld [vmem:[#allocation5 + $0x1e8] sm:$0xff]
        %v618 = vld [vmem:[#allocation5 + $0x1f0] sm:$0xff]
        %v619 = vld [vmem:[#allocation5 + $0x1f8] sm:$0xff]
        %v620 = vld [vmem:[#allocation5 + $0x200] sm:$0xff]
        %v621 = vld [vmem:[#allocation5 + $0x208] sm:$0xff]
        %v622 = vld [vmem:[#allocation5 + $0x210] sm:$0xff]
        %v623 = vld [vmem:[#allocation5 + $0x218] sm:$0xff]
        %v624 = vld [vmem:[#allocation5 + $0x220] sm:$0xff]
        %v625 = vld [vmem:[#allocation5 + $0x228] sm:$0xff]
        %v626 = vld [vmem:[#allocation5 + $0x230] sm:$0xff]
        %v627 = vld [vmem:[#allocation5 + $0x238] sm:$0xff]
        %v628 = vld [vmem:[#allocation5 + $0x240] sm:$0xff]
        %v629 = vld [vmem:[#allocation5 + $0x248] sm:$0xff]
        %v630 = vld [vmem:[#allocation5 + $0x250] sm:$0xff]
        %v631 = vld [vmem:[#allocation5 + $0x258] sm:$0xff]
        %v632 = vld [vmem:[#allocation5 + $0x260] sm:$0xff]
        %v633 = vld [vmem:[#allocation5 + $0x268] sm:$0xff]
        %v634 = vld [vmem:[#allocation5 + $0x270] sm:$0xff]
        %v635 = vld [vmem:[#allocation5 + $0x278] sm:$0xff]
        %v636 = vld [vmem:[#allocation5 + $0x280] sm:$0xff]
        %v637 = vld [vmem:[#allocation5 + $0x288] sm:$0xff]
        %v638 = vld [vmem:[#allocation5 + $0x290] sm:$0xff]
        %v639 = vld [vmem:[#allocation5 + $0x298] sm:$0xff]
        %v640 = vld [vmem:[#allocation5 + $0x2a0] sm:$0xff]
        %v641 = vld [vmem:[#allocation5 + $0x2a8] sm:$0xff]
        %v642 = vld [vmem:[#allocation5 + $0x2b0] sm:$0xff]
        %v643 = vld [vmem:[#allocation5 + $0x2b8] sm:$0xff]
        %v644 = vld [vmem:[#allocation5 + $0x2c0] sm:$0xff]
        %v645 = vld [vmem:[#allocation5 + $0x2c8] sm:$0xff]
        %v646 = vld [vmem:[#allocation5 + $0x2d0] sm:$0xff]
        %v647 = vld [vmem:[#allocation5 + $0x2d8] sm:$0xff]
        %v648 = vld [vmem:[#allocation5 + $0x2e0] sm:$0xff]
        %v649 = vld [vmem:[#allocation5 + $0x2e8] sm:$0xff]
        %v650 = vld [vmem:[#allocation5 + $0x2f0] sm:$0xff]
        %v651 = vld [vmem:[#allocation5 + $0x2f8] sm:$0xff]
        %v652 = vld [vmem:[#allocation5 + $0x300] sm:$0xff]
        %v653 = vld [vmem:[#allocation5 + $0x308] sm:$0xff]
        %v654 = vld [vmem:[#allocation5 + $0x310] sm:$0xff]
        %v655 = vld [vmem:[#allocation5 + $0x318] sm:$0xff]
        %v656 = vld [vmem:[#allocation5 + $0x320] sm:$0xff]
        %v657 = vld [vmem:[#allocation5 + $0x328] sm:$0xff]
        %v658 = vld [vmem:[#allocation5 + $0x330] sm:$0xff]
        %v659 = vld [vmem:[#allocation5 + $0x338] sm:$0xff]
        %v660 = vld [vmem:[#allocation5 + $0x340] sm:$0xff]
        %v661 = vld [vmem:[#allocation5 + $0x348] sm:$0xff]
        %v662 = vld [vmem:[#allocation5 + $0x350] sm:$0xff]
        %v663 = vld [vmem:[#allocation5 + $0x358] sm:$0xff]
        %v664 = vld [vmem:[#allocation5 + $0x360] sm:$0xff]
        %v665 = vld [vmem:[#allocation5 + $0x368] sm:$0xff]
        %v666 = vld [vmem:[#allocation5 + $0x370] sm:$0xff]
        %v667 = vld [vmem:[#allocation5 + $0x378] sm:$0xff]
        %v668 = vld [vmem:[#allocation5 + $0x380] sm:$0xff]
        %v669 = vld [vmem:[#allocation5 + $0x388] sm:$0xff]
        %v670 = vld [vmem:[#allocation5 + $0x390] sm:$0xff]
        %v671 = vld [vmem:[#allocation5 + $0x398] sm:$0xff]
        %v672 = vld [vmem:[#allocation5 + $0x3a0] sm:$0xff]
        %v673 = vld [vmem:[#allocation5 + $0x3a8] sm:$0xff]
        %v674 = vld [vmem:[#allocation5 + $0x3b0] sm:$0xff]
        %v675 = vld [vmem:[#allocation5 + $0x3b8] sm:$0xff]
        %v676 = vld [vmem:[#allocation5 + $0x3c0] sm:$0xff]
        %v677 = vld [vmem:[#allocation5 + $0x3c8] sm:$0xff]
        %v678 = vld [vmem:[#allocation5 + $0x3d0] sm:$0xff]
        %v679 = vld [vmem:[#allocation5 + $0x3d8] sm:$0xff]
        %v680 = vld [vmem:[#allocation5 + $0x3e0] sm:$0xff]
        %v681 = vld [vmem:[#allocation5 + $0x3e8] sm:$0xff]
        %v682 = vld [vmem:[#allocation5 + $0x3f0] sm:$0xff]
        %v683 = vld [vmem:[#allocation5 + $0x3f8] sm:$0xff]
        %v684 = vld [vmem:[#allocation5 + $0x400] sm:$0xff]
        %v685 = vld [vmem:[#allocation5 + $0x408] sm:$0xff]
        %v686 = vld [vmem:[#allocation5 + $0x410] sm:$0xff]
        %v687 = vld [vmem:[#allocation5 + $0x418] sm:$0xff]
        %v688 = vld [vmem:[#allocation5 + $0x420] sm:$0xff]
        %v689 = vld [vmem:[#allocation5 + $0x428] sm:$0xff]
        %v690 = vld [vmem:[#allocation5 + $0x430] sm:$0xff]
        %v691 = vld [vmem:[#allocation5 + $0x438] sm:$0xff]
        %v692 = vld [vmem:[#allocation5 + $0x440] sm:$0xff]
        %v693 = vld [vmem:[#allocation5 + $0x448] sm:$0xff]
        %v694 = vld [vmem:[#allocation5 + $0x450] sm:$0xff]
        %v695 = vld [vmem:[#allocation5 + $0x458] sm:$0xff]
        %v696 = vld [vmem:[#allocation5 + $0x460] sm:$0xff]
        %v697 = vld [vmem:[#allocation5 + $0x468] sm:$0xff]
        %v698 = vld [vmem:[#allocation5 + $0x470] sm:$0xff]
        %v699 = vld [vmem:[#allocation5 + $0x478] sm:$0xff]
        %v700 = vld [vmem:[#allocation5 + $0x480] sm:$0xff]
        %v701 = vld [vmem:[#allocation5 + $0x488] sm:$0xff]
        %v702 = vld [vmem:[#allocation5 + $0x490] sm:$0xff]
        %v703 = vld [vmem:[#allocation5 + $0x498] sm:$0xff]
        %v704 = vld [vmem:[#allocation5 + $0x4a0] sm:$0xff]
        %v705 = vld [vmem:[#allocation5 + $0x4a8] sm:$0xff]
        %v706 = vld [vmem:[#allocation5 + $0x4b0] sm:$0xff]
        %v707 = vld [vmem:[#allocation5 + $0x4b8] sm:$0xff]
        %v708 = vld [vmem:[#allocation5 + $0x4c0] sm:$0xff]
        %v709 = vld [vmem:[#allocation5 + $0x4c8] sm:$0xff]
        %v710 = vld [vmem:[#allocation5 + $0x4d0] sm:$0xff]
        %v711 = vld [vmem:[#allocation5 + $0x4d8] sm:$0xff]
        %v712 = vld [vmem:[#allocation5 + $0x4e0] sm:$0xff]
        %v713 = vld [vmem:[#allocation5 + $0x4e8] sm:$0xff]
        %v714 = vld [vmem:[#allocation5 + $0x4f0] sm:$0xff]
        %v715 = vld [vmem:[#allocation5 + $0x4f8] sm:$0xff]
        %v716 = vld [vmem:[#allocation5 + $0x500] sm:$0xff]
        %v717 = vld [vmem:[#allocation5 + $0x508] sm:$0xff]
        %v718 = vld [vmem:[#allocation5 + $0x510] sm:$0xff]
        %v719 = vld [vmem:[#allocation5 + $0x518] sm:$0xff]
        %v720 = vld [vmem:[#allocation5 + $0x520] sm:$0xff]
        %v721 = vld [vmem:[#allocation5 + $0x528] sm:$0xff]
        %v722 = vld [vmem:[#allocation5 + $0x530] sm:$0xff]
        %v723 = vld [vmem:[#allocation5 + $0x538] sm:$0xff]
        %v724 = vld [vmem:[#allocation5 + $0x540] sm:$0xff]
        %v725 = vld [vmem:[#allocation5 + $0x548] sm:$0xff]
        %v726 = vld [vmem:[#allocation5 + $0x550] sm:$0xff]
        %v727 = vld [vmem:[#allocation5 + $0x558] sm:$0xff]
        %v728 = vld [vmem:[#allocation5 + $0x560] sm:$0xff]
        %v729 = vld [vmem:[#allocation5 + $0x568] sm:$0xff]
        %v730 = vld [vmem:[#allocation5 + $0x570] sm:$0xff]
        %v731 = vld [vmem:[#allocation5 + $0x578] sm:$0xff]
        %v732 = vld [vmem:[#allocation5 + $0x580] sm:$0xff]
        %v733 = vld [vmem:[#allocation5 + $0x588] sm:$0xff]
        %v734 = vld [vmem:[#allocation5 + $0x590] sm:$0xff]
        %v735 = vld [vmem:[#allocation5 + $0x598] sm:$0xff]
        %v736 = vld [vmem:[#allocation5 + $0x5a0] sm:$0xff]
        %v737 = vld [vmem:[#allocation5 + $0x5a8] sm:$0xff]
        %v738 = vld [vmem:[#allocation5 + $0x5b0] sm:$0xff]
        %v739 = vld [vmem:[#allocation5 + $0x5b8] sm:$0xff]
        %v740 = vld [vmem:[#allocation5 + $0x5c0] sm:$0xff]
        %v741 = vld [vmem:[#allocation5 + $0x5c8] sm:$0xff]
        %v742 = vld [vmem:[#allocation5 + $0x5d0] sm:$0xff]
        %v743 = vld [vmem:[#allocation5 + $0x5d8] sm:$0xff]
        %v744 = vld [vmem:[#allocation5 + $0x5e0] sm:$0xff]
        %v745 = vld [vmem:[#allocation5 + $0x5e8] sm:$0xff]
        %v746 = vld [vmem:[#allocation5 + $0x5f0] sm:$0xff]
        %v747 = vld [vmem:[#allocation5 + $0x5f8] sm:$0xff]
        %v748 = vld [vmem:[#allocation5 + $0x600] sm:$0xff]
        %v749 = vld [vmem:[#allocation5 + $0x608] sm:$0xff]
        %v750 = vld [vmem:[#allocation5 + $0x610] sm:$0xff]
        %v751 = vld [vmem:[#allocation5 + $0x618] sm:$0xff]
        %v752 = vld [vmem:[#allocation5 + $0x620] sm:$0xff]
        %v753 = vld [vmem:[#allocation5 + $0x628] sm:$0xff]
        %v754 = vld [vmem:[#allocation5 + $0x630] sm:$0xff]
        %v755 = vld [vmem:[#allocation5 + $0x638] sm:$0xff]
        %v756 = vld [vmem:[#allocation5 + $0x640] sm:$0xff]
        %v757 = vld [vmem:[#allocation5 + $0x648] sm:$0xff]
        %v758 = vld [vmem:[#allocation5 + $0x650] sm:$0xff]
        %v759 = vld [vmem:[#allocation5 + $0x658] sm:$0xff]
        %v760 = vld [vmem:[#allocation5 + $0x660] sm:$0xff]
        %v761 = vld [vmem:[#allocation5 + $0x668] sm:$0xff]
        %v762 = vld [vmem:[#allocation5 + $0x670] sm:$0xff]
        %v763 = vld [vmem:[#allocation5 + $0x678] sm:$0xff]
        %v764 = vld [vmem:[#allocation5 + $0x680] sm:$0xff]
        %v765 = vld [vmem:[#allocation5 + $0x688] sm:$0xff]
        %v766 = vld [vmem:[#allocation5 + $0x690] sm:$0xff]
        %v767 = vld [vmem:[#allocation5 + $0x698] sm:$0xff]
        %v768 = vld [vmem:[#allocation5 + $0x6a0] sm:$0xff]
        %v769 = vld [vmem:[#allocation5 + $0x6a8] sm:$0xff]
        %v770 = vld [vmem:[#allocation5 + $0x6b0] sm:$0xff]
        %v771 = vld [vmem:[#allocation5 + $0x6b8] sm:$0xff]
        %v772 = vld [vmem:[#allocation5 + $0x6c0] sm:$0xff]
        %v773 = vld [vmem:[#allocation5 + $0x6c8] sm:$0xff]
        %v774 = vld [vmem:[#allocation5 + $0x6d0] sm:$0xff]
        %v775 = vld [vmem:[#allocation5 + $0x6d8] sm:$0xff]
        %v776 = vld [vmem:[#allocation5 + $0x6e0] sm:$0xff]
        %v777 = vld [vmem:[#allocation5 + $0x6e8] sm:$0xff]
        %v778 = vld [vmem:[#allocation5 + $0x6f0] sm:$0xff]
        %v779 = vld [vmem:[#allocation5 + $0x6f8] sm:$0xff]
        %v780 = vld [vmem:[#allocation5 + $0x700] sm:$0xff]
        %v781 = vld [vmem:[#allocation5 + $0x708] sm:$0xff]
        %v782 = vld [vmem:[#allocation5 + $0x710] sm:$0xff]
        %v783 = vld [vmem:[#allocation5 + $0x718] sm:$0xff]
        %v784 = vld [vmem:[#allocation5 + $0x720] sm:$0xff]
        %v785 = vld [vmem:[#allocation5 + $0x728] sm:$0xff]
        %v786 = vld [vmem:[#allocation5 + $0x730] sm:$0xff]
        %v787 = vld [vmem:[#allocation5 + $0x738] sm:$0xff]
        %v788 = vld [vmem:[#allocation5 + $0x740] sm:$0xff]
        %v789 = vld [vmem:[#allocation5 + $0x748] sm:$0xff]
        %v790 = vld [vmem:[#allocation5 + $0x750] sm:$0xff]
        %v791 = vld [vmem:[#allocation5 + $0x758] sm:$0xff]
        %v792 = vld [vmem:[#allocation5 + $0x760] sm:$0xff]
        %v793 = vld [vmem:[#allocation5 + $0x768] sm:$0xff]
        %v794 = vld [vmem:[#allocation5 + $0x770] sm:$0xff]
        %v795 = vld [vmem:[#allocation5 + $0x778] sm:$0xff]
        %v796 = vld [vmem:[#allocation7] sm:$0x7]
        %v798 = vlaneseq
        %v799 = vshrl.u32 %v798, 7
        %v800 = vsub.s32 0, %v799
        %v801 = vrot.slane %v796, %v800
        %v802 = vlaneseq
        %v803 = vshrl.u32 %v802, 7
        %v804 = vsub.s32 1, %v803
        %v805 = vrot.slane %v796, %v804
        %v806 = vlaneseq
        %v807 = vshrl.u32 %v806, 7
        %v808 = vsub.s32 2, %v807
        %v809 = vrot.slane %v796, %v808
        %813 = vmatprep.subr.mxu0 %v602
        %814 = vmatpush1.msra.mxu0 %v601
        %815 = vmatprep.subr.mxu0 %v599
        %816 = vmatpush1.msra.mxu0 %v598
        %817 = vmatprep.subr.mxu0 %v596
        %818 = vmatpush1.msra.mxu0 %v595
        %819 = vmatprep.subr.mxu0 %v593
        %820 = vmatpush1.msra.mxu0 %v592
        %821 = vmatprep.subr.mxu0 %v590
        %822 = vmatpush1.msra.mxu0 %v589
        %823 = vmatprep.subr.mxu0 %v587
        %824 = vmatpush1.msra.mxu0 %v586
        %825 = vmatprep.subr.mxu0 %v584
        %826 = vmatpush1.msra.mxu0 %v583
        %827 = vmatprep.subr.mxu0 %v581
        %828 = vmatpush1.msra.mxu0 %v580
        %829 = vmatprep.subr.mxu0 %v578
        %830 = vmatpush1.msra.mxu0 %v577
        %831 = vmatprep.subr.mxu0 %v575
        %832 = vmatpush1.msra.mxu0 %v574
        %833 = vmatprep.subr.mxu0 %v572
        %834 = vmatpush1.msra.mxu0 %v571
        %835 = vmatprep.subr.mxu0 %v569
        %836 = vmatpush1.msra.mxu0 %v568
        %837 = vmatprep.subr.mxu0 %v566
        %838 = vmatpush1.msra.mxu0 %v565
        %839 = vmatprep.subr.mxu0 %v563
        %840 = vmatpush1.msra.mxu0 %v562
        %841 = vmatprep.subr.mxu0 %v560
        %842 = vmatpush1.msra.mxu0 %v559
        %843 = vmatprep.subr.mxu0 %v557
        %844 = vmatpush1.msra.mxu0 %v556
        %845 = vmatprep.subr.mxu0 %v650
        %846 = vmatpush2.msra.mxu0 %v649
        %847 = vmatprep.subr.mxu0 %v647
        %848 = vmatpush2.msra.mxu0 %v646
        %849 = vmatprep.subr.mxu0 %v644
        %850 = vmatpush2.msra.mxu0 %v643
        %851 = vmatprep.subr.mxu0 %v641
        %852 = vmatpush2.msra.mxu0 %v640
        %853 = vmatprep.subr.mxu0 %v638
        %854 = vmatpush2.msra.mxu0 %v637
        %855 = vmatprep.subr.mxu0 %v635
        %856 = vmatpush2.msra.mxu0 %v634
        %857 = vmatprep.subr.mxu0 %v632
        %858 = vmatpush2.msra.mxu0 %v631
        %859 = vmatprep.subr.mxu0 %v629
        %860 = vmatpush2.msra.mxu0 %v628
        %861 = vmatprep.subr.mxu0 %v626
        %862 = vmatpush2.msra.mxu0 %v625
        %863 = vmatprep.subr.mxu0 %v623
        %864 = vmatpush2.msra.mxu0 %v622
        %865 = vmatprep.subr.mxu0 %v620
        %866 = vmatpush2.msra.mxu0 %v619
        %867 = vmatprep.subr.mxu0 %v617
        %868 = vmatpush2.msra.mxu0 %v616
        %869 = vmatprep.subr.mxu0 %v614
        %870 = vmatpush2.msra.mxu0 %v613
        %871 = vmatprep.subr.mxu0 %v611
        %872 = vmatpush2.msra.mxu0 %v610
        %873 = vmatprep.subr.mxu0 %v608
        %874 = vmatpush2.msra.mxu0 %v607
        %875 = vmatprep.subr.mxu0 %v605
        %876 = vmatpush2.msra.mxu0 %v604
        %877 = vmatprep.mubr.f32.mxu0 %v237
        %878 = vmatmul.mubr.f32.gmra.mxu0 %v236
        %v879 = vpop.f32.mrf.mxu0
        %v880 = vadd.f32 %v801, %v879
        %v881 = vpop.f32.mrf.mxu0
        %v882 = vadd.f32 %v805, %v881
        %883 = vmatprep.mubr.f32.mxu0 %v242
        %884 = vmatmul.mubr.f32.gmra.mxu0 %v241
        %v885 = vpop.f32.mrf.mxu0
        %v886 = vadd.f32 %v801, %v885
        %v887 = vpop.f32.mrf.mxu0
        %v888 = vadd.f32 %v805, %v887
        %889 = vmatprep.mubr.f32.mxu0 %v247
        %890 = vmatmul.mubr.f32.gmra.mxu0 %v246
        %v891 = vpop.f32.mrf.mxu0
        %v892 = vadd.f32 %v801, %v891
        %v893 = vpop.f32.mrf.mxu0
        %v894 = vadd.f32 %v805, %v893
        %895 = vmatprep.mubr.f32.mxu0 %v252
        %896 = vmatmul.mubr.f32.gmra.mxu0 %v251
        %v897 = vpop.f32.mrf.mxu0
        %v898 = vadd.f32 %v801, %v897
        %v899 = vpop.f32.mrf.mxu0
        %v900 = vadd.f32 %v805, %v899
        %901 = vmatprep.mubr.f32.mxu0 %v257
        %902 = vmatmul.mubr.f32.gmra.mxu0 %v256
        %v903 = vpop.f32.mrf.mxu0
        %v904 = vadd.f32 %v801, %v903
        %v905 = vpop.f32.mrf.mxu0
        %v906 = vadd.f32 %v805, %v905
        %907 = vmatprep.mubr.f32.mxu0 %v262
        %908 = vmatmul.mubr.f32.gmra.mxu0 %v261
        %v909 = vpop.f32.mrf.mxu0
        %v910 = vadd.f32 %v801, %v909
        %v911 = vpop.f32.mrf.mxu0
        %v912 = vadd.f32 %v805, %v911
        %913 = vmatprep.mubr.f32.mxu0 %v267
        %914 = vmatmul.mubr.f32.gmra.mxu0 %v266
        %v915 = vpop.f32.mrf.mxu0
        %v916 = vadd.f32 %v801, %v915
        %v917 = vpop.f32.mrf.mxu0
        %v918 = vadd.f32 %v805, %v917
        %919 = vmatprep.mubr.f32.mxu0 %v272
        %920 = vmatmul.mubr.f32.gmra.mxu0 %v271
        %v921 = vpop.f32.mrf.mxu0
        %v922 = vadd.f32 %v801, %v921
        %v923 = vpop.f32.mrf.mxu0
        %v924 = vadd.f32 %v805, %v923
        %925 = vmatprep.mubr.f32.mxu0 %v277
        %926 = vmatmul.mubr.f32.gmra.mxu0 %v276
        %v927 = vpop.f32.mrf.mxu0
        %v928 = vadd.f32 %v801, %v927
        %v929 = vpop.f32.mrf.mxu0
        %v930 = vadd.f32 %v805, %v929
        %931 = vmatprep.mubr.f32.mxu0 %v282
        %932 = vmatmul.mubr.f32.gmra.mxu0 %v281
        %v933 = vpop.f32.mrf.mxu0
        %v934 = vadd.f32 %v801, %v933
        %v935 = vpop.f32.mrf.mxu0
        %v936 = vadd.f32 %v805, %v935
        %937 = vmatprep.mubr.f32.mxu0 %v287
        %938 = vmatmul.mubr.f32.gmra.mxu0 %v286
        %v939 = vpop.f32.mrf.mxu0
        %v940 = vadd.f32 %v801, %v939
        %v941 = vpop.f32.mrf.mxu0
        %v942 = vadd.f32 %v805, %v941
        %943 = vmatprep.mubr.f32.mxu0 %v292
        %944 = vmatmul.mubr.f32.gmra.mxu0 %v291
        %v945 = vpop.f32.mrf.mxu0
        %v946 = vadd.f32 %v801, %v945
        %v947 = vpop.f32.mrf.mxu0
        %v948 = vadd.f32 %v805, %v947
        %949 = vmatprep.mubr.f32.mxu0 %v297
        %950 = vmatmul.mubr.f32.gmra.mxu0 %v296
        %v951 = vpop.f32.mrf.mxu0
        %v952 = vadd.f32 %v801, %v951
        %v953 = vpop.f32.mrf.mxu0
        %v954 = vadd.f32 %v805, %v953
        %955 = vmatprep.mubr.f32.mxu0 %v302
        %956 = vmatmul.mubr.f32.gmra.mxu0 %v301
        %v957 = vpop.f32.mrf.mxu0
        %v958 = vadd.f32 %v801, %v957
        %v959 = vpop.f32.mrf.mxu0
        %v960 = vadd.f32 %v805, %v959
        %961 = vmatprep.mubr.f32.mxu0 %v307
        %962 = vmatmul.mubr.f32.gmra.mxu0 %v306
        %v963 = vpop.f32.mrf.mxu0
        %v964 = vadd.f32 %v801, %v963
        %v965 = vpop.f32.mrf.mxu0
        %v966 = vadd.f32 %v805, %v965
        %967 = vmatprep.mubr.f32.mxu0 %v312
        %968 = vmatmul.mubr.f32.gmra.mxu0 %v311
        %v969 = vpop.f32.mrf.mxu0
        %v970 = vadd.f32 %v801, %v969
        %v971 = vpop.f32.mrf.mxu0
        %v972 = vadd.f32 %v805, %v971
        %973 = vmatprep.mubr.f32.mxu0 %v317
        %974 = vmatmul.mubr.f32.gmra.mxu0 %v316
        %v975 = vpop.f32.mrf.mxu0
        %v976 = vadd.f32 %v801, %v975
        %v977 = vpop.f32.mrf.mxu0
        %v978 = vadd.f32 %v805, %v977
        %979 = vmatprep.mubr.f32.mxu0 %v322
        %980 = vmatmul.mubr.f32.gmra.mxu0 %v321
        %v981 = vpop.f32.mrf.mxu0
        %v982 = vadd.f32 %v801, %v981
        %v983 = vpop.f32.mrf.mxu0
        %v984 = vadd.f32 %v805, %v983
        %985 = vmatprep.mubr.f32.mxu0 %v327
        %986 = vmatmul.mubr.f32.gmra.mxu0 %v326
        %v987 = vpop.f32.mrf.mxu0
        %v988 = vadd.f32 %v801, %v987
        %v989 = vpop.f32.mrf.mxu0
        %v990 = vadd.f32 %v805, %v989
        %991 = vmatprep.mubr.f32.mxu0 %v332
        %992 = vmatmul.mubr.f32.gmra.mxu0 %v331
        %v993 = vpop.f32.mrf.mxu0
        %v994 = vadd.f32 %v801, %v993
        %v995 = vpop.f32.mrf.mxu0
        %v996 = vadd.f32 %v805, %v995
        %997 = vmatprep.mubr.f32.mxu0 %v337
        %998 = vmatmul.mubr.f32.gmra.mxu0 %v336
        %v999 = vpop.f32.mrf.mxu0
        %v1000 = vadd.f32 %v801, %v999
        %v1001 = vpop.f32.mrf.mxu0
        %v1002 = vadd.f32 %v805, %v1001
        %1003 = vmatprep.mubr.f32.mxu0 %v342
        %1004 = vmatmul.mubr.f32.gmra.mxu0 %v341
        %v1005 = vpop.f32.mrf.mxu0
        %v1006 = vadd.f32 %v801, %v1005
        %v1007 = vpop.f32.mrf.mxu0
        %v1008 = vadd.f32 %v805, %v1007
        %1009 = vmatprep.mubr.f32.mxu0 %v347
        %1010 = vmatmul.mubr.f32.gmra.mxu0 %v346
        %v1011 = vpop.f32.mrf.mxu0
        %v1012 = vadd.f32 %v801, %v1011
        %v1013 = vpop.f32.mrf.mxu0
        %v1014 = vadd.f32 %v805, %v1013
        %1015 = vmatprep.mubr.f32.mxu0 %v352
        %1016 = vmatmul.mubr.f32.gmra.mxu0 %v351
        %v1017 = vpop.f32.mrf.mxu0
        %v1018 = vadd.f32 %v801, %v1017
        %v1019 = vpop.f32.mrf.mxu0
        %v1020 = vadd.f32 %v805, %v1019
        %1021 = vmatprep.mubr.f32.mxu0 %v357
        %1022 = vmatmul.mubr.f32.gmra.mxu0 %v356
        %v1023 = vpop.f32.mrf.mxu0
        %v1024 = vadd.f32 %v801, %v1023
        %v1025 = vpop.f32.mrf.mxu0
        %v1026 = vadd.f32 %v805, %v1025
        %1027 = vmatprep.mubr.f32.mxu0 %v362
        %1028 = vmatmul.mubr.f32.gmra.mxu0 %v361
        %v1029 = vpop.f32.mrf.mxu0
        %v1030 = vadd.f32 %v801, %v1029
        %v1031 = vpop.f32.mrf.mxu0
        %v1032 = vadd.f32 %v805, %v1031
        %1033 = vmatprep.mubr.f32.mxu0 %v367
        %1034 = vmatmul.mubr.f32.gmra.mxu0 %v366
        %v1035 = vpop.f32.mrf.mxu0
        %v1036 = vadd.f32 %v801, %v1035
        %v1037 = vpop.f32.mrf.mxu0
        %v1038 = vadd.f32 %v805, %v1037
        %1039 = vmatprep.mubr.f32.mxu0 %v372
        %1040 = vmatmul.mubr.f32.gmra.mxu0 %v371
        %v1041 = vpop.f32.mrf.mxu0
        %v1042 = vadd.f32 %v801, %v1041
        %v1043 = vpop.f32.mrf.mxu0
        %v1044 = vadd.f32 %v805, %v1043
        %1045 = vmatprep.mubr.f32.mxu0 %v377
        %1046 = vmatmul.mubr.f32.gmra.mxu0 %v376
        %v1047 = vpop.f32.mrf.mxu0
        %v1048 = vadd.f32 %v801, %v1047
        %v1049 = vpop.f32.mrf.mxu0
        %v1050 = vadd.f32 %v805, %v1049
        %1051 = vmatprep.mubr.f32.mxu0 %v382
        %1052 = vmatmul.mubr.f32.gmra.mxu0 %v381
        %v1053 = vpop.f32.mrf.mxu0
        %v1054 = vadd.f32 %v801, %v1053
        %v1055 = vpop.f32.mrf.mxu0
        %v1056 = vadd.f32 %v805, %v1055
        %1057 = vmatprep.mubr.f32.mxu0 %v387
        %1058 = vmatmul.mubr.f32.gmra.mxu0 %v386
        %v1059 = vpop.f32.mrf.mxu0
        %v1060 = vadd.f32 %v801, %v1059
        %v1061 = vpop.f32.mrf.mxu0
        %v1062 = vadd.f32 %v805, %v1061
        %1063 = vmatprep.mubr.f32.mxu0 %v392
        %1064 = vmatmul.mubr.f32.gmra.mxu0 %v391
        %v1065 = vpop.f32.mrf.mxu0
        %v1066 = vadd.f32 %v801, %v1065
        %v1067 = vpop.f32.mrf.mxu0
        %v1068 = vadd.f32 %v805, %v1067
        %1069 = vmatprep.mubr.f32.mxu0 %v397
        %1070 = vmatmul.mubr.f32.gmra.mxu0 %v396
        %v1071 = vpop.f32.mrf.mxu0
        %v1072 = vadd.f32 %v801, %v1071
        %v1073 = vpop.f32.mrf.mxu0
        %v1074 = vadd.f32 %v805, %v1073
        %1075 = vmatprep.mubr.f32.mxu0 %v402
        %1076 = vmatmul.mubr.f32.gmra.mxu0 %v401
        %v1077 = vpop.f32.mrf.mxu0
        %v1078 = vadd.f32 %v801, %v1077
        %v1079 = vpop.f32.mrf.mxu0
        %v1080 = vadd.f32 %v805, %v1079
        %1081 = vmatprep.mubr.f32.mxu0 %v407
        %1082 = vmatmul.mubr.f32.gmra.mxu0 %v406
        %v1083 = vpop.f32.mrf.mxu0
        %v1084 = vadd.f32 %v801, %v1083
        %v1085 = vpop.f32.mrf.mxu0
        %v1086 = vadd.f32 %v805, %v1085
        %1087 = vmatprep.mubr.f32.mxu0 %v412
        %1088 = vmatmul.mubr.f32.gmra.mxu0 %v411
        %v1089 = vpop.f32.mrf.mxu0
        %v1090 = vadd.f32 %v801, %v1089
        %v1091 = vpop.f32.mrf.mxu0
        %v1092 = vadd.f32 %v805, %v1091
        %1093 = vmatprep.mubr.f32.mxu0 %v417
        %1094 = vmatmul.mubr.f32.gmra.mxu0 %v416
        %v1095 = vpop.f32.mrf.mxu0
        %v1096 = vadd.f32 %v801, %v1095
        %v1097 = vpop.f32.mrf.mxu0
        %v1098 = vadd.f32 %v805, %v1097
        %1099 = vmatprep.mubr.f32.mxu0 %v422
        %1100 = vmatmul.mubr.f32.gmra.mxu0 %v421
        %v1101 = vpop.f32.mrf.mxu0
        %v1102 = vadd.f32 %v801, %v1101
        %v1103 = vpop.f32.mrf.mxu0
        %v1104 = vadd.f32 %v805, %v1103
        %1105 = vmatprep.mubr.f32.mxu0 %v427
        %1106 = vmatmul.mubr.f32.gmra.mxu0 %v426
        %v1107 = vpop.f32.mrf.mxu0
        %v1108 = vadd.f32 %v801, %v1107
        %v1109 = vpop.f32.mrf.mxu0
        %v1110 = vadd.f32 %v805, %v1109
        %1111 = vmatprep.mubr.f32.mxu0 %v432
        %1112 = vmatmul.mubr.f32.gmra.mxu0 %v431
        %v1113 = vpop.f32.mrf.mxu0
        %v1114 = vadd.f32 %v801, %v1113
        %v1115 = vpop.f32.mrf.mxu0
        %v1116 = vadd.f32 %v805, %v1115
        %1117 = vmatprep.mubr.f32.mxu0 %v437
        %1118 = vmatmul.mubr.f32.gmra.mxu0 %v436
        %v1119 = vpop.f32.mrf.mxu0
        %v1120 = vadd.f32 %v801, %v1119
        %v1121 = vpop.f32.mrf.mxu0
        %v1122 = vadd.f32 %v805, %v1121
        %1123 = vmatprep.mubr.f32.mxu0 %v442
        %1124 = vmatmul.mubr.f32.gmra.mxu0 %v441
        %v1125 = vpop.f32.mrf.mxu0
        %v1126 = vadd.f32 %v801, %v1125
        %v1127 = vpop.f32.mrf.mxu0
        %v1128 = vadd.f32 %v805, %v1127
        %1129 = vmatprep.mubr.f32.mxu0 %v447
        %1130 = vmatmul.mubr.f32.gmra.mxu0 %v446
        %v1131 = vpop.f32.mrf.mxu0
        %v1132 = vadd.f32 %v801, %v1131
        %v1133 = vpop.f32.mrf.mxu0
        %v1134 = vadd.f32 %v805, %v1133
        %1135 = vmatprep.mubr.f32.mxu0 %v452
        %1136 = vmatmul.mubr.f32.gmra.mxu0 %v451
        %v1137 = vpop.f32.mrf.mxu0
        %v1138 = vadd.f32 %v801, %v1137
        %v1139 = vpop.f32.mrf.mxu0
        %v1140 = vadd.f32 %v805, %v1139
        %1141 = vmatprep.mubr.f32.mxu0 %v457
        %1142 = vmatmul.mubr.f32.gmra.mxu0 %v456
        %v1143 = vpop.f32.mrf.mxu0
        %v1144 = vadd.f32 %v801, %v1143
        %v1145 = vpop.f32.mrf.mxu0
        %v1146 = vadd.f32 %v805, %v1145
        %1147 = vmatprep.mubr.f32.mxu0 %v462
        %1148 = vmatmul.mubr.f32.gmra.mxu0 %v461
        %v1149 = vpop.f32.mrf.mxu0
        %v1150 = vadd.f32 %v801, %v1149
        %v1151 = vpop.f32.mrf.mxu0
        %v1152 = vadd.f32 %v805, %v1151
        %1153 = vmatprep.mubr.f32.mxu0 %v467
        %1154 = vmatmul.mubr.f32.gmra.mxu0 %v466
        %v1155 = vpop.f32.mrf.mxu0
        %v1156 = vadd.f32 %v801, %v1155
        %v1157 = vpop.f32.mrf.mxu0
        %v1158 = vadd.f32 %v805, %v1157
        %1159 = vmatprep.mubr.f32.mxu0 %v472
        %1160 = vmatmul.mubr.f32.gmra.mxu0 %v471
        %v1161 = vpop.f32.mrf.mxu0
        %v1162 = vadd.f32 %v801, %v1161
        %v1163 = vpop.f32.mrf.mxu0
        %v1164 = vadd.f32 %v805, %v1163
        %1165 = vmatprep.mubr.f32.mxu0 %v477
        %1166 = vmatmul.mubr.f32.gmra.mxu0 %v476
        %v1167 = vpop.f32.mrf.mxu0
        %v1168 = vadd.f32 %v801, %v1167
        %v1169 = vpop.f32.mrf.mxu0
        %v1170 = vadd.f32 %v805, %v1169
        %1171 = vmatprep.mubr.f32.mxu0 %v482
        %1172 = vmatmul.mubr.f32.gmra.mxu0 %v481
        %v1173 = vpop.f32.mrf.mxu0
        %v1174 = vadd.f32 %v801, %v1173
        %v1175 = vpop.f32.mrf.mxu0
        %v1176 = vadd.f32 %v805, %v1175
        %1177 = vmatprep.mubr.f32.mxu0 %v487
        %1178 = vmatmul.mubr.f32.gmra.mxu0 %v486
        %v1179 = vpop.f32.mrf.mxu0
        %v1180 = vadd.f32 %v801, %v1179
        %v1181 = vpop.f32.mrf.mxu0
        %v1182 = vadd.f32 %v805, %v1181
        %1183 = vmatprep.mubr.f32.mxu0 %v492
        %1184 = vmatmul.mubr.f32.gmra.mxu0 %v491
        %v1185 = vpop.f32.mrf.mxu0
        %v1186 = vadd.f32 %v801, %v1185
        %v1187 = vpop.f32.mrf.mxu0
        %v1188 = vadd.f32 %v805, %v1187
        %1189 = vmatprep.mubr.f32.mxu0 %v497
        %1190 = vmatmul.mubr.f32.gmra.mxu0 %v496
        %v1191 = vpop.f32.mrf.mxu0
        %v1192 = vadd.f32 %v801, %v1191
        %v1193 = vpop.f32.mrf.mxu0
        %v1194 = vadd.f32 %v805, %v1193
        %1195 = vmatprep.mubr.f32.mxu0 %v502
        %1196 = vmatmul.mubr.f32.gmra.mxu0 %v501
        %v1197 = vpop.f32.mrf.mxu0
        %v1198 = vadd.f32 %v801, %v1197
        %v1199 = vpop.f32.mrf.mxu0
        %v1200 = vadd.f32 %v805, %v1199
        %1201 = vmatprep.mubr.f32.mxu0 %v507
        %1202 = vmatmul.mubr.f32.gmra.mxu0 %v506
        %v1203 = vpop.f32.mrf.mxu0
        %v1204 = vadd.f32 %v801, %v1203
        %v1205 = vpop.f32.mrf.mxu0
        %v1206 = vadd.f32 %v805, %v1205
        %1207 = vmatprep.mubr.f32.mxu0 %v512
        %1208 = vmatmul.mubr.f32.gmra.mxu0 %v511
        %v1209 = vpop.f32.mrf.mxu0
        %v1210 = vadd.f32 %v801, %v1209
        %v1211 = vpop.f32.mrf.mxu0
        %v1212 = vadd.f32 %v805, %v1211
        %1213 = vmatprep.mubr.f32.mxu0 %v517
        %1214 = vmatmul.mubr.f32.gmra.mxu0 %v516
        %v1215 = vpop.f32.mrf.mxu0
        %v1216 = vadd.f32 %v801, %v1215
        %v1217 = vpop.f32.mrf.mxu0
        %v1218 = vadd.f32 %v805, %v1217
        %1219 = vmatprep.mubr.f32.mxu0 %v522
        %1220 = vmatmul.mubr.f32.gmra.mxu0 %v521
        %v1221 = vpop.f32.mrf.mxu0
        %v1222 = vadd.f32 %v801, %v1221
        %v1223 = vpop.f32.mrf.mxu0
        %v1224 = vadd.f32 %v805, %v1223
        %1225 = vmatprep.mubr.f32.mxu0 %v527
        %1226 = vmatmul.mubr.f32.gmra.mxu0 %v526
        %v1227 = vpop.f32.mrf.mxu0
        %v1228 = vadd.f32 %v801, %v1227
        %v1229 = vpop.f32.mrf.mxu0
        %v1230 = vadd.f32 %v805, %v1229
        %1231 = vmatprep.mubr.f32.mxu0 %v532
        %1232 = vmatmul.mubr.f32.gmra.mxu0 %v531
        %v1233 = vpop.f32.mrf.mxu0
        %v1234 = vadd.f32 %v801, %v1233
        %v1235 = vpop.f32.mrf.mxu0
        %v1236 = vadd.f32 %v805, %v1235
        %1237 = vmatprep.mubr.f32.mxu0 %v537
        %1238 = vmatmul.mubr.f32.gmra.mxu0 %v536
        %v1239 = vpop.f32.mrf.mxu0
        %v1240 = vadd.f32 %v801, %v1239
        %v1241 = vpop.f32.mrf.mxu0
        %v1242 = vadd.f32 %v805, %v1241
        %1243 = vmatprep.mubr.f32.mxu0 %v542
        %1244 = vmatmul.mubr.f32.gmra.mxu0 %v541
        %v1245 = vpop.f32.mrf.mxu0
        %v1246 = vadd.f32 %v801, %v1245
        %v1247 = vpop.f32.mrf.mxu0
        %v1248 = vadd.f32 %v805, %v1247
        %1249 = vmatprep.mubr.f32.mxu0 %v547
        %1250 = vmatmul.mubr.f32.gmra.mxu0 %v546
        %v1251 = vpop.f32.mrf.mxu0
        %v1252 = vadd.f32 %v801, %v1251
        %v1253 = vpop.f32.mrf.mxu0
        %v1254 = vadd.f32 %v805, %v1253
        %1255 = vmatprep.mubr.f32.mxu0 %v552
        %1256 = vmatmul.mubr.f32.gmra.mxu0 %v551
        %v1257 = vpop.f32.mrf.mxu0
        %v1258 = vadd.f32 %v801, %v1257
        %v1259 = vpop.f32.mrf.mxu0
        %v1260 = vadd.f32 %v805, %v1259
        %1261 = vdwg.mxu0
        %1262 = vmatprep.subr.mxu0 %v698
        %1263 = vmatpush1.msra.mxu0 %v697
        %1264 = vmatprep.subr.mxu0 %v695
        %1265 = vmatpush1.msra.mxu0 %v694
        %1266 = vmatprep.subr.mxu0 %v692
        %1267 = vmatpush1.msra.mxu0 %v691
        %1268 = vmatprep.subr.mxu0 %v689
        %1269 = vmatpush1.msra.mxu0 %v688
        %1270 = vmatprep.subr.mxu0 %v686
        %1271 = vmatpush1.msra.mxu0 %v685
        %1272 = vmatprep.subr.mxu0 %v683
        %1273 = vmatpush1.msra.mxu0 %v682
        %1274 = vmatprep.subr.mxu0 %v680
        %1275 = vmatpush1.msra.mxu0 %v679
        %1276 = vmatprep.subr.mxu0 %v677
        %1277 = vmatpush1.msra.mxu0 %v676
        %1278 = vmatprep.subr.mxu0 %v674
        %1279 = vmatpush1.msra.mxu0 %v673
        %1280 = vmatprep.subr.mxu0 %v671
        %1281 = vmatpush1.msra.mxu0 %v670
        %1282 = vmatprep.subr.mxu0 %v668
        %1283 = vmatpush1.msra.mxu0 %v667
        %1284 = vmatprep.subr.mxu0 %v665
        %1285 = vmatpush1.msra.mxu0 %v664
        %1286 = vmatprep.subr.mxu0 %v662
        %1287 = vmatpush1.msra.mxu0 %v661
        %1288 = vmatprep.subr.mxu0 %v659
        %1289 = vmatpush1.msra.mxu0 %v658
        %1290 = vmatprep.subr.mxu0 %v656
        %1291 = vmatpush1.msra.mxu0 %v655
        %1292 = vmatprep.subr.mxu0 %v653
        %1293 = vmatpush1.msra.mxu0 %v652
        %1294 = vmatprep.subr.mxu0 %v746
        %1295 = vmatpush2.msra.mxu0 %v745
        %1296 = vmatprep.subr.mxu0 %v743
        %1297 = vmatpush2.msra.mxu0 %v742
        %1298 = vmatprep.subr.mxu0 %v740
        %1299 = vmatpush2.msra.mxu0 %v739
        %1300 = vmatprep.subr.mxu0 %v737
        %1301 = vmatpush2.msra.mxu0 %v736
        %1302 = vmatprep.subr.mxu0 %v734
        %1303 = vmatpush2.msra.mxu0 %v733
        %1304 = vmatprep.subr.mxu0 %v731
        %1305 = vmatpush2.msra.mxu0 %v730
        %1306 = vmatprep.subr.mxu0 %v728
        %1307 = vmatpush2.msra.mxu0 %v727
        %1308 = vmatprep.subr.mxu0 %v725
        %1309 = vmatpush2.msra.mxu0 %v724
        %1310 = vmatprep.subr.mxu0 %v722
        %1311 = vmatpush2.msra.mxu0 %v721
        %1312 = vmatprep.subr.mxu0 %v719
        %1313 = vmatpush2.msra.mxu0 %v718
        %1314 = vmatprep.subr.mxu0 %v716
        %1315 = vmatpush2.msra.mxu0 %v715
        %1316 = vmatprep.subr.mxu0 %v713
        %1317 = vmatpush2.msra.mxu0 %v712
        %1318 = vmatprep.subr.mxu0 %v710
        %1319 = vmatpush2.msra.mxu0 %v709
        %1320 = vmatprep.subr.mxu0 %v707
        %1321 = vmatpush2.msra.mxu0 %v706
        %1322 = vmatprep.subr.mxu0 %v704
        %1323 = vmatpush2.msra.mxu0 %v703
        %1324 = vmatprep.subr.mxu0 %v701
        %1325 = vmatpush2.msra.mxu0 %v700
        %1326 = vmatprep.mubr.f32.mxu0 %v239
        %1327 = vmatmul.mubr.f32.gmra.mxu0 %v238
        %v1328 = vpop.f32.mrf.mxu0
        %v1329 = vadd.f32 %v880, %v1328
        %v1330 = vpop.f32.mrf.mxu0
        %v1331 = vadd.f32 %v882, %v1330
        %1332 = vmatprep.mubr.f32.mxu0 %v244
        %1333 = vmatmul.mubr.f32.gmra.mxu0 %v243
        %v1334 = vpop.f32.mrf.mxu0
        %v1335 = vadd.f32 %v886, %v1334
        %v1336 = vpop.f32.mrf.mxu0
        %v1337 = vadd.f32 %v888, %v1336
        %1338 = vmatprep.mubr.f32.mxu0 %v249
        %1339 = vmatmul.mubr.f32.gmra.mxu0 %v248
        %v1340 = vpop.f32.mrf.mxu0
        %v1341 = vadd.f32 %v892, %v1340
        %v1342 = vpop.f32.mrf.mxu0
        %v1343 = vadd.f32 %v894, %v1342
        %1344 = vmatprep.mubr.f32.mxu0 %v254
        %1345 = vmatmul.mubr.f32.gmra.mxu0 %v253
        %v1346 = vpop.f32.mrf.mxu0
        %v1347 = vadd.f32 %v898, %v1346
        %v1348 = vpop.f32.mrf.mxu0
        %v1349 = vadd.f32 %v900, %v1348
        %1350 = vmatprep.mubr.f32.mxu0 %v259
        %1351 = vmatmul.mubr.f32.gmra.mxu0 %v258
        %v1352 = vpop.f32.mrf.mxu0
        %v1353 = vadd.f32 %v904, %v1352
        %v1354 = vpop.f32.mrf.mxu0
        %v1355 = vadd.f32 %v906, %v1354
        %1356 = vmatprep.mubr.f32.mxu0 %v264
        %1357 = vmatmul.mubr.f32.gmra.mxu0 %v263
        %v1358 = vpop.f32.mrf.mxu0
        %v1359 = vadd.f32 %v910, %v1358
        %v1360 = vpop.f32.mrf.mxu0
        %v1361 = vadd.f32 %v912, %v1360
        %1362 = vmatprep.mubr.f32.mxu0 %v269
        %1363 = vmatmul.mubr.f32.gmra.mxu0 %v268
        %v1364 = vpop.f32.mrf.mxu0
        %v1365 = vadd.f32 %v916, %v1364
        %v1366 = vpop.f32.mrf.mxu0
        %v1367 = vadd.f32 %v918, %v1366
        %1368 = vmatprep.mubr.f32.mxu0 %v274
        %1369 = vmatmul.mubr.f32.gmra.mxu0 %v273
        %v1370 = vpop.f32.mrf.mxu0
        %v1371 = vadd.f32 %v922, %v1370
        %v1372 = vpop.f32.mrf.mxu0
        %v1373 = vadd.f32 %v924, %v1372
        %1374 = vmatprep.mubr.f32.mxu0 %v279
        %1375 = vmatmul.mubr.f32.gmra.mxu0 %v278
        %v1376 = vpop.f32.mrf.mxu0
        %v1377 = vadd.f32 %v928, %v1376
        %v1378 = vpop.f32.mrf.mxu0
        %v1379 = vadd.f32 %v930, %v1378
        %1380 = vmatprep.mubr.f32.mxu0 %v284
        %1381 = vmatmul.mubr.f32.gmra.mxu0 %v283
        %v1382 = vpop.f32.mrf.mxu0
        %v1383 = vadd.f32 %v934, %v1382
        %v1384 = vpop.f32.mrf.mxu0
        %v1385 = vadd.f32 %v936, %v1384
        %1386 = vmatprep.mubr.f32.mxu0 %v289
        %1387 = vmatmul.mubr.f32.gmra.mxu0 %v288
        %v1388 = vpop.f32.mrf.mxu0
        %v1389 = vadd.f32 %v940, %v1388
        %v1390 = vpop.f32.mrf.mxu0
        %v1391 = vadd.f32 %v942, %v1390
        %1392 = vmatprep.mubr.f32.mxu0 %v294
        %1393 = vmatmul.mubr.f32.gmra.mxu0 %v293
        %v1394 = vpop.f32.mrf.mxu0
        %v1395 = vadd.f32 %v946, %v1394
        %v1396 = vpop.f32.mrf.mxu0
        %v1397 = vadd.f32 %v948, %v1396
        %1398 = vmatprep.mubr.f32.mxu0 %v299
        %1399 = vmatmul.mubr.f32.gmra.mxu0 %v298
        %v1400 = vpop.f32.mrf.mxu0
        %v1401 = vadd.f32 %v952, %v1400
        %v1402 = vpop.f32.mrf.mxu0
        %v1403 = vadd.f32 %v954, %v1402
        %1404 = vmatprep.mubr.f32.mxu0 %v304
        %1405 = vmatmul.mubr.f32.gmra.mxu0 %v303
        %v1406 = vpop.f32.mrf.mxu0
        %v1407 = vadd.f32 %v958, %v1406
        %v1408 = vpop.f32.mrf.mxu0
        %v1409 = vadd.f32 %v960, %v1408
        %1410 = vmatprep.mubr.f32.mxu0 %v309
        %1411 = vmatmul.mubr.f32.gmra.mxu0 %v308
        %v1412 = vpop.f32.mrf.mxu0
        %v1413 = vadd.f32 %v964, %v1412
        %v1414 = vpop.f32.mrf.mxu0
        %v1415 = vadd.f32 %v966, %v1414
        %1416 = vmatprep.mubr.f32.mxu0 %v314
        %1417 = vmatmul.mubr.f32.gmra.mxu0 %v313
        %v1418 = vpop.f32.mrf.mxu0
        %v1419 = vadd.f32 %v970, %v1418
        %v1420 = vpop.f32.mrf.mxu0
        %v1421 = vadd.f32 %v972, %v1420
        %1422 = vmatprep.mubr.f32.mxu0 %v319
        %1423 = vmatmul.mubr.f32.gmra.mxu0 %v318
        %v1424 = vpop.f32.mrf.mxu0
        %v1425 = vadd.f32 %v976, %v1424
        %v1426 = vpop.f32.mrf.mxu0
        %v1427 = vadd.f32 %v978, %v1426
        %1428 = vmatprep.mubr.f32.mxu0 %v324
        %1429 = vmatmul.mubr.f32.gmra.mxu0 %v323
        %v1430 = vpop.f32.mrf.mxu0
        %v1431 = vadd.f32 %v982, %v1430
        %v1432 = vpop.f32.mrf.mxu0
        %v1433 = vadd.f32 %v984, %v1432
        %1434 = vmatprep.mubr.f32.mxu0 %v329
        %1435 = vmatmul.mubr.f32.gmra.mxu0 %v328
        %v1436 = vpop.f32.mrf.mxu0
        %v1437 = vadd.f32 %v988, %v1436
        %v1438 = vpop.f32.mrf.mxu0
        %v1439 = vadd.f32 %v990, %v1438
        %1440 = vmatprep.mubr.f32.mxu0 %v334
        %1441 = vmatmul.mubr.f32.gmra.mxu0 %v333
        %v1442 = vpop.f32.mrf.mxu0
        %v1443 = vadd.f32 %v994, %v1442
        %v1444 = vpop.f32.mrf.mxu0
        %v1445 = vadd.f32 %v996, %v1444
        %1446 = vmatprep.mubr.f32.mxu0 %v339
        %1447 = vmatmul.mubr.f32.gmra.mxu0 %v338
        %v1448 = vpop.f32.mrf.mxu0
        %v1449 = vadd.f32 %v1000, %v1448
        %v1450 = vpop.f32.mrf.mxu0
        %v1451 = vadd.f32 %v1002, %v1450
        %1452 = vmatprep.mubr.f32.mxu0 %v344
        %1453 = vmatmul.mubr.f32.gmra.mxu0 %v343
        %v1454 = vpop.f32.mrf.mxu0
        %v1455 = vadd.f32 %v1006, %v1454
        %v1456 = vpop.f32.mrf.mxu0
        %v1457 = vadd.f32 %v1008, %v1456
        %1458 = vmatprep.mubr.f32.mxu0 %v349
        %1459 = vmatmul.mubr.f32.gmra.mxu0 %v348
        %v1460 = vpop.f32.mrf.mxu0
        %v1461 = vadd.f32 %v1012, %v1460
        %v1462 = vpop.f32.mrf.mxu0
        %v1463 = vadd.f32 %v1014, %v1462
        %1464 = vmatprep.mubr.f32.mxu0 %v354
        %1465 = vmatmul.mubr.f32.gmra.mxu0 %v353
        %v1466 = vpop.f32.mrf.mxu0
        %v1467 = vadd.f32 %v1018, %v1466
        %v1468 = vpop.f32.mrf.mxu0
        %v1469 = vadd.f32 %v1020, %v1468
        %1470 = vmatprep.mubr.f32.mxu0 %v359
        %1471 = vmatmul.mubr.f32.gmra.mxu0 %v358
        %v1472 = vpop.f32.mrf.mxu0
        %v1473 = vadd.f32 %v1024, %v1472
        %v1474 = vpop.f32.mrf.mxu0
        %v1475 = vadd.f32 %v1026, %v1474
        %1476 = vmatprep.mubr.f32.mxu0 %v364
        %1477 = vmatmul.mubr.f32.gmra.mxu0 %v363
        %v1478 = vpop.f32.mrf.mxu0
        %v1479 = vadd.f32 %v1030, %v1478
        %v1480 = vpop.f32.mrf.mxu0
        %v1481 = vadd.f32 %v1032, %v1480
        %1482 = vmatprep.mubr.f32.mxu0 %v369
        %1483 = vmatmul.mubr.f32.gmra.mxu0 %v368
        %v1484 = vpop.f32.mrf.mxu0
        %v1485 = vadd.f32 %v1036, %v1484
        %v1486 = vpop.f32.mrf.mxu0
        %v1487 = vadd.f32 %v1038, %v1486
        %1488 = vmatprep.mubr.f32.mxu0 %v374
        %1489 = vmatmul.mubr.f32.gmra.mxu0 %v373
        %v1490 = vpop.f32.mrf.mxu0
        %v1491 = vadd.f32 %v1042, %v1490
        %v1492 = vpop.f32.mrf.mxu0
        %v1493 = vadd.f32 %v1044, %v1492
        %1494 = vmatprep.mubr.f32.mxu0 %v379
        %1495 = vmatmul.mubr.f32.gmra.mxu0 %v378
        %v1496 = vpop.f32.mrf.mxu0
        %v1497 = vadd.f32 %v1048, %v1496
        %v1498 = vpop.f32.mrf.mxu0
        %v1499 = vadd.f32 %v1050, %v1498
        %1500 = vmatprep.mubr.f32.mxu0 %v384
        %1501 = vmatmul.mubr.f32.gmra.mxu0 %v383
        %v1502 = vpop.f32.mrf.mxu0
        %v1503 = vadd.f32 %v1054, %v1502
        %v1504 = vpop.f32.mrf.mxu0
        %v1505 = vadd.f32 %v1056, %v1504
        %1506 = vmatprep.mubr.f32.mxu0 %v389
        %1507 = vmatmul.mubr.f32.gmra.mxu0 %v388
        %v1508 = vpop.f32.mrf.mxu0
        %v1509 = vadd.f32 %v1060, %v1508
        %v1510 = vpop.f32.mrf.mxu0
        %v1511 = vadd.f32 %v1062, %v1510
        %1512 = vmatprep.mubr.f32.mxu0 %v394
        %1513 = vmatmul.mubr.f32.gmra.mxu0 %v393
        %v1514 = vpop.f32.mrf.mxu0
        %v1515 = vadd.f32 %v1066, %v1514
        %v1516 = vpop.f32.mrf.mxu0
        %v1517 = vadd.f32 %v1068, %v1516
        %1518 = vmatprep.mubr.f32.mxu0 %v399
        %1519 = vmatmul.mubr.f32.gmra.mxu0 %v398
        %v1520 = vpop.f32.mrf.mxu0
        %v1521 = vadd.f32 %v1072, %v1520
        %v1522 = vpop.f32.mrf.mxu0
        %v1523 = vadd.f32 %v1074, %v1522
        %1524 = vmatprep.mubr.f32.mxu0 %v404
        %1525 = vmatmul.mubr.f32.gmra.mxu0 %v403
        %v1526 = vpop.f32.mrf.mxu0
        %v1527 = vadd.f32 %v1078, %v1526
        %v1528 = vpop.f32.mrf.mxu0
        %v1529 = vadd.f32 %v1080, %v1528
        %1530 = vmatprep.mubr.f32.mxu0 %v409
        %1531 = vmatmul.mubr.f32.gmra.mxu0 %v408
        %v1532 = vpop.f32.mrf.mxu0
        %v1533 = vadd.f32 %v1084, %v1532
        %v1534 = vpop.f32.mrf.mxu0
        %v1535 = vadd.f32 %v1086, %v1534
        %1536 = vmatprep.mubr.f32.mxu0 %v414
        %1537 = vmatmul.mubr.f32.gmra.mxu0 %v413
        %v1538 = vpop.f32.mrf.mxu0
        %v1539 = vadd.f32 %v1090, %v1538
        %v1540 = vpop.f32.mrf.mxu0
        %v1541 = vadd.f32 %v1092, %v1540
        %1542 = vmatprep.mubr.f32.mxu0 %v419
        %1543 = vmatmul.mubr.f32.gmra.mxu0 %v418
        %v1544 = vpop.f32.mrf.mxu0
        %v1545 = vadd.f32 %v1096, %v1544
        %v1546 = vpop.f32.mrf.mxu0
        %v1547 = vadd.f32 %v1098, %v1546
        %1548 = vmatprep.mubr.f32.mxu0 %v424
        %1549 = vmatmul.mubr.f32.gmra.mxu0 %v423
        %v1550 = vpop.f32.mrf.mxu0
        %v1551 = vadd.f32 %v1102, %v1550
        %v1552 = vpop.f32.mrf.mxu0
        %v1553 = vadd.f32 %v1104, %v1552
        %1554 = vmatprep.mubr.f32.mxu0 %v429
        %1555 = vmatmul.mubr.f32.gmra.mxu0 %v428
        %v1556 = vpop.f32.mrf.mxu0
        %v1557 = vadd.f32 %v1108, %v1556
        %v1558 = vpop.f32.mrf.mxu0
        %v1559 = vadd.f32 %v1110, %v1558
        %1560 = vmatprep.mubr.f32.mxu0 %v434
        %1561 = vmatmul.mubr.f32.gmra.mxu0 %v433
        %v1562 = vpop.f32.mrf.mxu0
        %v1563 = vadd.f32 %v1114, %v1562
        %v1564 = vpop.f32.mrf.mxu0
        %v1565 = vadd.f32 %v1116, %v1564
        %1566 = vmatprep.mubr.f32.mxu0 %v439
        %1567 = vmatmul.mubr.f32.gmra.mxu0 %v438
        %v1568 = vpop.f32.mrf.mxu0
        %v1569 = vadd.f32 %v1120, %v1568
        %v1570 = vpop.f32.mrf.mxu0
        %v1571 = vadd.f32 %v1122, %v1570
        %1572 = vmatprep.mubr.f32.mxu0 %v444
        %1573 = vmatmul.mubr.f32.gmra.mxu0 %v443
        %v1574 = vpop.f32.mrf.mxu0
        %v1575 = vadd.f32 %v1126, %v1574
        %v1576 = vpop.f32.mrf.mxu0
        %v1577 = vadd.f32 %v1128, %v1576
        %1578 = vmatprep.mubr.f32.mxu0 %v449
        %1579 = vmatmul.mubr.f32.gmra.mxu0 %v448
        %v1580 = vpop.f32.mrf.mxu0
        %v1581 = vadd.f32 %v1132, %v1580
        %v1582 = vpop.f32.mrf.mxu0
        %v1583 = vadd.f32 %v1134, %v1582
        %1584 = vmatprep.mubr.f32.mxu0 %v454
        %1585 = vmatmul.mubr.f32.gmra.mxu0 %v453
        %v1586 = vpop.f32.mrf.mxu0
        %v1587 = vadd.f32 %v1138, %v1586
        %v1588 = vpop.f32.mrf.mxu0
        %v1589 = vadd.f32 %v1140, %v1588
        %1590 = vmatprep.mubr.f32.mxu0 %v459
        %1591 = vmatmul.mubr.f32.gmra.mxu0 %v458
        %v1592 = vpop.f32.mrf.mxu0
        %v1593 = vadd.f32 %v1144, %v1592
        %v1594 = vpop.f32.mrf.mxu0
        %v1595 = vadd.f32 %v1146, %v1594
        %1596 = vmatprep.mubr.f32.mxu0 %v464
        %1597 = vmatmul.mubr.f32.gmra.mxu0 %v463
        %v1598 = vpop.f32.mrf.mxu0
        %v1599 = vadd.f32 %v1150, %v1598
        %v1600 = vpop.f32.mrf.mxu0
        %v1601 = vadd.f32 %v1152, %v1600
        %1602 = vmatprep.mubr.f32.mxu0 %v469
        %1603 = vmatmul.mubr.f32.gmra.mxu0 %v468
        %v1604 = vpop.f32.mrf.mxu0
        %v1605 = vadd.f32 %v1156, %v1604
        %v1606 = vpop.f32.mrf.mxu0
        %v1607 = vadd.f32 %v1158, %v1606
        %1608 = vmatprep.mubr.f32.mxu0 %v474
        %1609 = vmatmul.mubr.f32.gmra.mxu0 %v473
        %v1610 = vpop.f32.mrf.mxu0
        %v1611 = vadd.f32 %v1162, %v1610
        %v1612 = vpop.f32.mrf.mxu0
        %v1613 = vadd.f32 %v1164, %v1612
        %1614 = vmatprep.mubr.f32.mxu0 %v479
        %1615 = vmatmul.mubr.f32.gmra.mxu0 %v478
        %v1616 = vpop.f32.mrf.mxu0
        %v1617 = vadd.f32 %v1168, %v1616
        %v1618 = vpop.f32.mrf.mxu0
        %v1619 = vadd.f32 %v1170, %v1618
        %1620 = vmatprep.mubr.f32.mxu0 %v484
        %1621 = vmatmul.mubr.f32.gmra.mxu0 %v483
        %v1622 = vpop.f32.mrf.mxu0
        %v1623 = vadd.f32 %v1174, %v1622
        %v1624 = vpop.f32.mrf.mxu0
        %v1625 = vadd.f32 %v1176, %v1624
        %1626 = vmatprep.mubr.f32.mxu0 %v489
        %1627 = vmatmul.mubr.f32.gmra.mxu0 %v488
        %v1628 = vpop.f32.mrf.mxu0
        %v1629 = vadd.f32 %v1180, %v1628
        %v1630 = vpop.f32.mrf.mxu0
        %v1631 = vadd.f32 %v1182, %v1630
        %1632 = vmatprep.mubr.f32.mxu0 %v494
        %1633 = vmatmul.mubr.f32.gmra.mxu0 %v493
        %v1634 = vpop.f32.mrf.mxu0
        %v1635 = vadd.f32 %v1186, %v1634
        %v1636 = vpop.f32.mrf.mxu0
        %v1637 = vadd.f32 %v1188, %v1636
        %1638 = vmatprep.mubr.f32.mxu0 %v499
        %1639 = vmatmul.mubr.f32.gmra.mxu0 %v498
        %v1640 = vpop.f32.mrf.mxu0
        %v1641 = vadd.f32 %v1192, %v1640
        %v1642 = vpop.f32.mrf.mxu0
        %v1643 = vadd.f32 %v1194, %v1642
        %1644 = vmatprep.mubr.f32.mxu0 %v504
        %1645 = vmatmul.mubr.f32.gmra.mxu0 %v503
        %v1646 = vpop.f32.mrf.mxu0
        %v1647 = vadd.f32 %v1198, %v1646
        %v1648 = vpop.f32.mrf.mxu0
        %v1649 = vadd.f32 %v1200, %v1648
        %1650 = vmatprep.mubr.f32.mxu0 %v509
        %1651 = vmatmul.mubr.f32.gmra.mxu0 %v508
        %v1652 = vpop.f32.mrf.mxu0
        %v1653 = vadd.f32 %v1204, %v1652
        %v1654 = vpop.f32.mrf.mxu0
        %v1655 = vadd.f32 %v1206, %v1654
        %1656 = vmatprep.mubr.f32.mxu0 %v514
        %1657 = vmatmul.mubr.f32.gmra.mxu0 %v513
        %v1658 = vpop.f32.mrf.mxu0
        %v1659 = vadd.f32 %v1210, %v1658
        %v1660 = vpop.f32.mrf.mxu0
        %v1661 = vadd.f32 %v1212, %v1660
        %1662 = vmatprep.mubr.f32.mxu0 %v519
        %1663 = vmatmul.mubr.f32.gmra.mxu0 %v518
        %v1664 = vpop.f32.mrf.mxu0
        %v1665 = vadd.f32 %v1216, %v1664
        %v1666 = vpop.f32.mrf.mxu0
        %v1667 = vadd.f32 %v1218, %v1666
        %1668 = vmatprep.mubr.f32.mxu0 %v524
        %1669 = vmatmul.mubr.f32.gmra.mxu0 %v523
        %v1670 = vpop.f32.mrf.mxu0
        %v1671 = vadd.f32 %v1222, %v1670
        %v1672 = vpop.f32.mrf.mxu0
        %v1673 = vadd.f32 %v1224, %v1672
        %1674 = vmatprep.mubr.f32.mxu0 %v529
        %1675 = vmatmul.mubr.f32.gmra.mxu0 %v528
        %v1676 = vpop.f32.mrf.mxu0
        %v1677 = vadd.f32 %v1228, %v1676
        %v1678 = vpop.f32.mrf.mxu0
        %v1679 = vadd.f32 %v1230, %v1678
        %1680 = vmatprep.mubr.f32.mxu0 %v534
        %1681 = vmatmul.mubr.f32.gmra.mxu0 %v533
        %v1682 = vpop.f32.mrf.mxu0
        %v1683 = vadd.f32 %v1234, %v1682
        %v1684 = vpop.f32.mrf.mxu0
        %v1685 = vadd.f32 %v1236, %v1684
        %1686 = vmatprep.mubr.f32.mxu0 %v539
        %1687 = vmatmul.mubr.f32.gmra.mxu0 %v538
        %v1688 = vpop.f32.mrf.mxu0
        %v1689 = vadd.f32 %v1240, %v1688
        %v1690 = vpop.f32.mrf.mxu0
        %v1691 = vadd.f32 %v1242, %v1690
        %1692 = vmatprep.mubr.f32.mxu0 %v544
        %1693 = vmatmul.mubr.f32.gmra.mxu0 %v543
        %v1694 = vpop.f32.mrf.mxu0
        %v1695 = vadd.f32 %v1246, %v1694
        %v1696 = vpop.f32.mrf.mxu0
        %v1697 = vadd.f32 %v1248, %v1696
        %1698 = vmatprep.mubr.f32.mxu0 %v549
        %1699 = vmatmul.mubr.f32.gmra.mxu0 %v548
        %v1700 = vpop.f32.mrf.mxu0
        %v1701 = vadd.f32 %v1252, %v1700
        %v1702 = vpop.f32.mrf.mxu0
        %v1703 = vadd.f32 %v1254, %v1702
        %1704 = vmatprep.mubr.f32.mxu0 %v554
        %1705 = vmatmul.mubr.f32.gmra.mxu0 %v553
        %v1706 = vpop.f32.mrf.mxu0
        %v1707 = vadd.f32 %v1258, %v1706
        %v1708 = vpop.f32.mrf.mxu0
        %v1709 = vadd.f32 %v1260, %v1708
        %1710 = vdwg.mxu0
        %1711 = vmatprep.subr.mxu0 %v794
        %1712 = vmatpush1.msra.mxu0 %v793
        %1713 = vmatprep.subr.mxu0 %v791
        %1714 = vmatpush1.msra.mxu0 %v790
        %1715 = vmatprep.subr.mxu0 %v788
        %1716 = vmatpush1.msra.mxu0 %v787
        %1717 = vmatprep.subr.mxu0 %v785
        %1718 = vmatpush1.msra.mxu0 %v784
        %1719 = vmatprep.subr.mxu0 %v782
        %1720 = vmatpush1.msra.mxu0 %v781
        %1721 = vmatprep.subr.mxu0 %v779
        %1722 = vmatpush1.msra.mxu0 %v778
        %1723 = vmatprep.subr.mxu0 %v776
        %1724 = vmatpush1.msra.mxu0 %v775
        %1725 = vmatprep.subr.mxu0 %v773
        %1726 = vmatpush1.msra.mxu0 %v772
        %1727 = vmatprep.subr.mxu0 %v770
        %1728 = vmatpush1.msra.mxu0 %v769
        %1729 = vmatprep.subr.mxu0 %v767
        %1730 = vmatpush1.msra.mxu0 %v766
        %1731 = vmatprep.subr.mxu0 %v764
        %1732 = vmatpush1.msra.mxu0 %v763
        %1733 = vmatprep.subr.mxu0 %v761
        %1734 = vmatpush1.msra.mxu0 %v760
        %1735 = vmatprep.subr.mxu0 %v758
        %1736 = vmatpush1.msra.mxu0 %v757
        %1737 = vmatprep.subr.mxu0 %v755
        %1738 = vmatpush1.msra.mxu0 %v754
        %1739 = vmatprep.subr.mxu0 %v752
        %1740 = vmatpush1.msra.mxu0 %v751
        %1741 = vmatprep.subr.mxu0 %v749
        %1742 = vmatpush1.msra.mxu0 %v748
        %1743 = vmatprep.subr.mxu0 0.0
        %1744 = vmatpush2.msra.mxu0 0.0
        %1745 = vmatprep.subr.mxu0 0.0
        %1746 = vmatpush2.msra.mxu0 0.0
        %1747 = vmatprep.subr.mxu0 0.0
        %1748 = vmatpush2.msra.mxu0 0.0
        %1749 = vmatprep.subr.mxu0 0.0
        %1750 = vmatpush2.msra.mxu0 0.0
        %1751 = vmatprep.subr.mxu0 0.0
        %1752 = vmatpush2.msra.mxu0 0.0
        %1753 = vmatprep.subr.mxu0 0.0
        %1754 = vmatpush2.msra.mxu0 0.0
        %1755 = vmatprep.subr.mxu0 0.0
        %1756 = vmatpush2.msra.mxu0 0.0
        %1757 = vmatprep.subr.mxu0 0.0
        %1758 = vmatpush2.msra.mxu0 0.0
        %1759 = vmatprep.subr.mxu0 0.0
        %1760 = vmatpush2.msra.mxu0 0.0
        %1761 = vmatprep.subr.mxu0 0.0
        %1762 = vmatpush2.msra.mxu0 0.0
        %1763 = vmatprep.subr.mxu0 0.0
        %1764 = vmatpush2.msra.mxu0 0.0
        %1765 = vmatprep.subr.mxu0 0.0
        %1766 = vmatpush2.msra.mxu0 0.0
        %1767 = vmatprep.subr.mxu0 0.0
        %1768 = vmatpush2.msra.mxu0 0.0
        %1769 = vmatprep.subr.mxu0 0.0
        %1770 = vmatpush2.msra.mxu0 0.0
        %1771 = vmatprep.subr.mxu0 0.0
        %1772 = vmatpush2.msra.mxu0 0.0
        %1773 = vmatprep.subr.mxu0 0.0
        %1774 = vmatpush2.msra.mxu0 0.0
        %1775 = vmatprep.mubr.f32.mxu0 0.0
        %1776 = vmatmul.mubr.f32.gmra.mxu0 %v240
        %v1777 = vpop.f32.mrf.mxu0
        %v1778 = vadd.f32 %v1329, %v1777
        %v1779 = vpop.f32.mrf.mxu0
        %v1780 = vadd.f32 %v1331, %v1779
        %1781 = vmatprep.mubr.f32.mxu0 0.0
        %1782 = vmatmul.mubr.f32.gmra.mxu0 %v245
        %v1783 = vpop.f32.mrf.mxu0
        %v1784 = vadd.f32 %v1335, %v1783
        %v1785 = vpop.f32.mrf.mxu0
        %v1786 = vadd.f32 %v1337, %v1785
        %1787 = vmatprep.mubr.f32.mxu0 0.0
        %1788 = vmatmul.mubr.f32.gmra.mxu0 %v250
        %v1789 = vpop.f32.mrf.mxu0
        %v1790 = vadd.f32 %v1341, %v1789
        %v1791 = vpop.f32.mrf.mxu0
        %v1792 = vadd.f32 %v1343, %v1791
        %1793 = vmatprep.mubr.f32.mxu0 0.0
        %1794 = vmatmul.mubr.f32.gmra.mxu0 %v255
        %v1795 = vpop.f32.mrf.mxu0
        %v1796 = vadd.f32 %v1347, %v1795
        %v1797 = vpop.f32.mrf.mxu0
        %v1798 = vadd.f32 %v1349, %v1797
        %1799 = vmatprep.mubr.f32.mxu0 0.0
        %1800 = vmatmul.mubr.f32.gmra.mxu0 %v260
        %v1801 = vpop.f32.mrf.mxu0
        %v1802 = vadd.f32 %v1353, %v1801
        %v1803 = vpop.f32.mrf.mxu0
        %v1804 = vadd.f32 %v1355, %v1803
        %1805 = vmatprep.mubr.f32.mxu0 0.0
        %1806 = vmatmul.mubr.f32.gmra.mxu0 %v265
        %v1807 = vpop.f32.mrf.mxu0
        %v1808 = vadd.f32 %v1359, %v1807
        %v1809 = vpop.f32.mrf.mxu0
        %v1810 = vadd.f32 %v1361, %v1809
        %1811 = vmatprep.mubr.f32.mxu0 0.0
        %1812 = vmatmul.mubr.f32.gmra.mxu0 %v270
        %v1813 = vpop.f32.mrf.mxu0
        %v1814 = vadd.f32 %v1365, %v1813
        %v1815 = vpop.f32.mrf.mxu0
        %v1816 = vadd.f32 %v1367, %v1815
        %1817 = vmatprep.mubr.f32.mxu0 0.0
        %1818 = vmatmul.mubr.f32.gmra.mxu0 %v275
        %v1819 = vpop.f32.mrf.mxu0
        %v1820 = vadd.f32 %v1371, %v1819
        %v1821 = vpop.f32.mrf.mxu0
        %v1822 = vadd.f32 %v1373, %v1821
        %1823 = vmatprep.mubr.f32.mxu0 0.0
        %1824 = vmatmul.mubr.f32.gmra.mxu0 %v280
        %v1825 = vpop.f32.mrf.mxu0
        %v1826 = vadd.f32 %v1377, %v1825
        %v1827 = vpop.f32.mrf.mxu0
        %v1828 = vadd.f32 %v1379, %v1827
        %1829 = vmatprep.mubr.f32.mxu0 0.0
        %1830 = vmatmul.mubr.f32.gmra.mxu0 %v285
        %v1831 = vpop.f32.mrf.mxu0
        %v1832 = vadd.f32 %v1383, %v1831
        %v1833 = vpop.f32.mrf.mxu0
        %v1834 = vadd.f32 %v1385, %v1833
        %1835 = vmatprep.mubr.f32.mxu0 0.0
        %1836 = vmatmul.mubr.f32.gmra.mxu0 %v290
        %v1837 = vpop.f32.mrf.mxu0
        %v1838 = vadd.f32 %v1389, %v1837
        %v1839 = vpop.f32.mrf.mxu0
        %v1840 = vadd.f32 %v1391, %v1839
        %1841 = vmatprep.mubr.f32.mxu0 0.0
        %1842 = vmatmul.mubr.f32.gmra.mxu0 %v295
        %v1843 = vpop.f32.mrf.mxu0
        %v1844 = vadd.f32 %v1395, %v1843
        %v1845 = vpop.f32.mrf.mxu0
        %v1846 = vadd.f32 %v1397, %v1845
        %1847 = vmatprep.mubr.f32.mxu0 0.0
        %1848 = vmatmul.mubr.f32.gmra.mxu0 %v300
        %v1849 = vpop.f32.mrf.mxu0
        %v1850 = vadd.f32 %v1401, %v1849
        %v1851 = vpop.f32.mrf.mxu0
        %v1852 = vadd.f32 %v1403, %v1851
        %1853 = vmatprep.mubr.f32.mxu0 0.0
        %1854 = vmatmul.mubr.f32.gmra.mxu0 %v305
        %v1855 = vpop.f32.mrf.mxu0
        %v1856 = vadd.f32 %v1407, %v1855
        %v1857 = vpop.f32.mrf.mxu0
        %v1858 = vadd.f32 %v1409, %v1857
        %1859 = vmatprep.mubr.f32.mxu0 0.0
        %1860 = vmatmul.mubr.f32.gmra.mxu0 %v310
        %v1861 = vpop.f32.mrf.mxu0
        %v1862 = vadd.f32 %v1413, %v1861
        %v1863 = vpop.f32.mrf.mxu0
        %v1864 = vadd.f32 %v1415, %v1863
        %1865 = vmatprep.mubr.f32.mxu0 0.0
        %1866 = vmatmul.mubr.f32.gmra.mxu0 %v315
        %v1867 = vpop.f32.mrf.mxu0
        %v1868 = vadd.f32 %v1419, %v1867
        %v1869 = vpop.f32.mrf.mxu0
        %v1870 = vadd.f32 %v1421, %v1869
        %1871 = vmatprep.mubr.f32.mxu0 0.0
        %1872 = vmatmul.mubr.f32.gmra.mxu0 %v320
        %v1873 = vpop.f32.mrf.mxu0
        %v1874 = vadd.f32 %v1425, %v1873
        %v1875 = vpop.f32.mrf.mxu0
        %v1876 = vadd.f32 %v1427, %v1875
        %1877 = vmatprep.mubr.f32.mxu0 0.0
        %1878 = vmatmul.mubr.f32.gmra.mxu0 %v325
        %v1879 = vpop.f32.mrf.mxu0
        %v1880 = vadd.f32 %v1431, %v1879
        %v1881 = vpop.f32.mrf.mxu0
        %v1882 = vadd.f32 %v1433, %v1881
        %1883 = vmatprep.mubr.f32.mxu0 0.0
        %1884 = vmatmul.mubr.f32.gmra.mxu0 %v330
        %v1885 = vpop.f32.mrf.mxu0
        %v1886 = vadd.f32 %v1437, %v1885
        %v1887 = vpop.f32.mrf.mxu0
        %v1888 = vadd.f32 %v1439, %v1887
        %1889 = vmatprep.mubr.f32.mxu0 0.0
        %1890 = vmatmul.mubr.f32.gmra.mxu0 %v335
        %v1891 = vpop.f32.mrf.mxu0
        %v1892 = vadd.f32 %v1443, %v1891
        %v1893 = vpop.f32.mrf.mxu0
        %v1894 = vadd.f32 %v1445, %v1893
        %1895 = vmatprep.mubr.f32.mxu0 0.0
        %1896 = vmatmul.mubr.f32.gmra.mxu0 %v340
        %v1897 = vpop.f32.mrf.mxu0
        %v1898 = vadd.f32 %v1449, %v1897
        %v1899 = vpop.f32.mrf.mxu0
        %v1900 = vadd.f32 %v1451, %v1899
        %1901 = vmatprep.mubr.f32.mxu0 0.0
        %1902 = vmatmul.mubr.f32.gmra.mxu0 %v345
        %v1903 = vpop.f32.mrf.mxu0
        %v1904 = vadd.f32 %v1455, %v1903
        %v1905 = vpop.f32.mrf.mxu0
        %v1906 = vadd.f32 %v1457, %v1905
        %1907 = vmatprep.mubr.f32.mxu0 0.0
        %1908 = vmatmul.mubr.f32.gmra.mxu0 %v350
        %v1909 = vpop.f32.mrf.mxu0
        %v1910 = vadd.f32 %v1461, %v1909
        %v1911 = vpop.f32.mrf.mxu0
        %v1912 = vadd.f32 %v1463, %v1911
        %1913 = vmatprep.mubr.f32.mxu0 0.0
        %1914 = vmatmul.mubr.f32.gmra.mxu0 %v355
        %v1915 = vpop.f32.mrf.mxu0
        %v1916 = vadd.f32 %v1467, %v1915
        %v1917 = vpop.f32.mrf.mxu0
        %v1918 = vadd.f32 %v1469, %v1917
        %1919 = vmatprep.mubr.f32.mxu0 0.0
        %1920 = vmatmul.mubr.f32.gmra.mxu0 %v360
        %v1921 = vpop.f32.mrf.mxu0
        %v1922 = vadd.f32 %v1473, %v1921
        %v1923 = vpop.f32.mrf.mxu0
        %v1924 = vadd.f32 %v1475, %v1923
        %1925 = vmatprep.mubr.f32.mxu0 0.0
        %1926 = vmatmul.mubr.f32.gmra.mxu0 %v365
        %v1927 = vpop.f32.mrf.mxu0
        %v1928 = vadd.f32 %v1479, %v1927
        %v1929 = vpop.f32.mrf.mxu0
        %v1930 = vadd.f32 %v1481, %v1929
        %1931 = vmatprep.mubr.f32.mxu0 0.0
        %1932 = vmatmul.mubr.f32.gmra.mxu0 %v370
        %v1933 = vpop.f32.mrf.mxu0
        %v1934 = vadd.f32 %v1485, %v1933
        %v1935 = vpop.f32.mrf.mxu0
        %v1936 = vadd.f32 %v1487, %v1935
        %1937 = vmatprep.mubr.f32.mxu0 0.0
        %1938 = vmatmul.mubr.f32.gmra.mxu0 %v375
        %v1939 = vpop.f32.mrf.mxu0
        %v1940 = vadd.f32 %v1491, %v1939
        %v1941 = vpop.f32.mrf.mxu0
        %v1942 = vadd.f32 %v1493, %v1941
        %1943 = vmatprep.mubr.f32.mxu0 0.0
        %1944 = vmatmul.mubr.f32.gmra.mxu0 %v380
        %v1945 = vpop.f32.mrf.mxu0
        %v1946 = vadd.f32 %v1497, %v1945
        %v1947 = vpop.f32.mrf.mxu0
        %v1948 = vadd.f32 %v1499, %v1947
        %1949 = vmatprep.mubr.f32.mxu0 0.0
        %1950 = vmatmul.mubr.f32.gmra.mxu0 %v385
        %v1951 = vpop.f32.mrf.mxu0
        %v1952 = vadd.f32 %v1503, %v1951
        %v1953 = vpop.f32.mrf.mxu0
        %v1954 = vadd.f32 %v1505, %v1953
        %1955 = vmatprep.mubr.f32.mxu0 0.0
        %1956 = vmatmul.mubr.f32.gmra.mxu0 %v390
        %v1957 = vpop.f32.mrf.mxu0
        %v1958 = vadd.f32 %v1509, %v1957
        %v1959 = vpop.f32.mrf.mxu0
        %v1960 = vadd.f32 %v1511, %v1959
        %1961 = vmatprep.mubr.f32.mxu0 0.0
        %1962 = vmatmul.mubr.f32.gmra.mxu0 %v395
        %v1963 = vpop.f32.mrf.mxu0
        %v1964 = vadd.f32 %v1515, %v1963
        %v1965 = vpop.f32.mrf.mxu0
        %v1966 = vadd.f32 %v1517, %v1965
        %1967 = vmatprep.mubr.f32.mxu0 0.0
        %1968 = vmatmul.mubr.f32.gmra.mxu0 %v400
        %v1969 = vpop.f32.mrf.mxu0
        %v1970 = vadd.f32 %v1521, %v1969
        %v1971 = vpop.f32.mrf.mxu0
        %v1972 = vadd.f32 %v1523, %v1971
        %1973 = vmatprep.mubr.f32.mxu0 0.0
        %1974 = vmatmul.mubr.f32.gmra.mxu0 %v405
        %v1975 = vpop.f32.mrf.mxu0
        %v1976 = vadd.f32 %v1527, %v1975
        %v1977 = vpop.f32.mrf.mxu0
        %v1978 = vadd.f32 %v1529, %v1977
        %1979 = vmatprep.mubr.f32.mxu0 0.0
        %1980 = vmatmul.mubr.f32.gmra.mxu0 %v410
        %v1981 = vpop.f32.mrf.mxu0
        %v1982 = vadd.f32 %v1533, %v1981
        %v1983 = vpop.f32.mrf.mxu0
        %v1984 = vadd.f32 %v1535, %v1983
        %1985 = vmatprep.mubr.f32.mxu0 0.0
        %1986 = vmatmul.mubr.f32.gmra.mxu0 %v415
        %v1987 = vpop.f32.mrf.mxu0
        %v1988 = vadd.f32 %v1539, %v1987
        %v1989 = vpop.f32.mrf.mxu0
        %v1990 = vadd.f32 %v1541, %v1989
        %1991 = vmatprep.mubr.f32.mxu0 0.0
        %1992 = vmatmul.mubr.f32.gmra.mxu0 %v420
        %v1993 = vpop.f32.mrf.mxu0
        %v1994 = vadd.f32 %v1545, %v1993
        %v1995 = vpop.f32.mrf.mxu0
        %v1996 = vadd.f32 %v1547, %v1995
        %1997 = vmatprep.mubr.f32.mxu0 0.0
        %1998 = vmatmul.mubr.f32.gmra.mxu0 %v425
        %v1999 = vpop.f32.mrf.mxu0
        %v2000 = vadd.f32 %v1551, %v1999
        %v2001 = vpop.f32.mrf.mxu0
        %v2002 = vadd.f32 %v1553, %v2001
        %2003 = vmatprep.mubr.f32.mxu0 0.0
        %2004 = vmatmul.mubr.f32.gmra.mxu0 %v430
        %v2005 = vpop.f32.mrf.mxu0
        %v2006 = vadd.f32 %v1557, %v2005
        %v2007 = vpop.f32.mrf.mxu0
        %v2008 = vadd.f32 %v1559, %v2007
        %2009 = vmatprep.mubr.f32.mxu0 0.0
        %2010 = vmatmul.mubr.f32.gmra.mxu0 %v435
        %v2011 = vpop.f32.mrf.mxu0
        %v2012 = vadd.f32 %v1563, %v2011
        %v2013 = vpop.f32.mrf.mxu0
        %v2014 = vadd.f32 %v1565, %v2013
        %2015 = vmatprep.mubr.f32.mxu0 0.0
        %2016 = vmatmul.mubr.f32.gmra.mxu0 %v440
        %v2017 = vpop.f32.mrf.mxu0
        %v2018 = vadd.f32 %v1569, %v2017
        %v2019 = vpop.f32.mrf.mxu0
        %v2020 = vadd.f32 %v1571, %v2019
        %2021 = vmatprep.mubr.f32.mxu0 0.0
        %2022 = vmatmul.mubr.f32.gmra.mxu0 %v445
        %v2023 = vpop.f32.mrf.mxu0
        %v2024 = vadd.f32 %v1575, %v2023
        %v2025 = vpop.f32.mrf.mxu0
        %v2026 = vadd.f32 %v1577, %v2025
        %2027 = vmatprep.mubr.f32.mxu0 0.0
        %2028 = vmatmul.mubr.f32.gmra.mxu0 %v450
        %v2029 = vpop.f32.mrf.mxu0
        %v2030 = vadd.f32 %v1581, %v2029
        %v2031 = vpop.f32.mrf.mxu0
        %v2032 = vadd.f32 %v1583, %v2031
        %2033 = vmatprep.mubr.f32.mxu0 0.0
        %2034 = vmatmul.mubr.f32.gmra.mxu0 %v455
        %v2035 = vpop.f32.mrf.mxu0
        %v2036 = vadd.f32 %v1587, %v2035
        %v2037 = vpop.f32.mrf.mxu0
        %v2038 = vadd.f32 %v1589, %v2037
        %2039 = vmatprep.mubr.f32.mxu0 0.0
        %2040 = vmatmul.mubr.f32.gmra.mxu0 %v460
        %v2041 = vpop.f32.mrf.mxu0
        %v2042 = vadd.f32 %v1593, %v2041
        %v2043 = vpop.f32.mrf.mxu0
        %v2044 = vadd.f32 %v1595, %v2043
        %2045 = vmatprep.mubr.f32.mxu0 0.0
        %2046 = vmatmul.mubr.f32.gmra.mxu0 %v465
        %v2047 = vpop.f32.mrf.mxu0
        %v2048 = vadd.f32 %v1599, %v2047
        %v2049 = vpop.f32.mrf.mxu0
        %v2050 = vadd.f32 %v1601, %v2049
        %2051 = vmatprep.mubr.f32.mxu0 0.0
        %2052 = vmatmul.mubr.f32.gmra.mxu0 %v470
        %v2053 = vpop.f32.mrf.mxu0
        %v2054 = vadd.f32 %v1605, %v2053
        %v2055 = vpop.f32.mrf.mxu0
        %v2056 = vadd.f32 %v1607, %v2055
        %2057 = vmatprep.mubr.f32.mxu0 0.0
        %2058 = vmatmul.mubr.f32.gmra.mxu0 %v475
        %v2059 = vpop.f32.mrf.mxu0
        %v2060 = vadd.f32 %v1611, %v2059
        %v2061 = vpop.f32.mrf.mxu0
        %v2062 = vadd.f32 %v1613, %v2061
        %2063 = vmatprep.mubr.f32.mxu0 0.0
        %2064 = vmatmul.mubr.f32.gmra.mxu0 %v480
        %v2065 = vpop.f32.mrf.mxu0
        %v2066 = vadd.f32 %v1617, %v2065
        %v2067 = vpop.f32.mrf.mxu0
        %v2068 = vadd.f32 %v1619, %v2067
        %2069 = vmatprep.mubr.f32.mxu0 0.0
        %2070 = vmatmul.mubr.f32.gmra.mxu0 %v485
        %v2071 = vpop.f32.mrf.mxu0
        %v2072 = vadd.f32 %v1623, %v2071
        %v2073 = vpop.f32.mrf.mxu0
        %v2074 = vadd.f32 %v1625, %v2073
        %2075 = vmatprep.mubr.f32.mxu0 0.0
        %2076 = vmatmul.mubr.f32.gmra.mxu0 %v490
        %v2077 = vpop.f32.mrf.mxu0
        %v2078 = vadd.f32 %v1629, %v2077
        %v2079 = vpop.f32.mrf.mxu0
        %v2080 = vadd.f32 %v1631, %v2079
        %2081 = vmatprep.mubr.f32.mxu0 0.0
        %2082 = vmatmul.mubr.f32.gmra.mxu0 %v495
        %v2083 = vpop.f32.mrf.mxu0
        %v2084 = vadd.f32 %v1635, %v2083
        %v2085 = vpop.f32.mrf.mxu0
        %v2086 = vadd.f32 %v1637, %v2085
        %2087 = vmatprep.mubr.f32.mxu0 0.0
        %2088 = vmatmul.mubr.f32.gmra.mxu0 %v500
        %v2089 = vpop.f32.mrf.mxu0
        %v2090 = vadd.f32 %v1641, %v2089
        %v2091 = vpop.f32.mrf.mxu0
        %v2092 = vadd.f32 %v1643, %v2091
        %2093 = vmatprep.mubr.f32.mxu0 0.0
        %2094 = vmatmul.mubr.f32.gmra.mxu0 %v505
        %v2095 = vpop.f32.mrf.mxu0
        %v2096 = vadd.f32 %v1647, %v2095
        %v2097 = vpop.f32.mrf.mxu0
        %v2098 = vadd.f32 %v1649, %v2097
        %2099 = vmatprep.mubr.f32.mxu0 0.0
        %2100 = vmatmul.mubr.f32.gmra.mxu0 %v510
        %v2101 = vpop.f32.mrf.mxu0
        %v2102 = vadd.f32 %v1653, %v2101
        %v2103 = vpop.f32.mrf.mxu0
        %v2104 = vadd.f32 %v1655, %v2103
        %2105 = vmatprep.mubr.f32.mxu0 0.0
        %2106 = vmatmul.mubr.f32.gmra.mxu0 %v515
        %v2107 = vpop.f32.mrf.mxu0
        %v2108 = vadd.f32 %v1659, %v2107
        %v2109 = vpop.f32.mrf.mxu0
        %v2110 = vadd.f32 %v1661, %v2109
        %2111 = vmatprep.mubr.f32.mxu0 0.0
        %2112 = vmatmul.mubr.f32.gmra.mxu0 %v520
        %v2113 = vpop.f32.mrf.mxu0
        %v2114 = vadd.f32 %v1665, %v2113
        %v2115 = vpop.f32.mrf.mxu0
        %v2116 = vadd.f32 %v1667, %v2115
        %2117 = vmatprep.mubr.f32.mxu0 0.0
        %2118 = vmatmul.mubr.f32.gmra.mxu0 %v525
        %v2119 = vpop.f32.mrf.mxu0
        %v2120 = vadd.f32 %v1671, %v2119
        %v2121 = vpop.f32.mrf.mxu0
        %v2122 = vadd.f32 %v1673, %v2121
        %2123 = vmatprep.mubr.f32.mxu0 0.0
        %2124 = vmatmul.mubr.f32.gmra.mxu0 %v530
        %v2125 = vpop.f32.mrf.mxu0
        %v2126 = vadd.f32 %v1677, %v2125
        %v2127 = vpop.f32.mrf.mxu0
        %v2128 = vadd.f32 %v1679, %v2127
        %2129 = vmatprep.mubr.f32.mxu0 0.0
        %2130 = vmatmul.mubr.f32.gmra.mxu0 %v535
        %v2131 = vpop.f32.mrf.mxu0
        %v2132 = vadd.f32 %v1683, %v2131
        %v2133 = vpop.f32.mrf.mxu0
        %v2134 = vadd.f32 %v1685, %v2133
        %2135 = vmatprep.mubr.f32.mxu0 0.0
        %2136 = vmatmul.mubr.f32.gmra.mxu0 %v540
        %v2137 = vpop.f32.mrf.mxu0
        %v2138 = vadd.f32 %v1689, %v2137
        %v2139 = vpop.f32.mrf.mxu0
        %v2140 = vadd.f32 %v1691, %v2139
        %2141 = vmatprep.mubr.f32.mxu0 0.0
        %2142 = vmatmul.mubr.f32.gmra.mxu0 %v545
        %v2143 = vpop.f32.mrf.mxu0
        %v2144 = vadd.f32 %v1695, %v2143
        %v2145 = vpop.f32.mrf.mxu0
        %v2146 = vadd.f32 %v1697, %v2145
        %2147 = vmatprep.mubr.f32.mxu0 0.0
        %2148 = vmatmul.mubr.f32.gmra.mxu0 %v550
        %v2149 = vpop.f32.mrf.mxu0
        %v2150 = vadd.f32 %v1701, %v2149
        %v2151 = vpop.f32.mrf.mxu0
        %v2152 = vadd.f32 %v1703, %v2151
        %2153 = vmatprep.mubr.f32.mxu0 0.0
        %2154 = vmatmul.mubr.f32.gmra.mxu0 %v555
        %v2155 = vpop.f32.mrf.mxu0
        %v2156 = vadd.f32 %v1707, %v2155
        %v2157 = vpop.f32.mrf.mxu0
        %v2158 = vadd.f32 %v1709, %v2157
        %2159 = vdwg.mxu0
        %2160 = vmatprep.subr.mxu0 0.0
        %2161 = vmatpush1.msra.mxu0 %v603
        %2162 = vmatprep.subr.mxu0 0.0
        %2163 = vmatpush1.msra.mxu0 %v600
        %2164 = vmatprep.subr.mxu0 0.0
        %2165 = vmatpush1.msra.mxu0 %v597
        %2166 = vmatprep.subr.mxu0 0.0
        %2167 = vmatpush1.msra.mxu0 %v594
        %2168 = vmatprep.subr.mxu0 0.0
        %2169 = vmatpush1.msra.mxu0 %v591
        %2170 = vmatprep.subr.mxu0 0.0
        %2171 = vmatpush1.msra.mxu0 %v588
        %2172 = vmatprep.subr.mxu0 0.0
        %2173 = vmatpush1.msra.mxu0 %v585
        %2174 = vmatprep.subr.mxu0 0.0
        %2175 = vmatpush1.msra.mxu0 %v582
        %2176 = vmatprep.subr.mxu0 0.0
        %2177 = vmatpush1.msra.mxu0 %v579
        %2178 = vmatprep.subr.mxu0 0.0
        %2179 = vmatpush1.msra.mxu0 %v576
        %2180 = vmatprep.subr.mxu0 0.0
        %2181 = vmatpush1.msra.mxu0 %v573
        %2182 = vmatprep.subr.mxu0 0.0
        %2183 = vmatpush1.msra.mxu0 %v570
        %2184 = vmatprep.subr.mxu0 0.0
        %2185 = vmatpush1.msra.mxu0 %v567
        %2186 = vmatprep.subr.mxu0 0.0
        %2187 = vmatpush1.msra.mxu0 %v564
        %2188 = vmatprep.subr.mxu0 0.0
        %2189 = vmatpush1.msra.mxu0 %v561
        %2190 = vmatprep.subr.mxu0 0.0
        %2191 = vmatpush1.msra.mxu0 %v558
        %2192 = vmatprep.subr.mxu0 0.0
        %2193 = vmatpush2.msra.mxu0 %v651
        %2194 = vmatprep.subr.mxu0 0.0
        %2195 = vmatpush2.msra.mxu0 %v648
        %2196 = vmatprep.subr.mxu0 0.0
        %2197 = vmatpush2.msra.mxu0 %v645
        %2198 = vmatprep.subr.mxu0 0.0
        %2199 = vmatpush2.msra.mxu0 %v642
        %2200 = vmatprep.subr.mxu0 0.0
        %2201 = vmatpush2.msra.mxu0 %v639
        %2202 = vmatprep.subr.mxu0 0.0
        %2203 = vmatpush2.msra.mxu0 %v636
        %2204 = vmatprep.subr.mxu0 0.0
        %2205 = vmatpush2.msra.mxu0 %v633
        %2206 = vmatprep.subr.mxu0 0.0
        %2207 = vmatpush2.msra.mxu0 %v630
        %2208 = vmatprep.subr.mxu0 0.0
        %2209 = vmatpush2.msra.mxu0 %v627
        %2210 = vmatprep.subr.mxu0 0.0
        %2211 = vmatpush2.msra.mxu0 %v624
        %2212 = vmatprep.subr.mxu0 0.0
        %2213 = vmatpush2.msra.mxu0 %v621
        %2214 = vmatprep.subr.mxu0 0.0
        %2215 = vmatpush2.msra.mxu0 %v618
        %2216 = vmatprep.subr.mxu0 0.0
        %2217 = vmatpush2.msra.mxu0 %v615
        %2218 = vmatprep.subr.mxu0 0.0
        %2219 = vmatpush2.msra.mxu0 %v612
        %2220 = vmatprep.subr.mxu0 0.0
        %2221 = vmatpush2.msra.mxu0 %v609
        %2222 = vmatprep.subr.mxu0 0.0
        %2223 = vmatpush2.msra.mxu0 %v606
        %2224 = vmatprep.mubr.f32.mxu0 %v237
        %2225 = vmatmul.mubr.f32.gmra.mxu0 %v236
        %v2226 = vpop.f32.mrf.mxu0
        %v2227 = vadd.f32 %v809, %v2226
        %v2228 = vpop.f32.mrf.mxu0
        %2229 = vmatprep.mubr.f32.mxu0 %v242
        %2230 = vmatmul.mubr.f32.gmra.mxu0 %v241
        %v2231 = vpop.f32.mrf.mxu0
        %v2232 = vadd.f32 %v809, %v2231
        %v2233 = vpop.f32.mrf.mxu0
        %2234 = vmatprep.mubr.f32.mxu0 %v247
        %2235 = vmatmul.mubr.f32.gmra.mxu0 %v246
        %v2236 = vpop.f32.mrf.mxu0
        %v2237 = vadd.f32 %v809, %v2236
        %v2238 = vpop.f32.mrf.mxu0
        %2239 = vmatprep.mubr.f32.mxu0 %v252
        %2240 = vmatmul.mubr.f32.gmra.mxu0 %v251
        %v2241 = vpop.f32.mrf.mxu0
        %v2242 = vadd.f32 %v809, %v2241
        %v2243 = vpop.f32.mrf.mxu0
        %2244 = vmatprep.mubr.f32.mxu0 %v257
        %2245 = vmatmul.mubr.f32.gmra.mxu0 %v256
        %v2246 = vpop.f32.mrf.mxu0
        %v2247 = vadd.f32 %v809, %v2246
        %v2248 = vpop.f32.mrf.mxu0
        %2249 = vmatprep.mubr.f32.mxu0 %v262
        %2250 = vmatmul.mubr.f32.gmra.mxu0 %v261
        %v2251 = vpop.f32.mrf.mxu0
        %v2252 = vadd.f32 %v809, %v2251
        %v2253 = vpop.f32.mrf.mxu0
        %2254 = vmatprep.mubr.f32.mxu0 %v267
        %2255 = vmatmul.mubr.f32.gmra.mxu0 %v266
        %v2256 = vpop.f32.mrf.mxu0
        %v2257 = vadd.f32 %v809, %v2256
        %v2258 = vpop.f32.mrf.mxu0
        %2259 = vmatprep.mubr.f32.mxu0 %v272
        %2260 = vmatmul.mubr.f32.gmra.mxu0 %v271
        %v2261 = vpop.f32.mrf.mxu0
        %v2262 = vadd.f32 %v809, %v2261
        %v2263 = vpop.f32.mrf.mxu0
        %2264 = vmatprep.mubr.f32.mxu0 %v277
        %2265 = vmatmul.mubr.f32.gmra.mxu0 %v276
        %v2266 = vpop.f32.mrf.mxu0
        %v2267 = vadd.f32 %v809, %v2266
        %v2268 = vpop.f32.mrf.mxu0
        %2269 = vmatprep.mubr.f32.mxu0 %v282
        %2270 = vmatmul.mubr.f32.gmra.mxu0 %v281
        %v2271 = vpop.f32.mrf.mxu0
        %v2272 = vadd.f32 %v809, %v2271
        %v2273 = vpop.f32.mrf.mxu0
        %2274 = vmatprep.mubr.f32.mxu0 %v287
        %2275 = vmatmul.mubr.f32.gmra.mxu0 %v286
        %v2276 = vpop.f32.mrf.mxu0
        %v2277 = vadd.f32 %v809, %v2276
        %v2278 = vpop.f32.mrf.mxu0
        %2279 = vmatprep.mubr.f32.mxu0 %v292
        %2280 = vmatmul.mubr.f32.gmra.mxu0 %v291
        %v2281 = vpop.f32.mrf.mxu0
        %v2282 = vadd.f32 %v809, %v2281
        %v2283 = vpop.f32.mrf.mxu0
        %2284 = vmatprep.mubr.f32.mxu0 %v297
        %2285 = vmatmul.mubr.f32.gmra.mxu0 %v296
        %v2286 = vpop.f32.mrf.mxu0
        %v2287 = vadd.f32 %v809, %v2286
        %v2288 = vpop.f32.mrf.mxu0
        %2289 = vmatprep.mubr.f32.mxu0 %v302
        %2290 = vmatmul.mubr.f32.gmra.mxu0 %v301
        %v2291 = vpop.f32.mrf.mxu0
        %v2292 = vadd.f32 %v809, %v2291
        %v2293 = vpop.f32.mrf.mxu0
        %2294 = vmatprep.mubr.f32.mxu0 %v307
        %2295 = vmatmul.mubr.f32.gmra.mxu0 %v306
        %v2296 = vpop.f32.mrf.mxu0
        %v2297 = vadd.f32 %v809, %v2296
        %v2298 = vpop.f32.mrf.mxu0
        %2299 = vmatprep.mubr.f32.mxu0 %v312
        %2300 = vmatmul.mubr.f32.gmra.mxu0 %v311
        %v2301 = vpop.f32.mrf.mxu0
        %v2302 = vadd.f32 %v809, %v2301
        %v2303 = vpop.f32.mrf.mxu0
        %2304 = vmatprep.mubr.f32.mxu0 %v317
        %2305 = vmatmul.mubr.f32.gmra.mxu0 %v316
        %v2306 = vpop.f32.mrf.mxu0
        %v2307 = vadd.f32 %v809, %v2306
        %v2308 = vpop.f32.mrf.mxu0
        %2309 = vmatprep.mubr.f32.mxu0 %v322
        %2310 = vmatmul.mubr.f32.gmra.mxu0 %v321
        %v2311 = vpop.f32.mrf.mxu0
        %v2312 = vadd.f32 %v809, %v2311
        %v2313 = vpop.f32.mrf.mxu0
        %2314 = vmatprep.mubr.f32.mxu0 %v327
        %2315 = vmatmul.mubr.f32.gmra.mxu0 %v326
        %v2316 = vpop.f32.mrf.mxu0
        %v2317 = vadd.f32 %v809, %v2316
        %v2318 = vpop.f32.mrf.mxu0
        %2319 = vmatprep.mubr.f32.mxu0 %v332
        %2320 = vmatmul.mubr.f32.gmra.mxu0 %v331
        %v2321 = vpop.f32.mrf.mxu0
        %v2322 = vadd.f32 %v809, %v2321
        %v2323 = vpop.f32.mrf.mxu0
        %2324 = vmatprep.mubr.f32.mxu0 %v337
        %2325 = vmatmul.mubr.f32.gmra.mxu0 %v336
        %v2326 = vpop.f32.mrf.mxu0
        %v2327 = vadd.f32 %v809, %v2326
        %v2328 = vpop.f32.mrf.mxu0
        %2329 = vmatprep.mubr.f32.mxu0 %v342
        %2330 = vmatmul.mubr.f32.gmra.mxu0 %v341
        %v2331 = vpop.f32.mrf.mxu0
        %v2332 = vadd.f32 %v809, %v2331
        %v2333 = vpop.f32.mrf.mxu0
        %2334 = vmatprep.mubr.f32.mxu0 %v347
        %2335 = vmatmul.mubr.f32.gmra.mxu0 %v346
        %v2336 = vpop.f32.mrf.mxu0
        %v2337 = vadd.f32 %v809, %v2336
        %v2338 = vpop.f32.mrf.mxu0
        %2339 = vmatprep.mubr.f32.mxu0 %v352
        %2340 = vmatmul.mubr.f32.gmra.mxu0 %v351
        %v2341 = vpop.f32.mrf.mxu0
        %v2342 = vadd.f32 %v809, %v2341
        %v2343 = vpop.f32.mrf.mxu0
        %2344 = vmatprep.mubr.f32.mxu0 %v357
        %2345 = vmatmul.mubr.f32.gmra.mxu0 %v356
        %v2346 = vpop.f32.mrf.mxu0
        %v2347 = vadd.f32 %v809, %v2346
        %v2348 = vpop.f32.mrf.mxu0
        %2349 = vmatprep.mubr.f32.mxu0 %v362
        %2350 = vmatmul.mubr.f32.gmra.mxu0 %v361
        %v2351 = vpop.f32.mrf.mxu0
        %v2352 = vadd.f32 %v809, %v2351
        %v2353 = vpop.f32.mrf.mxu0
        %2354 = vmatprep.mubr.f32.mxu0 %v367
        %2355 = vmatmul.mubr.f32.gmra.mxu0 %v366
        %v2356 = vpop.f32.mrf.mxu0
        %v2357 = vadd.f32 %v809, %v2356
        %v2358 = vpop.f32.mrf.mxu0
        %2359 = vmatprep.mubr.f32.mxu0 %v372
        %2360 = vmatmul.mubr.f32.gmra.mxu0 %v371
        %v2361 = vpop.f32.mrf.mxu0
        %v2362 = vadd.f32 %v809, %v2361
        %v2363 = vpop.f32.mrf.mxu0
        %2364 = vmatprep.mubr.f32.mxu0 %v377
        %2365 = vmatmul.mubr.f32.gmra.mxu0 %v376
        %v2366 = vpop.f32.mrf.mxu0
        %v2367 = vadd.f32 %v809, %v2366
        %v2368 = vpop.f32.mrf.mxu0
        %2369 = vmatprep.mubr.f32.mxu0 %v382
        %2370 = vmatmul.mubr.f32.gmra.mxu0 %v381
        %v2371 = vpop.f32.mrf.mxu0
        %v2372 = vadd.f32 %v809, %v2371
        %v2373 = vpop.f32.mrf.mxu0
        %2374 = vmatprep.mubr.f32.mxu0 %v387
        %2375 = vmatmul.mubr.f32.gmra.mxu0 %v386
        %v2376 = vpop.f32.mrf.mxu0
        %v2377 = vadd.f32 %v809, %v2376
        %v2378 = vpop.f32.mrf.mxu0
        %2379 = vmatprep.mubr.f32.mxu0 %v392
        %2380 = vmatmul.mubr.f32.gmra.mxu0 %v391
        %v2381 = vpop.f32.mrf.mxu0
        %v2382 = vadd.f32 %v809, %v2381
        %v2383 = vpop.f32.mrf.mxu0
        %2384 = vmatprep.mubr.f32.mxu0 %v397
        %2385 = vmatmul.mubr.f32.gmra.mxu0 %v396
        %v2386 = vpop.f32.mrf.mxu0
        %v2387 = vadd.f32 %v809, %v2386
        %v2388 = vpop.f32.mrf.mxu0
        %2389 = vmatprep.mubr.f32.mxu0 %v402
        %2390 = vmatmul.mubr.f32.gmra.mxu0 %v401
        %v2391 = vpop.f32.mrf.mxu0
        %v2392 = vadd.f32 %v809, %v2391
        %v2393 = vpop.f32.mrf.mxu0
        %2394 = vmatprep.mubr.f32.mxu0 %v407
        %2395 = vmatmul.mubr.f32.gmra.mxu0 %v406
        %v2396 = vpop.f32.mrf.mxu0
        %v2397 = vadd.f32 %v809, %v2396
        %v2398 = vpop.f32.mrf.mxu0
        %2399 = vmatprep.mubr.f32.mxu0 %v412
        %2400 = vmatmul.mubr.f32.gmra.mxu0 %v411
        %v2401 = vpop.f32.mrf.mxu0
        %v2402 = vadd.f32 %v809, %v2401
        %v2403 = vpop.f32.mrf.mxu0
        %2404 = vmatprep.mubr.f32.mxu0 %v417
        %2405 = vmatmul.mubr.f32.gmra.mxu0 %v416
        %v2406 = vpop.f32.mrf.mxu0
        %v2407 = vadd.f32 %v809, %v2406
        %v2408 = vpop.f32.mrf.mxu0
        %2409 = vmatprep.mubr.f32.mxu0 %v422
        %2410 = vmatmul.mubr.f32.gmra.mxu0 %v421
        %v2411 = vpop.f32.mrf.mxu0
        %v2412 = vadd.f32 %v809, %v2411
        %v2413 = vpop.f32.mrf.mxu0
        %2414 = vmatprep.mubr.f32.mxu0 %v427
        %2415 = vmatmul.mubr.f32.gmra.mxu0 %v426
        %v2416 = vpop.f32.mrf.mxu0
        %v2417 = vadd.f32 %v809, %v2416
        %v2418 = vpop.f32.mrf.mxu0
        %2419 = vmatprep.mubr.f32.mxu0 %v432
        %2420 = vmatmul.mubr.f32.gmra.mxu0 %v431
        %v2421 = vpop.f32.mrf.mxu0
        %v2422 = vadd.f32 %v809, %v2421
        %v2423 = vpop.f32.mrf.mxu0
        %2424 = vmatprep.mubr.f32.mxu0 %v437
        %2425 = vmatmul.mubr.f32.gmra.mxu0 %v436
        %v2426 = vpop.f32.mrf.mxu0
        %v2427 = vadd.f32 %v809, %v2426
        %v2428 = vpop.f32.mrf.mxu0
        %2429 = vmatprep.mubr.f32.mxu0 %v442
        %2430 = vmatmul.mubr.f32.gmra.mxu0 %v441
        %v2431 = vpop.f32.mrf.mxu0
        %v2432 = vadd.f32 %v809, %v2431
        %v2433 = vpop.f32.mrf.mxu0
        %2434 = vmatprep.mubr.f32.mxu0 %v447
        %2435 = vmatmul.mubr.f32.gmra.mxu0 %v446
        %v2436 = vpop.f32.mrf.mxu0
        %v2437 = vadd.f32 %v809, %v2436
        %v2438 = vpop.f32.mrf.mxu0
        %2439 = vmatprep.mubr.f32.mxu0 %v452
        %2440 = vmatmul.mubr.f32.gmra.mxu0 %v451
        %v2441 = vpop.f32.mrf.mxu0
        %v2442 = vadd.f32 %v809, %v2441
        %v2443 = vpop.f32.mrf.mxu0
        %2444 = vmatprep.mubr.f32.mxu0 %v457
        %2445 = vmatmul.mubr.f32.gmra.mxu0 %v456
        %v2446 = vpop.f32.mrf.mxu0
        %v2447 = vadd.f32 %v809, %v2446
        %v2448 = vpop.f32.mrf.mxu0
        %2449 = vmatprep.mubr.f32.mxu0 %v462
        %2450 = vmatmul.mubr.f32.gmra.mxu0 %v461
        %v2451 = vpop.f32.mrf.mxu0
        %v2452 = vadd.f32 %v809, %v2451
        %v2453 = vpop.f32.mrf.mxu0
        %2454 = vmatprep.mubr.f32.mxu0 %v467
        %2455 = vmatmul.mubr.f32.gmra.mxu0 %v466
        %v2456 = vpop.f32.mrf.mxu0
        %v2457 = vadd.f32 %v809, %v2456
        %v2458 = vpop.f32.mrf.mxu0
        %2459 = vmatprep.mubr.f32.mxu0 %v472
        %2460 = vmatmul.mubr.f32.gmra.mxu0 %v471
        %v2461 = vpop.f32.mrf.mxu0
        %v2462 = vadd.f32 %v809, %v2461
        %v2463 = vpop.f32.mrf.mxu0
        %2464 = vmatprep.mubr.f32.mxu0 %v477
        %2465 = vmatmul.mubr.f32.gmra.mxu0 %v476
        %v2466 = vpop.f32.mrf.mxu0
        %v2467 = vadd.f32 %v809, %v2466
        %v2468 = vpop.f32.mrf.mxu0
        %2469 = vmatprep.mubr.f32.mxu0 %v482
        %2470 = vmatmul.mubr.f32.gmra.mxu0 %v481
        %v2471 = vpop.f32.mrf.mxu0
        %v2472 = vadd.f32 %v809, %v2471
        %v2473 = vpop.f32.mrf.mxu0
        %2474 = vmatprep.mubr.f32.mxu0 %v487
        %2475 = vmatmul.mubr.f32.gmra.mxu0 %v486
        %v2476 = vpop.f32.mrf.mxu0
        %v2477 = vadd.f32 %v809, %v2476
        %v2478 = vpop.f32.mrf.mxu0
        %2479 = vmatprep.mubr.f32.mxu0 %v492
        %2480 = vmatmul.mubr.f32.gmra.mxu0 %v491
        %v2481 = vpop.f32.mrf.mxu0
        %v2482 = vadd.f32 %v809, %v2481
        %v2483 = vpop.f32.mrf.mxu0
        %2484 = vmatprep.mubr.f32.mxu0 %v497
        %2485 = vmatmul.mubr.f32.gmra.mxu0 %v496
        %v2486 = vpop.f32.mrf.mxu0
        %v2487 = vadd.f32 %v809, %v2486
        %v2488 = vpop.f32.mrf.mxu0
        %2489 = vmatprep.mubr.f32.mxu0 %v502
        %2490 = vmatmul.mubr.f32.gmra.mxu0 %v501
        %v2491 = vpop.f32.mrf.mxu0
        %v2492 = vadd.f32 %v809, %v2491
        %v2493 = vpop.f32.mrf.mxu0
        %2494 = vmatprep.mubr.f32.mxu0 %v507
        %2495 = vmatmul.mubr.f32.gmra.mxu0 %v506
        %v2496 = vpop.f32.mrf.mxu0
        %v2497 = vadd.f32 %v809, %v2496
        %v2498 = vpop.f32.mrf.mxu0
        %2499 = vmatprep.mubr.f32.mxu0 %v512
        %2500 = vmatmul.mubr.f32.gmra.mxu0 %v511
        %v2501 = vpop.f32.mrf.mxu0
        %v2502 = vadd.f32 %v809, %v2501
        %v2503 = vpop.f32.mrf.mxu0
        %2504 = vmatprep.mubr.f32.mxu0 %v517
        %2505 = vmatmul.mubr.f32.gmra.mxu0 %v516
        %v2506 = vpop.f32.mrf.mxu0
        %v2507 = vadd.f32 %v809, %v2506
        %v2508 = vpop.f32.mrf.mxu0
        %2509 = vmatprep.mubr.f32.mxu0 %v522
        %2510 = vmatmul.mubr.f32.gmra.mxu0 %v521
        %v2511 = vpop.f32.mrf.mxu0
        %v2512 = vadd.f32 %v809, %v2511
        %v2513 = vpop.f32.mrf.mxu0
        %2514 = vmatprep.mubr.f32.mxu0 %v527
        %2515 = vmatmul.mubr.f32.gmra.mxu0 %v526
        %v2516 = vpop.f32.mrf.mxu0
        %v2517 = vadd.f32 %v809, %v2516
        %v2518 = vpop.f32.mrf.mxu0
        %2519 = vmatprep.mubr.f32.mxu0 %v532
        %2520 = vmatmul.mubr.f32.gmra.mxu0 %v531
        %v2521 = vpop.f32.mrf.mxu0
        %v2522 = vadd.f32 %v809, %v2521
        %v2523 = vpop.f32.mrf.mxu0
        %2524 = vmatprep.mubr.f32.mxu0 %v537
        %2525 = vmatmul.mubr.f32.gmra.mxu0 %v536
        %v2526 = vpop.f32.mrf.mxu0
        %v2527 = vadd.f32 %v809, %v2526
        %v2528 = vpop.f32.mrf.mxu0
        %2529 = vmatprep.mubr.f32.mxu0 %v542
        %2530 = vmatmul.mubr.f32.gmra.mxu0 %v541
        %v2531 = vpop.f32.mrf.mxu0
        %v2532 = vadd.f32 %v809, %v2531
        %v2533 = vpop.f32.mrf.mxu0
        %2534 = vmatprep.mubr.f32.mxu0 %v547
        %2535 = vmatmul.mubr.f32.gmra.mxu0 %v546
        %v2536 = vpop.f32.mrf.mxu0
        %v2537 = vadd.f32 %v809, %v2536
        %v2538 = vpop.f32.mrf.mxu0
        %2539 = vmatprep.mubr.f32.mxu0 %v552
        %2540 = vmatmul.mubr.f32.gmra.mxu0 %v551
        %v2541 = vpop.f32.mrf.mxu0
        %v2542 = vadd.f32 %v809, %v2541
        %v2543 = vpop.f32.mrf.mxu0
        %2544 = vdwg.mxu0
        %2545 = vmatprep.subr.mxu0 0.0
        %2546 = vmatpush1.msra.mxu0 %v699
        %2547 = vmatprep.subr.mxu0 0.0
        %2548 = vmatpush1.msra.mxu0 %v696
        %2549 = vmatprep.subr.mxu0 0.0
        %2550 = vmatpush1.msra.mxu0 %v693
        %2551 = vmatprep.subr.mxu0 0.0
        %2552 = vmatpush1.msra.mxu0 %v690
        %2553 = vmatprep.subr.mxu0 0.0
        %2554 = vmatpush1.msra.mxu0 %v687
        %2555 = vmatprep.subr.mxu0 0.0
        %2556 = vmatpush1.msra.mxu0 %v684
        %2557 = vmatprep.subr.mxu0 0.0
        %2558 = vmatpush1.msra.mxu0 %v681
        %2559 = vmatprep.subr.mxu0 0.0
        %2560 = vmatpush1.msra.mxu0 %v678
        %2561 = vmatprep.subr.mxu0 0.0
        %2562 = vmatpush1.msra.mxu0 %v675
        %2563 = vmatprep.subr.mxu0 0.0
        %2564 = vmatpush1.msra.mxu0 %v672
        %2565 = vmatprep.subr.mxu0 0.0
        %2566 = vmatpush1.msra.mxu0 %v669
        %2567 = vmatprep.subr.mxu0 0.0
        %2568 = vmatpush1.msra.mxu0 %v666
        %2569 = vmatprep.subr.mxu0 0.0
        %2570 = vmatpush1.msra.mxu0 %v663
        %2571 = vmatprep.subr.mxu0 0.0
        %2572 = vmatpush1.msra.mxu0 %v660
        %2573 = vmatprep.subr.mxu0 0.0
        %2574 = vmatpush1.msra.mxu0 %v657
        %2575 = vmatprep.subr.mxu0 0.0
        %2576 = vmatpush1.msra.mxu0 %v654
        %2577 = vmatprep.subr.mxu0 0.0
        %2578 = vmatpush2.msra.mxu0 %v747
        %2579 = vmatprep.subr.mxu0 0.0
        %2580 = vmatpush2.msra.mxu0 %v744
        %2581 = vmatprep.subr.mxu0 0.0
        %2582 = vmatpush2.msra.mxu0 %v741
        %2583 = vmatprep.subr.mxu0 0.0
        %2584 = vmatpush2.msra.mxu0 %v738
        %2585 = vmatprep.subr.mxu0 0.0
        %2586 = vmatpush2.msra.mxu0 %v735
        %2587 = vmatprep.subr.mxu0 0.0
        %2588 = vmatpush2.msra.mxu0 %v732
        %2589 = vmatprep.subr.mxu0 0.0
        %2590 = vmatpush2.msra.mxu0 %v729
        %2591 = vmatprep.subr.mxu0 0.0
        %2592 = vmatpush2.msra.mxu0 %v726
        %2593 = vmatprep.subr.mxu0 0.0
        %2594 = vmatpush2.msra.mxu0 %v723
        %2595 = vmatprep.subr.mxu0 0.0
        %2596 = vmatpush2.msra.mxu0 %v720
        %2597 = vmatprep.subr.mxu0 0.0
        %2598 = vmatpush2.msra.mxu0 %v717
        %2599 = vmatprep.subr.mxu0 0.0
        %2600 = vmatpush2.msra.mxu0 %v714
        %2601 = vmatprep.subr.mxu0 0.0
        %2602 = vmatpush2.msra.mxu0 %v711
        %2603 = vmatprep.subr.mxu0 0.0
        %2604 = vmatpush2.msra.mxu0 %v708
        %2605 = vmatprep.subr.mxu0 0.0
        %2606 = vmatpush2.msra.mxu0 %v705
        %2607 = vmatprep.subr.mxu0 0.0
        %2608 = vmatpush2.msra.mxu0 %v702
        %2609 = vmatprep.mubr.f32.mxu0 %v239
        %2610 = vmatmul.mubr.f32.gmra.mxu0 %v238
        %v2611 = vpop.f32.mrf.mxu0
        %v2612 = vadd.f32 %v2227, %v2611
        %v2613 = vpop.f32.mrf.mxu0
        %2614 = vmatprep.mubr.f32.mxu0 %v244
        %2615 = vmatmul.mubr.f32.gmra.mxu0 %v243
        %v2616 = vpop.f32.mrf.mxu0
        %v2617 = vadd.f32 %v2232, %v2616
        %v2618 = vpop.f32.mrf.mxu0
        %2619 = vmatprep.mubr.f32.mxu0 %v249
        %2620 = vmatmul.mubr.f32.gmra.mxu0 %v248
        %v2621 = vpop.f32.mrf.mxu0
        %v2622 = vadd.f32 %v2237, %v2621
        %v2623 = vpop.f32.mrf.mxu0
        %2624 = vmatprep.mubr.f32.mxu0 %v254
        %2625 = vmatmul.mubr.f32.gmra.mxu0 %v253
        %v2626 = vpop.f32.mrf.mxu0
        %v2627 = vadd.f32 %v2242, %v2626
        %v2628 = vpop.f32.mrf.mxu0
        %2629 = vmatprep.mubr.f32.mxu0 %v259
        %2630 = vmatmul.mubr.f32.gmra.mxu0 %v258
        %v2631 = vpop.f32.mrf.mxu0
        %v2632 = vadd.f32 %v2247, %v2631
        %v2633 = vpop.f32.mrf.mxu0
        %2634 = vmatprep.mubr.f32.mxu0 %v264
        %2635 = vmatmul.mubr.f32.gmra.mxu0 %v263
        %v2636 = vpop.f32.mrf.mxu0
        %v2637 = vadd.f32 %v2252, %v2636
        %v2638 = vpop.f32.mrf.mxu0
        %2639 = vmatprep.mubr.f32.mxu0 %v269
        %2640 = vmatmul.mubr.f32.gmra.mxu0 %v268
        %v2641 = vpop.f32.mrf.mxu0
        %v2642 = vadd.f32 %v2257, %v2641
        %v2643 = vpop.f32.mrf.mxu0
        %2644 = vmatprep.mubr.f32.mxu0 %v274
        %2645 = vmatmul.mubr.f32.gmra.mxu0 %v273
        %v2646 = vpop.f32.mrf.mxu0
        %v2647 = vadd.f32 %v2262, %v2646
        %v2648 = vpop.f32.mrf.mxu0
        %2649 = vmatprep.mubr.f32.mxu0 %v279
        %2650 = vmatmul.mubr.f32.gmra.mxu0 %v278
        %v2651 = vpop.f32.mrf.mxu0
        %v2652 = vadd.f32 %v2267, %v2651
        %v2653 = vpop.f32.mrf.mxu0
        %2654 = vmatprep.mubr.f32.mxu0 %v284
        %2655 = vmatmul.mubr.f32.gmra.mxu0 %v283
        %v2656 = vpop.f32.mrf.mxu0
        %v2657 = vadd.f32 %v2272, %v2656
        %v2658 = vpop.f32.mrf.mxu0
        %2659 = vmatprep.mubr.f32.mxu0 %v289
        %2660 = vmatmul.mubr.f32.gmra.mxu0 %v288
        %v2661 = vpop.f32.mrf.mxu0
        %v2662 = vadd.f32 %v2277, %v2661
        %v2663 = vpop.f32.mrf.mxu0
        %2664 = vmatprep.mubr.f32.mxu0 %v294
        %2665 = vmatmul.mubr.f32.gmra.mxu0 %v293
        %v2666 = vpop.f32.mrf.mxu0
        %v2667 = vadd.f32 %v2282, %v2666
        %v2668 = vpop.f32.mrf.mxu0
        %2669 = vmatprep.mubr.f32.mxu0 %v299
        %2670 = vmatmul.mubr.f32.gmra.mxu0 %v298
        %v2671 = vpop.f32.mrf.mxu0
        %v2672 = vadd.f32 %v2287, %v2671
        %v2673 = vpop.f32.mrf.mxu0
        %2674 = vmatprep.mubr.f32.mxu0 %v304
        %2675 = vmatmul.mubr.f32.gmra.mxu0 %v303
        %v2676 = vpop.f32.mrf.mxu0
        %v2677 = vadd.f32 %v2292, %v2676
        %v2678 = vpop.f32.mrf.mxu0
        %2679 = vmatprep.mubr.f32.mxu0 %v309
        %2680 = vmatmul.mubr.f32.gmra.mxu0 %v308
        %v2681 = vpop.f32.mrf.mxu0
        %v2682 = vadd.f32 %v2297, %v2681
        %v2683 = vpop.f32.mrf.mxu0
        %2684 = vmatprep.mubr.f32.mxu0 %v314
        %2685 = vmatmul.mubr.f32.gmra.mxu0 %v313
        %v2686 = vpop.f32.mrf.mxu0
        %v2687 = vadd.f32 %v2302, %v2686
        %v2688 = vpop.f32.mrf.mxu0
        %2689 = vmatprep.mubr.f32.mxu0 %v319
        %2690 = vmatmul.mubr.f32.gmra.mxu0 %v318
        %v2691 = vpop.f32.mrf.mxu0
        %v2692 = vadd.f32 %v2307, %v2691
        %v2693 = vpop.f32.mrf.mxu0
        %2694 = vmatprep.mubr.f32.mxu0 %v324
        %2695 = vmatmul.mubr.f32.gmra.mxu0 %v323
        %v2696 = vpop.f32.mrf.mxu0
        %v2697 = vadd.f32 %v2312, %v2696
        %v2698 = vpop.f32.mrf.mxu0
        %2699 = vmatprep.mubr.f32.mxu0 %v329
        %2700 = vmatmul.mubr.f32.gmra.mxu0 %v328
        %v2701 = vpop.f32.mrf.mxu0
        %v2702 = vadd.f32 %v2317, %v2701
        %v2703 = vpop.f32.mrf.mxu0
        %2704 = vmatprep.mubr.f32.mxu0 %v334
        %2705 = vmatmul.mubr.f32.gmra.mxu0 %v333
        %v2706 = vpop.f32.mrf.mxu0
        %v2707 = vadd.f32 %v2322, %v2706
        %v2708 = vpop.f32.mrf.mxu0
        %2709 = vmatprep.mubr.f32.mxu0 %v339
        %2710 = vmatmul.mubr.f32.gmra.mxu0 %v338
        %v2711 = vpop.f32.mrf.mxu0
        %v2712 = vadd.f32 %v2327, %v2711
        %v2713 = vpop.f32.mrf.mxu0
        %2714 = vmatprep.mubr.f32.mxu0 %v344
        %2715 = vmatmul.mubr.f32.gmra.mxu0 %v343
        %v2716 = vpop.f32.mrf.mxu0
        %v2717 = vadd.f32 %v2332, %v2716
        %v2718 = vpop.f32.mrf.mxu0
        %2719 = vmatprep.mubr.f32.mxu0 %v349
        %2720 = vmatmul.mubr.f32.gmra.mxu0 %v348
        %v2721 = vpop.f32.mrf.mxu0
        %v2722 = vadd.f32 %v2337, %v2721
        %v2723 = vpop.f32.mrf.mxu0
        %2724 = vmatprep.mubr.f32.mxu0 %v354
        %2725 = vmatmul.mubr.f32.gmra.mxu0 %v353
        %v2726 = vpop.f32.mrf.mxu0
        %v2727 = vadd.f32 %v2342, %v2726
        %v2728 = vpop.f32.mrf.mxu0
        %2729 = vmatprep.mubr.f32.mxu0 %v359
        %2730 = vmatmul.mubr.f32.gmra.mxu0 %v358
        %v2731 = vpop.f32.mrf.mxu0
        %v2732 = vadd.f32 %v2347, %v2731
        %v2733 = vpop.f32.mrf.mxu0
        %2734 = vmatprep.mubr.f32.mxu0 %v364
        %2735 = vmatmul.mubr.f32.gmra.mxu0 %v363
        %v2736 = vpop.f32.mrf.mxu0
        %v2737 = vadd.f32 %v2352, %v2736
        %v2738 = vpop.f32.mrf.mxu0
        %2739 = vmatprep.mubr.f32.mxu0 %v369
        %2740 = vmatmul.mubr.f32.gmra.mxu0 %v368
        %v2741 = vpop.f32.mrf.mxu0
        %v2742 = vadd.f32 %v2357, %v2741
        %v2743 = vpop.f32.mrf.mxu0
        %2744 = vmatprep.mubr.f32.mxu0 %v374
        %2745 = vmatmul.mubr.f32.gmra.mxu0 %v373
        %v2746 = vpop.f32.mrf.mxu0
        %v2747 = vadd.f32 %v2362, %v2746
        %v2748 = vpop.f32.mrf.mxu0
        %2749 = vmatprep.mubr.f32.mxu0 %v379
        %2750 = vmatmul.mubr.f32.gmra.mxu0 %v378
        %v2751 = vpop.f32.mrf.mxu0
        %v2752 = vadd.f32 %v2367, %v2751
        %v2753 = vpop.f32.mrf.mxu0
        %2754 = vmatprep.mubr.f32.mxu0 %v384
        %2755 = vmatmul.mubr.f32.gmra.mxu0 %v383
        %v2756 = vpop.f32.mrf.mxu0
        %v2757 = vadd.f32 %v2372, %v2756
        %v2758 = vpop.f32.mrf.mxu0
        %2759 = vmatprep.mubr.f32.mxu0 %v389
        %2760 = vmatmul.mubr.f32.gmra.mxu0 %v388
        %v2761 = vpop.f32.mrf.mxu0
        %v2762 = vadd.f32 %v2377, %v2761
        %v2763 = vpop.f32.mrf.mxu0
        %2764 = vmatprep.mubr.f32.mxu0 %v394
        %2765 = vmatmul.mubr.f32.gmra.mxu0 %v393
        %v2766 = vpop.f32.mrf.mxu0
        %v2767 = vadd.f32 %v2382, %v2766
        %v2768 = vpop.f32.mrf.mxu0
        %2769 = vmatprep.mubr.f32.mxu0 %v399
        %2770 = vmatmul.mubr.f32.gmra.mxu0 %v398
        %v2771 = vpop.f32.mrf.mxu0
        %v2772 = vadd.f32 %v2387, %v2771
        %v2773 = vpop.f32.mrf.mxu0
        %2774 = vmatprep.mubr.f32.mxu0 %v404
        %2775 = vmatmul.mubr.f32.gmra.mxu0 %v403
        %v2776 = vpop.f32.mrf.mxu0
        %v2777 = vadd.f32 %v2392, %v2776
        %v2778 = vpop.f32.mrf.mxu0
        %2779 = vmatprep.mubr.f32.mxu0 %v409
        %2780 = vmatmul.mubr.f32.gmra.mxu0 %v408
        %v2781 = vpop.f32.mrf.mxu0
        %v2782 = vadd.f32 %v2397, %v2781
        %v2783 = vpop.f32.mrf.mxu0
        %2784 = vmatprep.mubr.f32.mxu0 %v414
        %2785 = vmatmul.mubr.f32.gmra.mxu0 %v413
        %v2786 = vpop.f32.mrf.mxu0
        %v2787 = vadd.f32 %v2402, %v2786
        %v2788 = vpop.f32.mrf.mxu0
        %2789 = vmatprep.mubr.f32.mxu0 %v419
        %2790 = vmatmul.mubr.f32.gmra.mxu0 %v418
        %v2791 = vpop.f32.mrf.mxu0
        %v2792 = vadd.f32 %v2407, %v2791
        %v2793 = vpop.f32.mrf.mxu0
        %2794 = vmatprep.mubr.f32.mxu0 %v424
        %2795 = vmatmul.mubr.f32.gmra.mxu0 %v423
        %v2796 = vpop.f32.mrf.mxu0
        %v2797 = vadd.f32 %v2412, %v2796
        %v2798 = vpop.f32.mrf.mxu0
        %2799 = vmatprep.mubr.f32.mxu0 %v429
        %2800 = vmatmul.mubr.f32.gmra.mxu0 %v428
        %v2801 = vpop.f32.mrf.mxu0
        %v2802 = vadd.f32 %v2417, %v2801
        %v2803 = vpop.f32.mrf.mxu0
        %2804 = vmatprep.mubr.f32.mxu0 %v434
        %2805 = vmatmul.mubr.f32.gmra.mxu0 %v433
        %v2806 = vpop.f32.mrf.mxu0
        %v2807 = vadd.f32 %v2422, %v2806
        %v2808 = vpop.f32.mrf.mxu0
        %2809 = vmatprep.mubr.f32.mxu0 %v439
        %2810 = vmatmul.mubr.f32.gmra.mxu0 %v438
        %v2811 = vpop.f32.mrf.mxu0
        %v2812 = vadd.f32 %v2427, %v2811
        %v2813 = vpop.f32.mrf.mxu0
        %2814 = vmatprep.mubr.f32.mxu0 %v444
        %2815 = vmatmul.mubr.f32.gmra.mxu0 %v443
        %v2816 = vpop.f32.mrf.mxu0
        %v2817 = vadd.f32 %v2432, %v2816
        %v2818 = vpop.f32.mrf.mxu0
        %2819 = vmatprep.mubr.f32.mxu0 %v449
        %2820 = vmatmul.mubr.f32.gmra.mxu0 %v448
        %v2821 = vpop.f32.mrf.mxu0
        %v2822 = vadd.f32 %v2437, %v2821
        %v2823 = vpop.f32.mrf.mxu0
        %2824 = vmatprep.mubr.f32.mxu0 %v454
        %2825 = vmatmul.mubr.f32.gmra.mxu0 %v453
        %v2826 = vpop.f32.mrf.mxu0
        %v2827 = vadd.f32 %v2442, %v2826
        %v2828 = vpop.f32.mrf.mxu0
        %2829 = vmatprep.mubr.f32.mxu0 %v459
        %2830 = vmatmul.mubr.f32.gmra.mxu0 %v458
        %v2831 = vpop.f32.mrf.mxu0
        %v2832 = vadd.f32 %v2447, %v2831
        %v2833 = vpop.f32.mrf.mxu0
        %2834 = vmatprep.mubr.f32.mxu0 %v464
        %2835 = vmatmul.mubr.f32.gmra.mxu0 %v463
        %v2836 = vpop.f32.mrf.mxu0
        %v2837 = vadd.f32 %v2452, %v2836
        %v2838 = vpop.f32.mrf.mxu0
        %2839 = vmatprep.mubr.f32.mxu0 %v469
        %2840 = vmatmul.mubr.f32.gmra.mxu0 %v468
        %v2841 = vpop.f32.mrf.mxu0
        %v2842 = vadd.f32 %v2457, %v2841
        %v2843 = vpop.f32.mrf.mxu0
        %2844 = vmatprep.mubr.f32.mxu0 %v474
        %2845 = vmatmul.mubr.f32.gmra.mxu0 %v473
        %v2846 = vpop.f32.mrf.mxu0
        %v2847 = vadd.f32 %v2462, %v2846
        %v2848 = vpop.f32.mrf.mxu0
        %2849 = vmatprep.mubr.f32.mxu0 %v479
        %2850 = vmatmul.mubr.f32.gmra.mxu0 %v478
        %v2851 = vpop.f32.mrf.mxu0
        %v2852 = vadd.f32 %v2467, %v2851
        %v2853 = vpop.f32.mrf.mxu0
        %2854 = vmatprep.mubr.f32.mxu0 %v484
        %2855 = vmatmul.mubr.f32.gmra.mxu0 %v483
        %v2856 = vpop.f32.mrf.mxu0
        %v2857 = vadd.f32 %v2472, %v2856
        %v2858 = vpop.f32.mrf.mxu0
        %2859 = vmatprep.mubr.f32.mxu0 %v489
        %2860 = vmatmul.mubr.f32.gmra.mxu0 %v488
        %v2861 = vpop.f32.mrf.mxu0
        %v2862 = vadd.f32 %v2477, %v2861
        %v2863 = vpop.f32.mrf.mxu0
        %2864 = vmatprep.mubr.f32.mxu0 %v494
        %2865 = vmatmul.mubr.f32.gmra.mxu0 %v493
        %v2866 = vpop.f32.mrf.mxu0
        %v2867 = vadd.f32 %v2482, %v2866
        %v2868 = vpop.f32.mrf.mxu0
        %2869 = vmatprep.mubr.f32.mxu0 %v499
        %2870 = vmatmul.mubr.f32.gmra.mxu0 %v498
        %v2871 = vpop.f32.mrf.mxu0
        %v2872 = vadd.f32 %v2487, %v2871
        %v2873 = vpop.f32.mrf.mxu0
        %2874 = vmatprep.mubr.f32.mxu0 %v504
        %2875 = vmatmul.mubr.f32.gmra.mxu0 %v503
        %v2876 = vpop.f32.mrf.mxu0
        %v2877 = vadd.f32 %v2492, %v2876
        %v2878 = vpop.f32.mrf.mxu0
        %2879 = vmatprep.mubr.f32.mxu0 %v509
        %2880 = vmatmul.mubr.f32.gmra.mxu0 %v508
        %v2881 = vpop.f32.mrf.mxu0
        %v2882 = vadd.f32 %v2497, %v2881
        %v2883 = vpop.f32.mrf.mxu0
        %2884 = vmatprep.mubr.f32.mxu0 %v514
        %2885 = vmatmul.mubr.f32.gmra.mxu0 %v513
        %v2886 = vpop.f32.mrf.mxu0
        %v2887 = vadd.f32 %v2502, %v2886
        %v2888 = vpop.f32.mrf.mxu0
        %2889 = vmatprep.mubr.f32.mxu0 %v519
        %2890 = vmatmul.mubr.f32.gmra.mxu0 %v518
        %v2891 = vpop.f32.mrf.mxu0
        %v2892 = vadd.f32 %v2507, %v2891
        %v2893 = vpop.f32.mrf.mxu0
        %2894 = vmatprep.mubr.f32.mxu0 %v524
        %2895 = vmatmul.mubr.f32.gmra.mxu0 %v523
        %v2896 = vpop.f32.mrf.mxu0
        %v2897 = vadd.f32 %v2512, %v2896
        %v2898 = vpop.f32.mrf.mxu0
        %2899 = vmatprep.mubr.f32.mxu0 %v529
        %2900 = vmatmul.mubr.f32.gmra.mxu0 %v528
        %v2901 = vpop.f32.mrf.mxu0
        %v2902 = vadd.f32 %v2517, %v2901
        %v2903 = vpop.f32.mrf.mxu0
        %2904 = vmatprep.mubr.f32.mxu0 %v534
        %2905 = vmatmul.mubr.f32.gmra.mxu0 %v533
        %v2906 = vpop.f32.mrf.mxu0
        %v2907 = vadd.f32 %v2522, %v2906
        %v2908 = vpop.f32.mrf.mxu0
        %2909 = vmatprep.mubr.f32.mxu0 %v539
        %2910 = vmatmul.mubr.f32.gmra.mxu0 %v538
        %v2911 = vpop.f32.mrf.mxu0
        %v2912 = vadd.f32 %v2527, %v2911
        %v2913 = vpop.f32.mrf.mxu0
        %2914 = vmatprep.mubr.f32.mxu0 %v544
        %2915 = vmatmul.mubr.f32.gmra.mxu0 %v543
        %v2916 = vpop.f32.mrf.mxu0
        %v2917 = vadd.f32 %v2532, %v2916
        %v2918 = vpop.f32.mrf.mxu0
        %2919 = vmatprep.mubr.f32.mxu0 %v549
        %2920 = vmatmul.mubr.f32.gmra.mxu0 %v548
        %v2921 = vpop.f32.mrf.mxu0
        %v2922 = vadd.f32 %v2537, %v2921
        %v2923 = vpop.f32.mrf.mxu0
        %2924 = vmatprep.mubr.f32.mxu0 %v554
        %2925 = vmatmul.mubr.f32.gmra.mxu0 %v553
        %v2926 = vpop.f32.mrf.mxu0
        %v2927 = vadd.f32 %v2542, %v2926
        %v2928 = vpop.f32.mrf.mxu0
        %2929 = vdwg.mxu0
        %2930 = vmatprep.subr.mxu0 0.0
        %2931 = vmatpush1.msra.mxu0 %v795
        %2932 = vmatprep.subr.mxu0 0.0
        %2933 = vmatpush1.msra.mxu0 %v792
        %2934 = vmatprep.subr.mxu0 0.0
        %2935 = vmatpush1.msra.mxu0 %v789
        %2936 = vmatprep.subr.mxu0 0.0
        %2937 = vmatpush1.msra.mxu0 %v786
        %2938 = vmatprep.subr.mxu0 0.0
        %2939 = vmatpush1.msra.mxu0 %v783
        %2940 = vmatprep.subr.mxu0 0.0
        %2941 = vmatpush1.msra.mxu0 %v780
        %2942 = vmatprep.subr.mxu0 0.0
        %2943 = vmatpush1.msra.mxu0 %v777
        %2944 = vmatprep.subr.mxu0 0.0
        %2945 = vmatpush1.msra.mxu0 %v774
        %2946 = vmatprep.subr.mxu0 0.0
        %2947 = vmatpush1.msra.mxu0 %v771
        %2948 = vmatprep.subr.mxu0 0.0
        %2949 = vmatpush1.msra.mxu0 %v768
        %2950 = vmatprep.subr.mxu0 0.0
        %2951 = vmatpush1.msra.mxu0 %v765
        %2952 = vmatprep.subr.mxu0 0.0
        %2953 = vmatpush1.msra.mxu0 %v762
        %2954 = vmatprep.subr.mxu0 0.0
        %2955 = vmatpush1.msra.mxu0 %v759
        %2956 = vmatprep.subr.mxu0 0.0
        %2957 = vmatpush1.msra.mxu0 %v756
        %2958 = vmatprep.subr.mxu0 0.0
        %2959 = vmatpush1.msra.mxu0 %v753
        %2960 = vmatprep.subr.mxu0 0.0
        %2961 = vmatpush1.msra.mxu0 %v750
        %2962 = vmatprep.subr.mxu0 0.0
        %2963 = vmatpush2.msra.mxu0 0.0
        %2964 = vmatprep.subr.mxu0 0.0
        %2965 = vmatpush2.msra.mxu0 0.0
        %2966 = vmatprep.subr.mxu0 0.0
        %2967 = vmatpush2.msra.mxu0 0.0
        %2968 = vmatprep.subr.mxu0 0.0
        %2969 = vmatpush2.msra.mxu0 0.0
        %2970 = vmatprep.subr.mxu0 0.0
        %2971 = vmatpush2.msra.mxu0 0.0
        %2972 = vmatprep.subr.mxu0 0.0
        %2973 = vmatpush2.msra.mxu0 0.0
        %2974 = vmatprep.subr.mxu0 0.0
        %2975 = vmatpush2.msra.mxu0 0.0
        %2976 = vmatprep.subr.mxu0 0.0
        %2977 = vmatpush2.msra.mxu0 0.0
        %2978 = vmatprep.subr.mxu0 0.0
        %2979 = vmatpush2.msra.mxu0 0.0
        %2980 = vmatprep.subr.mxu0 0.0
        %2981 = vmatpush2.msra.mxu0 0.0
        %2982 = vmatprep.subr.mxu0 0.0
        %2983 = vmatpush2.msra.mxu0 0.0
        %2984 = vmatprep.subr.mxu0 0.0
        %2985 = vmatpush2.msra.mxu0 0.0
        %2986 = vmatprep.subr.mxu0 0.0
        %2987 = vmatpush2.msra.mxu0 0.0
        %2988 = vmatprep.subr.mxu0 0.0
        %2989 = vmatpush2.msra.mxu0 0.0
        %2990 = vmatprep.subr.mxu0 0.0
        %2991 = vmatpush2.msra.mxu0 0.0
        %2992 = vmatprep.subr.mxu0 0.0
        %2993 = vmatpush2.msra.mxu0 0.0
        %2994 = vmatprep.mubr.f32.mxu0 0.0
        %2995 = vmatmul.mubr.f32.gmra.mxu0 %v240
        %v2996 = vpop.f32.mrf.mxu0
        %v2997 = vadd.f32 %v2612, %v2996
        %v2998 = vpop.f32.mrf.mxu0
        %2999 = vmatprep.mubr.f32.mxu0 0.0
        %3000 = vmatmul.mubr.f32.gmra.mxu0 %v245
        %v3001 = vpop.f32.mrf.mxu0
        %v3002 = vadd.f32 %v2617, %v3001
        %v3003 = vpop.f32.mrf.mxu0
        %3004 = vmatprep.mubr.f32.mxu0 0.0
        %3005 = vmatmul.mubr.f32.gmra.mxu0 %v250
        %v3006 = vpop.f32.mrf.mxu0
        %v3007 = vadd.f32 %v2622, %v3006
        %v3008 = vpop.f32.mrf.mxu0
        %3009 = vmatprep.mubr.f32.mxu0 0.0
        %3010 = vmatmul.mubr.f32.gmra.mxu0 %v255
        %v3011 = vpop.f32.mrf.mxu0
        %v3012 = vadd.f32 %v2627, %v3011
        %v3013 = vpop.f32.mrf.mxu0
        %3014 = vmatprep.mubr.f32.mxu0 0.0
        %3015 = vmatmul.mubr.f32.gmra.mxu0 %v260
        %v3016 = vpop.f32.mrf.mxu0
        %v3017 = vadd.f32 %v2632, %v3016
        %v3018 = vpop.f32.mrf.mxu0
        %3019 = vmatprep.mubr.f32.mxu0 0.0
        %3020 = vmatmul.mubr.f32.gmra.mxu0 %v265
        %v3021 = vpop.f32.mrf.mxu0
        %v3022 = vadd.f32 %v2637, %v3021
        %v3023 = vpop.f32.mrf.mxu0
        %3024 = vmatprep.mubr.f32.mxu0 0.0
        %3025 = vmatmul.mubr.f32.gmra.mxu0 %v270
        %v3026 = vpop.f32.mrf.mxu0
        %v3027 = vadd.f32 %v2642, %v3026
        %v3028 = vpop.f32.mrf.mxu0
        %3029 = vmatprep.mubr.f32.mxu0 0.0
        %3030 = vmatmul.mubr.f32.gmra.mxu0 %v275
        %v3031 = vpop.f32.mrf.mxu0
        %v3032 = vadd.f32 %v2647, %v3031
        %v3033 = vpop.f32.mrf.mxu0
        %3034 = vmatprep.mubr.f32.mxu0 0.0
        %3035 = vmatmul.mubr.f32.gmra.mxu0 %v280
        %v3036 = vpop.f32.mrf.mxu0
        %v3037 = vadd.f32 %v2652, %v3036
        %v3038 = vpop.f32.mrf.mxu0
        %3039 = vmatprep.mubr.f32.mxu0 0.0
        %3040 = vmatmul.mubr.f32.gmra.mxu0 %v285
        %v3041 = vpop.f32.mrf.mxu0
        %v3042 = vadd.f32 %v2657, %v3041
        %v3043 = vpop.f32.mrf.mxu0
        %3044 = vmatprep.mubr.f32.mxu0 0.0
        %3045 = vmatmul.mubr.f32.gmra.mxu0 %v290
        %v3046 = vpop.f32.mrf.mxu0
        %v3047 = vadd.f32 %v2662, %v3046
        %v3048 = vpop.f32.mrf.mxu0
        %3049 = vmatprep.mubr.f32.mxu0 0.0
        %3050 = vmatmul.mubr.f32.gmra.mxu0 %v295
        %v3051 = vpop.f32.mrf.mxu0
        %v3052 = vadd.f32 %v2667, %v3051
        %v3053 = vpop.f32.mrf.mxu0
        %3054 = vmatprep.mubr.f32.mxu0 0.0
        %3055 = vmatmul.mubr.f32.gmra.mxu0 %v300
        %v3056 = vpop.f32.mrf.mxu0
        %v3057 = vadd.f32 %v2672, %v3056
        %v3058 = vpop.f32.mrf.mxu0
        %3059 = vmatprep.mubr.f32.mxu0 0.0
        %3060 = vmatmul.mubr.f32.gmra.mxu0 %v305
        %v3061 = vpop.f32.mrf.mxu0
        %v3062 = vadd.f32 %v2677, %v3061
        %v3063 = vpop.f32.mrf.mxu0
        %3064 = vmatprep.mubr.f32.mxu0 0.0
        %3065 = vmatmul.mubr.f32.gmra.mxu0 %v310
        %v3066 = vpop.f32.mrf.mxu0
        %v3067 = vadd.f32 %v2682, %v3066
        %v3068 = vpop.f32.mrf.mxu0
        %3069 = vmatprep.mubr.f32.mxu0 0.0
        %3070 = vmatmul.mubr.f32.gmra.mxu0 %v315
        %v3071 = vpop.f32.mrf.mxu0
        %v3072 = vadd.f32 %v2687, %v3071
        %v3073 = vpop.f32.mrf.mxu0
        %3074 = vmatprep.mubr.f32.mxu0 0.0
        %3075 = vmatmul.mubr.f32.gmra.mxu0 %v320
        %v3076 = vpop.f32.mrf.mxu0
        %v3077 = vadd.f32 %v2692, %v3076
        %v3078 = vpop.f32.mrf.mxu0
        %3079 = vmatprep.mubr.f32.mxu0 0.0
        %3080 = vmatmul.mubr.f32.gmra.mxu0 %v325
        %v3081 = vpop.f32.mrf.mxu0
        %v3082 = vadd.f32 %v2697, %v3081
        %v3083 = vpop.f32.mrf.mxu0
        %3084 = vmatprep.mubr.f32.mxu0 0.0
        %3085 = vmatmul.mubr.f32.gmra.mxu0 %v330
        %v3086 = vpop.f32.mrf.mxu0
        %v3087 = vadd.f32 %v2702, %v3086
        %v3088 = vpop.f32.mrf.mxu0
        %3089 = vmatprep.mubr.f32.mxu0 0.0
        %3090 = vmatmul.mubr.f32.gmra.mxu0 %v335
        %v3091 = vpop.f32.mrf.mxu0
        %v3092 = vadd.f32 %v2707, %v3091
        %v3093 = vpop.f32.mrf.mxu0
        %3094 = vmatprep.mubr.f32.mxu0 0.0
        %3095 = vmatmul.mubr.f32.gmra.mxu0 %v340
        %v3096 = vpop.f32.mrf.mxu0
        %v3097 = vadd.f32 %v2712, %v3096
        %v3098 = vpop.f32.mrf.mxu0
        %3099 = vmatprep.mubr.f32.mxu0 0.0
        %3100 = vmatmul.mubr.f32.gmra.mxu0 %v345
        %v3101 = vpop.f32.mrf.mxu0
        %v3102 = vadd.f32 %v2717, %v3101
        %v3103 = vpop.f32.mrf.mxu0
        %3104 = vmatprep.mubr.f32.mxu0 0.0
        %3105 = vmatmul.mubr.f32.gmra.mxu0 %v350
        %v3106 = vpop.f32.mrf.mxu0
        %v3107 = vadd.f32 %v2722, %v3106
        %v3108 = vpop.f32.mrf.mxu0
        %3109 = vmatprep.mubr.f32.mxu0 0.0
        %3110 = vmatmul.mubr.f32.gmra.mxu0 %v355
        %v3111 = vpop.f32.mrf.mxu0
        %v3112 = vadd.f32 %v2727, %v3111
        %v3113 = vpop.f32.mrf.mxu0
        %3114 = vmatprep.mubr.f32.mxu0 0.0
        %3115 = vmatmul.mubr.f32.gmra.mxu0 %v360
        %v3116 = vpop.f32.mrf.mxu0
        %v3117 = vadd.f32 %v2732, %v3116
        %v3118 = vpop.f32.mrf.mxu0
        %3119 = vmatprep.mubr.f32.mxu0 0.0
        %3120 = vmatmul.mubr.f32.gmra.mxu0 %v365
        %v3121 = vpop.f32.mrf.mxu0
        %v3122 = vadd.f32 %v2737, %v3121
        %v3123 = vpop.f32.mrf.mxu0
        %3124 = vmatprep.mubr.f32.mxu0 0.0
        %3125 = vmatmul.mubr.f32.gmra.mxu0 %v370
        %v3126 = vpop.f32.mrf.mxu0
        %v3127 = vadd.f32 %v2742, %v3126
        %v3128 = vpop.f32.mrf.mxu0
        %3129 = vmatprep.mubr.f32.mxu0 0.0
        %3130 = vmatmul.mubr.f32.gmra.mxu0 %v375
        %v3131 = vpop.f32.mrf.mxu0
        %v3132 = vadd.f32 %v2747, %v3131
        %v3133 = vpop.f32.mrf.mxu0
        %3134 = vmatprep.mubr.f32.mxu0 0.0
        %3135 = vmatmul.mubr.f32.gmra.mxu0 %v380
        %v3136 = vpop.f32.mrf.mxu0
        %v3137 = vadd.f32 %v2752, %v3136
        %v3138 = vpop.f32.mrf.mxu0
        %3139 = vmatprep.mubr.f32.mxu0 0.0
        %3140 = vmatmul.mubr.f32.gmra.mxu0 %v385
        %v3141 = vpop.f32.mrf.mxu0
        %v3142 = vadd.f32 %v2757, %v3141
        %v3143 = vpop.f32.mrf.mxu0
        %3144 = vmatprep.mubr.f32.mxu0 0.0
        %3145 = vmatmul.mubr.f32.gmra.mxu0 %v390
        %v3146 = vpop.f32.mrf.mxu0
        %v3147 = vadd.f32 %v2762, %v3146
        %v3148 = vpop.f32.mrf.mxu0
        %3149 = vmatprep.mubr.f32.mxu0 0.0
        %3150 = vmatmul.mubr.f32.gmra.mxu0 %v395
        %v3151 = vpop.f32.mrf.mxu0
        %v3152 = vadd.f32 %v2767, %v3151
        %v3153 = vpop.f32.mrf.mxu0
        %3154 = vmatprep.mubr.f32.mxu0 0.0
        %3155 = vmatmul.mubr.f32.gmra.mxu0 %v400
        %v3156 = vpop.f32.mrf.mxu0
        %v3157 = vadd.f32 %v2772, %v3156
        %v3158 = vpop.f32.mrf.mxu0
        %3159 = vmatprep.mubr.f32.mxu0 0.0
        %3160 = vmatmul.mubr.f32.gmra.mxu0 %v405
        %v3161 = vpop.f32.mrf.mxu0
        %v3162 = vadd.f32 %v2777, %v3161
        %v3163 = vpop.f32.mrf.mxu0
        %3164 = vmatprep.mubr.f32.mxu0 0.0
        %3165 = vmatmul.mubr.f32.gmra.mxu0 %v410
        %v3166 = vpop.f32.mrf.mxu0
        %v3167 = vadd.f32 %v2782, %v3166
        %v3168 = vpop.f32.mrf.mxu0
        %3169 = vmatprep.mubr.f32.mxu0 0.0
        %3170 = vmatmul.mubr.f32.gmra.mxu0 %v415
        %v3171 = vpop.f32.mrf.mxu0
        %v3172 = vadd.f32 %v2787, %v3171
        %v3173 = vpop.f32.mrf.mxu0
        %3174 = vmatprep.mubr.f32.mxu0 0.0
        %3175 = vmatmul.mubr.f32.gmra.mxu0 %v420
        %v3176 = vpop.f32.mrf.mxu0
        %v3177 = vadd.f32 %v2792, %v3176
        %v3178 = vpop.f32.mrf.mxu0
        %3179 = vmatprep.mubr.f32.mxu0 0.0
        %3180 = vmatmul.mubr.f32.gmra.mxu0 %v425
        %v3181 = vpop.f32.mrf.mxu0
        %v3182 = vadd.f32 %v2797, %v3181
        %v3183 = vpop.f32.mrf.mxu0
        %3184 = vmatprep.mubr.f32.mxu0 0.0
        %3185 = vmatmul.mubr.f32.gmra.mxu0 %v430
        %v3186 = vpop.f32.mrf.mxu0
        %v3187 = vadd.f32 %v2802, %v3186
        %v3188 = vpop.f32.mrf.mxu0
        %3189 = vmatprep.mubr.f32.mxu0 0.0
        %3190 = vmatmul.mubr.f32.gmra.mxu0 %v435
        %v3191 = vpop.f32.mrf.mxu0
        %v3192 = vadd.f32 %v2807, %v3191
        %v3193 = vpop.f32.mrf.mxu0
        %3194 = vmatprep.mubr.f32.mxu0 0.0
        %3195 = vmatmul.mubr.f32.gmra.mxu0 %v440
        %v3196 = vpop.f32.mrf.mxu0
        %v3197 = vadd.f32 %v2812, %v3196
        %v3198 = vpop.f32.mrf.mxu0
        %3199 = vmatprep.mubr.f32.mxu0 0.0
        %3200 = vmatmul.mubr.f32.gmra.mxu0 %v445
        %v3201 = vpop.f32.mrf.mxu0
        %v3202 = vadd.f32 %v2817, %v3201
        %v3203 = vpop.f32.mrf.mxu0
        %3204 = vmatprep.mubr.f32.mxu0 0.0
        %3205 = vmatmul.mubr.f32.gmra.mxu0 %v450
        %v3206 = vpop.f32.mrf.mxu0
        %v3207 = vadd.f32 %v2822, %v3206
        %v3208 = vpop.f32.mrf.mxu0
        %3209 = vmatprep.mubr.f32.mxu0 0.0
        %3210 = vmatmul.mubr.f32.gmra.mxu0 %v455
        %v3211 = vpop.f32.mrf.mxu0
        %v3212 = vadd.f32 %v2827, %v3211
        %v3213 = vpop.f32.mrf.mxu0
        %3214 = vmatprep.mubr.f32.mxu0 0.0
        %3215 = vmatmul.mubr.f32.gmra.mxu0 %v460
        %v3216 = vpop.f32.mrf.mxu0
        %v3217 = vadd.f32 %v2832, %v3216
        %v3218 = vpop.f32.mrf.mxu0
        %3219 = vmatprep.mubr.f32.mxu0 0.0
        %3220 = vmatmul.mubr.f32.gmra.mxu0 %v465
        %v3221 = vpop.f32.mrf.mxu0
        %v3222 = vadd.f32 %v2837, %v3221
        %v3223 = vpop.f32.mrf.mxu0
        %3224 = vmatprep.mubr.f32.mxu0 0.0
        %3225 = vmatmul.mubr.f32.gmra.mxu0 %v470
        %v3226 = vpop.f32.mrf.mxu0
        %v3227 = vadd.f32 %v2842, %v3226
        %v3228 = vpop.f32.mrf.mxu0
        %3229 = vmatprep.mubr.f32.mxu0 0.0
        %3230 = vmatmul.mubr.f32.gmra.mxu0 %v475
        %v3231 = vpop.f32.mrf.mxu0
        %v3232 = vadd.f32 %v2847, %v3231
        %v3233 = vpop.f32.mrf.mxu0
        %3234 = vmatprep.mubr.f32.mxu0 0.0
        %3235 = vmatmul.mubr.f32.gmra.mxu0 %v480
        %v3236 = vpop.f32.mrf.mxu0
        %v3237 = vadd.f32 %v2852, %v3236
        %v3238 = vpop.f32.mrf.mxu0
        %3239 = vmatprep.mubr.f32.mxu0 0.0
        %3240 = vmatmul.mubr.f32.gmra.mxu0 %v485
        %v3241 = vpop.f32.mrf.mxu0
        %v3242 = vadd.f32 %v2857, %v3241
        %v3243 = vpop.f32.mrf.mxu0
        %3244 = vmatprep.mubr.f32.mxu0 0.0
        %3245 = vmatmul.mubr.f32.gmra.mxu0 %v490
        %v3246 = vpop.f32.mrf.mxu0
        %v3247 = vadd.f32 %v2862, %v3246
        %v3248 = vpop.f32.mrf.mxu0
        %3249 = vmatprep.mubr.f32.mxu0 0.0
        %3250 = vmatmul.mubr.f32.gmra.mxu0 %v495
        %v3251 = vpop.f32.mrf.mxu0
        %v3252 = vadd.f32 %v2867, %v3251
        %v3253 = vpop.f32.mrf.mxu0
        %3254 = vmatprep.mubr.f32.mxu0 0.0
        %3255 = vmatmul.mubr.f32.gmra.mxu0 %v500
        %v3256 = vpop.f32.mrf.mxu0
        %v3257 = vadd.f32 %v2872, %v3256
        %v3258 = vpop.f32.mrf.mxu0
        %3259 = vmatprep.mubr.f32.mxu0 0.0
        %3260 = vmatmul.mubr.f32.gmra.mxu0 %v505
        %v3261 = vpop.f32.mrf.mxu0
        %v3262 = vadd.f32 %v2877, %v3261
        %v3263 = vpop.f32.mrf.mxu0
        %3264 = vmatprep.mubr.f32.mxu0 0.0
        %3265 = vmatmul.mubr.f32.gmra.mxu0 %v510
        %v3266 = vpop.f32.mrf.mxu0
        %v3267 = vadd.f32 %v2882, %v3266
        %v3268 = vpop.f32.mrf.mxu0
        %3269 = vmatprep.mubr.f32.mxu0 0.0
        %3270 = vmatmul.mubr.f32.gmra.mxu0 %v515
        %v3271 = vpop.f32.mrf.mxu0
        %v3272 = vadd.f32 %v2887, %v3271
        %v3273 = vpop.f32.mrf.mxu0
        %3274 = vmatprep.mubr.f32.mxu0 0.0
        %3275 = vmatmul.mubr.f32.gmra.mxu0 %v520
        %v3276 = vpop.f32.mrf.mxu0
        %v3277 = vadd.f32 %v2892, %v3276
        %v3278 = vpop.f32.mrf.mxu0
        %3279 = vmatprep.mubr.f32.mxu0 0.0
        %3280 = vmatmul.mubr.f32.gmra.mxu0 %v525
        %v3281 = vpop.f32.mrf.mxu0
        %v3282 = vadd.f32 %v2897, %v3281
        %v3283 = vpop.f32.mrf.mxu0
        %3284 = vmatprep.mubr.f32.mxu0 0.0
        %3285 = vmatmul.mubr.f32.gmra.mxu0 %v530
        %v3286 = vpop.f32.mrf.mxu0
        %v3287 = vadd.f32 %v2902, %v3286
        %v3288 = vpop.f32.mrf.mxu0
        %3289 = vmatprep.mubr.f32.mxu0 0.0
        %3290 = vmatmul.mubr.f32.gmra.mxu0 %v535
        %v3291 = vpop.f32.mrf.mxu0
        %v3292 = vadd.f32 %v2907, %v3291
        %v3293 = vpop.f32.mrf.mxu0
        %3294 = vmatprep.mubr.f32.mxu0 0.0
        %3295 = vmatmul.mubr.f32.gmra.mxu0 %v540
        %v3296 = vpop.f32.mrf.mxu0
        %v3297 = vadd.f32 %v2912, %v3296
        %v3298 = vpop.f32.mrf.mxu0
        %3299 = vmatprep.mubr.f32.mxu0 0.0
        %3300 = vmatmul.mubr.f32.gmra.mxu0 %v545
        %v3301 = vpop.f32.mrf.mxu0
        %v3302 = vadd.f32 %v2917, %v3301
        %v3303 = vpop.f32.mrf.mxu0
        %3304 = vmatprep.mubr.f32.mxu0 0.0
        %3305 = vmatmul.mubr.f32.gmra.mxu0 %v550
        %v3306 = vpop.f32.mrf.mxu0
        %v3307 = vadd.f32 %v2922, %v3306
        %v3308 = vpop.f32.mrf.mxu0
        %3309 = vmatprep.mubr.f32.mxu0 0.0
        %3310 = vmatmul.mubr.f32.gmra.mxu0 %v555
        %v3311 = vpop.f32.mrf.mxu0
        %v3312 = vadd.f32 %v2927, %v3311
        %v3313 = vpop.f32.mrf.mxu0
        %3314 = vdwg.mxu0
        %3315 = vst [vmem:[%s223] sm:$0xff] %v1778
        %3316 = vst [vmem:[%s223 + $0x8] sm:$0xff] %v1780
        %3317 = vst [vmem:[%s223 + $0x10] sm:$0xff] %v2997
        %3318 = vst [vmem:[%s223 + $0x18] sm:$0xff] %v1784
        %3319 = vst [vmem:[%s223 + $0x20] sm:$0xff] %v1786
        %3320 = vst [vmem:[%s223 + $0x28] sm:$0xff] %v3002
        %3321 = vst [vmem:[%s223 + $0x30] sm:$0xff] %v1790
        %3322 = vst [vmem:[%s223 + $0x38] sm:$0xff] %v1792
        %3323 = vst [vmem:[%s223 + $0x40] sm:$0xff] %v3007
        %3324 = vst [vmem:[%s223 + $0x48] sm:$0xff] %v1796
        %3325 = vst [vmem:[%s223 + $0x50] sm:$0xff] %v1798
        %3326 = vst [vmem:[%s223 + $0x58] sm:$0xff] %v3012
        %3327 = vst [vmem:[%s223 + $0x60] sm:$0xff] %v1802
        %3328 = vst [vmem:[%s223 + $0x68] sm:$0xff] %v1804
        %3329 = vst [vmem:[%s223 + $0x70] sm:$0xff] %v3017
        %3330 = vst [vmem:[%s223 + $0x78] sm:$0xff] %v1808
        %3331 = vst [vmem:[%s223 + $0x80] sm:$0xff] %v1810
        %3332 = vst [vmem:[%s223 + $0x88] sm:$0xff] %v3022
        %3333 = vst [vmem:[%s223 + $0x90] sm:$0xff] %v1814
        %3334 = vst [vmem:[%s223 + $0x98] sm:$0xff] %v1816
        %3335 = vst [vmem:[%s223 + $0xa0] sm:$0xff] %v3027
        %3336 = vst [vmem:[%s223 + $0xa8] sm:$0xff] %v1820
        %3337 = vst [vmem:[%s223 + $0xb0] sm:$0xff] %v1822
        %3338 = vst [vmem:[%s223 + $0xb8] sm:$0xff] %v3032
        %3339 = vst [vmem:[%s223 + $0xc0] sm:$0xff] %v1826
        %3340 = vst [vmem:[%s223 + $0xc8] sm:$0xff] %v1828
        %3341 = vst [vmem:[%s223 + $0xd0] sm:$0xff] %v3037
        %3342 = vst [vmem:[%s223 + $0xd8] sm:$0xff] %v1832
        %3343 = vst [vmem:[%s223 + $0xe0] sm:$0xff] %v1834
        %3344 = vst [vmem:[%s223 + $0xe8] sm:$0xff] %v3042
        %3345 = vst [vmem:[%s223 + $0xf0] sm:$0xff] %v1838
        %3346 = vst [vmem:[%s223 + $0xf8] sm:$0xff] %v1840
        %3347 = vst [vmem:[%s223 + $0x100] sm:$0xff] %v3047
        %3348 = vst [vmem:[%s223 + $0x108] sm:$0xff] %v1844
        %3349 = vst [vmem:[%s223 + $0x110] sm:$0xff] %v1846
        %3350 = vst [vmem:[%s223 + $0x118] sm:$0xff] %v3052
        %3351 = vst [vmem:[%s223 + $0x120] sm:$0xff] %v1850
        %3352 = vst [vmem:[%s223 + $0x128] sm:$0xff] %v1852
        %3353 = vst [vmem:[%s223 + $0x130] sm:$0xff] %v3057
        %3354 = vst [vmem:[%s223 + $0x138] sm:$0xff] %v1856
        %3355 = vst [vmem:[%s223 + $0x140] sm:$0xff] %v1858
        %3356 = vst [vmem:[%s223 + $0x148] sm:$0xff] %v3062
        %3357 = vst [vmem:[%s223 + $0x150] sm:$0xff] %v1862
        %3358 = vst [vmem:[%s223 + $0x158] sm:$0xff] %v1864
        %3359 = vst [vmem:[%s223 + $0x160] sm:$0xff] %v3067
        %3360 = vst [vmem:[%s223 + $0x168] sm:$0xff] %v1868
        %3361 = vst [vmem:[%s223 + $0x170] sm:$0xff] %v1870
        %3362 = vst [vmem:[%s223 + $0x178] sm:$0xff] %v3072
        %3363 = vst [vmem:[%s223 + $0x180] sm:$0xff] %v1874
        %3364 = vst [vmem:[%s223 + $0x188] sm:$0xff] %v1876
        %3365 = vst [vmem:[%s223 + $0x190] sm:$0xff] %v3077
        %3366 = vst [vmem:[%s223 + $0x198] sm:$0xff] %v1880
        %3367 = vst [vmem:[%s223 + $0x1a0] sm:$0xff] %v1882
        %3368 = vst [vmem:[%s223 + $0x1a8] sm:$0xff] %v3082
        %3369 = vst [vmem:[%s223 + $0x1b0] sm:$0xff] %v1886
        %3370 = vst [vmem:[%s223 + $0x1b8] sm:$0xff] %v1888
        %3371 = vst [vmem:[%s223 + $0x1c0] sm:$0xff] %v3087
        %3372 = vst [vmem:[%s223 + $0x1c8] sm:$0xff] %v1892
        %3373 = vst [vmem:[%s223 + $0x1d0] sm:$0xff] %v1894
        %3374 = vst [vmem:[%s223 + $0x1d8] sm:$0xff] %v3092
        %3375 = vst [vmem:[%s223 + $0x1e0] sm:$0xff] %v1898
        %3376 = vst [vmem:[%s223 + $0x1e8] sm:$0xff] %v1900
        %3377 = vst [vmem:[%s223 + $0x1f0] sm:$0xff] %v3097
        %3378 = vst [vmem:[%s223 + $0x1f8] sm:$0xff] %v1904
        %3379 = vst [vmem:[%s223 + $0x200] sm:$0xff] %v1906
        %3380 = vst [vmem:[%s223 + $0x208] sm:$0xff] %v3102
        %3381 = vst [vmem:[%s223 + $0x210] sm:$0xff] %v1910
        %3382 = vst [vmem:[%s223 + $0x218] sm:$0xff] %v1912
        %3383 = vst [vmem:[%s223 + $0x220] sm:$0xff] %v3107
        %3384 = vst [vmem:[%s223 + $0x228] sm:$0xff] %v1916
        %3385 = vst [vmem:[%s223 + $0x230] sm:$0xff] %v1918
        %3386 = vst [vmem:[%s223 + $0x238] sm:$0xff] %v3112
        %3387 = vst [vmem:[%s223 + $0x240] sm:$0xff] %v1922
        %3388 = vst [vmem:[%s223 + $0x248] sm:$0xff] %v1924
        %3389 = vst [vmem:[%s223 + $0x250] sm:$0xff] %v3117
        %3390 = vst [vmem:[%s223 + $0x258] sm:$0xff] %v1928
        %3391 = vst [vmem:[%s223 + $0x260] sm:$0xff] %v1930
        %3392 = vst [vmem:[%s223 + $0x268] sm:$0xff] %v3122
        %3393 = vst [vmem:[%s223 + $0x270] sm:$0xff] %v1934
        %3394 = vst [vmem:[%s223 + $0x278] sm:$0xff] %v1936
        %3395 = vst [vmem:[%s223 + $0x280] sm:$0xff] %v3127
        %3396 = vst [vmem:[%s223 + $0x288] sm:$0xff] %v1940
        %3397 = vst [vmem:[%s223 + $0x290] sm:$0xff] %v1942
        %3398 = vst [vmem:[%s223 + $0x298] sm:$0xff] %v3132
        %3399 = vst [vmem:[%s223 + $0x2a0] sm:$0xff] %v1946
        %3400 = vst [vmem:[%s223 + $0x2a8] sm:$0xff] %v1948
        %3401 = vst [vmem:[%s223 + $0x2b0] sm:$0xff] %v3137
        %3402 = vst [vmem:[%s223 + $0x2b8] sm:$0xff] %v1952
        %3403 = vst [vmem:[%s223 + $0x2c0] sm:$0xff] %v1954
        %3404 = vst [vmem:[%s223 + $0x2c8] sm:$0xff] %v3142
        %3405 = vst [vmem:[%s223 + $0x2d0] sm:$0xff] %v1958
        %3406 = vst [vmem:[%s223 + $0x2d8] sm:$0xff] %v1960
        %3407 = vst [vmem:[%s223 + $0x2e0] sm:$0xff] %v3147
        %3408 = vst [vmem:[%s223 + $0x2e8] sm:$0xff] %v1964
        %3409 = vst [vmem:[%s223 + $0x2f0] sm:$0xff] %v1966
        %3410 = vst [vmem:[%s223 + $0x2f8] sm:$0xff] %v3152
        %3411 = vst [vmem:[%s223 + $0x300] sm:$0xff] %v1970
        %3412 = vst [vmem:[%s223 + $0x308] sm:$0xff] %v1972
        %3413 = vst [vmem:[%s223 + $0x310] sm:$0xff] %v3157
        %3414 = vst [vmem:[%s223 + $0x318] sm:$0xff] %v1976
        %3415 = vst [vmem:[%s223 + $0x320] sm:$0xff] %v1978
        %3416 = vst [vmem:[%s223 + $0x328] sm:$0xff] %v3162
        %3417 = vst [vmem:[%s223 + $0x330] sm:$0xff] %v1982
        %3418 = vst [vmem:[%s223 + $0x338] sm:$0xff] %v1984
        %3419 = vst [vmem:[%s223 + $0x340] sm:$0xff] %v3167
        %3420 = vst [vmem:[%s223 + $0x348] sm:$0xff] %v1988
        %3421 = vst [vmem:[%s223 + $0x350] sm:$0xff] %v1990
        %3422 = vst [vmem:[%s223 + $0x358] sm:$0xff] %v3172
        %3423 = vst [vmem:[%s223 + $0x360] sm:$0xff] %v1994
        %3424 = vst [vmem:[%s223 + $0x368] sm:$0xff] %v1996
        %3425 = vst [vmem:[%s223 + $0x370] sm:$0xff] %v3177
        %3426 = vst [vmem:[%s223 + $0x378] sm:$0xff] %v2000
        %3427 = vst [vmem:[%s223 + $0x380] sm:$0xff] %v2002
        %3428 = vst [vmem:[%s223 + $0x388] sm:$0xff] %v3182
        %3429 = vst [vmem:[%s223 + $0x390] sm:$0xff] %v2006
        %3430 = vst [vmem:[%s223 + $0x398] sm:$0xff] %v2008
        %3431 = vst [vmem:[%s223 + $0x3a0] sm:$0xff] %v3187
        %3432 = vst [vmem:[%s223 + $0x3a8] sm:$0xff] %v2012
        %3433 = vst [vmem:[%s223 + $0x3b0] sm:$0xff] %v2014
        %3434 = vst [vmem:[%s223 + $0x3b8] sm:$0xff] %v3192
        %3435 = vst [vmem:[%s223 + $0x3c0] sm:$0xff] %v2018
        %3436 = vst [vmem:[%s223 + $0x3c8] sm:$0xff] %v2020
        %3437 = vst [vmem:[%s223 + $0x3d0] sm:$0xff] %v3197
        %3438 = vst [vmem:[%s223 + $0x3d8] sm:$0xff] %v2024
        %3439 = vst [vmem:[%s223 + $0x3e0] sm:$0xff] %v2026
        %3440 = vst [vmem:[%s223 + $0x3e8] sm:$0xff] %v3202
        %3441 = vst [vmem:[%s223 + $0x3f0] sm:$0xff] %v2030
        %3442 = vst [vmem:[%s223 + $0x3f8] sm:$0xff] %v2032
        %3443 = vst [vmem:[%s223 + $0x400] sm:$0xff] %v3207
        %3444 = vst [vmem:[%s223 + $0x408] sm:$0xff] %v2036
        %3445 = vst [vmem:[%s223 + $0x410] sm:$0xff] %v2038
        %3446 = vst [vmem:[%s223 + $0x418] sm:$0xff] %v3212
        %3447 = vst [vmem:[%s223 + $0x420] sm:$0xff] %v2042
        %3448 = vst [vmem:[%s223 + $0x428] sm:$0xff] %v2044
        %3449 = vst [vmem:[%s223 + $0x430] sm:$0xff] %v3217
        %3450 = vst [vmem:[%s223 + $0x438] sm:$0xff] %v2048
        %3451 = vst [vmem:[%s223 + $0x440] sm:$0xff] %v2050
        %3452 = vst [vmem:[%s223 + $0x448] sm:$0xff] %v3222
        %3453 = vst [vmem:[%s223 + $0x450] sm:$0xff] %v2054
        %3454 = vst [vmem:[%s223 + $0x458] sm:$0xff] %v2056
        %3455 = vst [vmem:[%s223 + $0x460] sm:$0xff] %v3227
        %3456 = vst [vmem:[%s223 + $0x468] sm:$0xff] %v2060
        %3457 = vst [vmem:[%s223 + $0x470] sm:$0xff] %v2062
        %3458 = vst [vmem:[%s223 + $0x478] sm:$0xff] %v3232
        %3459 = vst [vmem:[%s223 + $0x480] sm:$0xff] %v2066
        %3460 = vst [vmem:[%s223 + $0x488] sm:$0xff] %v2068
        %3461 = vst [vmem:[%s223 + $0x490] sm:$0xff] %v3237
        %3462 = vst [vmem:[%s223 + $0x498] sm:$0xff] %v2072
        %3463 = vst [vmem:[%s223 + $0x4a0] sm:$0xff] %v2074
        %3464 = vst [vmem:[%s223 + $0x4a8] sm:$0xff] %v3242
        %3465 = vst [vmem:[%s223 + $0x4b0] sm:$0xff] %v2078
        %3466 = vst [vmem:[%s223 + $0x4b8] sm:$0xff] %v2080
        %3467 = vst [vmem:[%s223 + $0x4c0] sm:$0xff] %v3247
        %3468 = vst [vmem:[%s223 + $0x4c8] sm:$0xff] %v2084
        %3469 = vst [vmem:[%s223 + $0x4d0] sm:$0xff] %v2086
        %3470 = vst [vmem:[%s223 + $0x4d8] sm:$0xff] %v3252
        %3471 = vst [vmem:[%s223 + $0x4e0] sm:$0xff] %v2090
        %3472 = vst [vmem:[%s223 + $0x4e8] sm:$0xff] %v2092
        %3473 = vst [vmem:[%s223 + $0x4f0] sm:$0xff] %v3257
        %3474 = vst [vmem:[%s223 + $0x4f8] sm:$0xff] %v2096
        %3475 = vst [vmem:[%s223 + $0x500] sm:$0xff] %v2098
        %3476 = vst [vmem:[%s223 + $0x508] sm:$0xff] %v3262
        %3477 = vst [vmem:[%s223 + $0x510] sm:$0xff] %v2102
        %3478 = vst [vmem:[%s223 + $0x518] sm:$0xff] %v2104
        %3479 = vst [vmem:[%s223 + $0x520] sm:$0xff] %v3267
        %3480 = vst [vmem:[%s223 + $0x528] sm:$0xff] %v2108
        %3481 = vst [vmem:[%s223 + $0x530] sm:$0xff] %v2110
        %3482 = vst [vmem:[%s223 + $0x538] sm:$0xff] %v3272
        %3483 = vst [vmem:[%s223 + $0x540] sm:$0xff] %v2114
        %3484 = vst [vmem:[%s223 + $0x548] sm:$0xff] %v2116
        %3485 = vst [vmem:[%s223 + $0x550] sm:$0xff] %v3277
        %3486 = vst [vmem:[%s223 + $0x558] sm:$0xff] %v2120
        %3487 = vst [vmem:[%s223 + $0x560] sm:$0xff] %v2122
        %3488 = vst [vmem:[%s223 + $0x568] sm:$0xff] %v3282
        %3489 = vst [vmem:[%s223 + $0x570] sm:$0xff] %v2126
        %3490 = vst [vmem:[%s223 + $0x578] sm:$0xff] %v2128
        %3491 = vst [vmem:[%s223 + $0x580] sm:$0xff] %v3287
        %3492 = vst [vmem:[%s223 + $0x588] sm:$0xff] %v2132
        %3493 = vst [vmem:[%s223 + $0x590] sm:$0xff] %v2134
        %3494 = vst [vmem:[%s223 + $0x598] sm:$0xff] %v3292
        %3495 = vst [vmem:[%s223 + $0x5a0] sm:$0xff] %v2138
        %3496 = vst [vmem:[%s223 + $0x5a8] sm:$0xff] %v2140
        %3497 = vst [vmem:[%s223 + $0x5b0] sm:$0xff] %v3297
        %3498 = vst [vmem:[%s223 + $0x5b8] sm:$0xff] %v2144
        %3499 = vst [vmem:[%s223 + $0x5c0] sm:$0xff] %v2146
        %3500 = vst [vmem:[%s223 + $0x5c8] sm:$0xff] %v3302
        %3501 = vst [vmem:[%s223 + $0x5d0] sm:$0xff] %v2150
        %3502 = vst [vmem:[%s223 + $0x5d8] sm:$0xff] %v2152
        %3503 = vst [vmem:[%s223 + $0x5e0] sm:$0xff] %v3307
        %3504 = vst [vmem:[%s223 + $0x5e8] sm:$0xff] %v2156
        %3505 = vst [vmem:[%s223 + $0x5f0] sm:$0xff] %v2158
        %3506 = vst [vmem:[%s223 + $0x5f8] sm:$0xff] %v3312
        %s3507 = sand.u32 %s97, 1
        %s3508 = scalar_lea.sflag [#allocation4], %s3507
        %s3509 = sand.u32 %s97, 1
        %s3510 = smul.addr %s3509, 1536
        %s3511 = scalar_lea.vmem [#allocation8], %s3510
        // Predicated region
        $region45: #{tpu_custom_call.1} parent=31 // pred_check
          %p3512 = pneg %p107
        $region46: #{tpu_custom_call.1} parent=31 // pred_check_branch
          %3514 = sbr.rel (%p3512) target = $region48
        $region47: #{tpu_custom_call.1} parent=31 // pred_region
          %s3515 = smul.u32 64, %s21
          %s3516 = ssub.s32 160, %s3515
          %p3517 = scmp.lt.s32.totalorder %s3516, 64
          %s3518 = scalar_select %p3517, %s3516, 64
          %s3519 = smul.u32 128, %s3518
          %s3520 = smul.u32 %s3519, 3
          %s3522 = ssub.s32 24576, %s3520
          %3523 = vsyncadd %s3508, %s3522
          %p3524 = scmp.ne.s32.totalorder 0, %s3520
          %s3525 = smul.addr %s3515, 3
          %s3526 = smul.addr %s3525, 128
          %s3527 = scalar_lea.hbm %s3, %s3526
          %s3528 = smul.u32 24, %s3518
          %s3529 = sshll.u32 %s3511, 4
          %s3530 = int_to_ptr.vmem [resolvable:$true] %s3529
          %s3531 = sshll.u32 %s3528, 4
          %3535 = dma.vmem_to_hbm [thread:$0]  (%p3524), %s3530, %s3531, %s3527, %s3508, 384, 384, 24
        $region48: #{tpu_custom_call.1} parent=31 // pred_fallthru
          _
      $region32: #{tpu_custom_call.1} parent=5 // pred_fallthru
        _
      %p3536 = scmp.le.s32.totalorder 2, %s16
      // Predicated region
      $region49: #{tpu_custom_call.1} parent=5 // pred_check
        %p3537 = pneg %p3536
      $region50: #{tpu_custom_call.1} parent=5 // pred_check_branch
        %3539 = sbr.rel (%p3537) target = $region52
      $region51: #{tpu_custom_call.1} parent=5 // pred_region
        %s3540 = ssub.s32 %s16, 2
        // Predicated region
        $region53: #{tpu_custom_call.1} parent=51 // pred_check
          %p3541 = pneg %p113
        $region54: #{tpu_custom_call.1} parent=51 // pred_check_branch
          %3543 = sbr.rel (%p3541) target = $region56
        $region55: #{tpu_custom_call.1} parent=51 // pred_region
          %s3544 = sand.u32 %s98, 1
          %s3545 = scalar_lea.sflag [#allocation4], %s3544
          %s3546 = sand.u32 %s98, 1
          %s3547 = smul.addr %s3546, 1536
          %s3548 = scalar_lea.vmem [#allocation8], %s3547
          %3549 = dma.done %s3545, 24576
        $region56: #{tpu_custom_call.1} parent=51 // pred_fallthru
          _
      $region52: #{tpu_custom_call.1} parent=5 // pred_fallthru
        _
    $region6: #{tpu_custom_call.1} parent=1 // loop_footer
      %s20 = sadd.s32 1, %s16
    $region7: #{tpu_custom_call.1} parent=1 // loop_footer_branch
      %15 = sbr.rel target = $region3
    $region8: #{tpu_custom_call.1} parent=1 // loop_exit
      _
    %3550 = vsyncpa [#allocation3], 1
    %s3551 = scalar_lea.sflag [#allocation3], 1
    %3552 = vsyncpa %s3551, 1
    %3553 = vsyncpa [#allocation6], 1
    %3554 = vsyncpa [#allocation4], 1
    %s3555 = scalar_lea.sflag [#allocation4], 1
    %3556 = vsyncpa %s3555, 1

</llo_original>
